<compile_context>
chip_gen: v6e
topology: v6e:2x2x1
jax: 0.10.0
libtpu: 0.0.40
codegen_flags: <defaults>
</compile_context>

<pallas_src>
import functools

import jax
import jax.numpy as jnp
import numpy as np
from jax.experimental import pallas as pl
from jax.experimental.pallas import tpu as pltpu


def _round_up(x, m):
    return (x + m - 1) * 1 // m * m


def _triplane_kernel(pix_ref, lane_ref, tri_ref, out_ref, *, n_planes, RR):
    """One grid step == one tile of TM query points; all planes fused in one dot.

    pix_ref : (TM, 2*n_planes) f32  pixel-space coords [x_p0, y_p0, x_p1, y_p1, ...]
    lane_ref: (2, RR)          f32  row 0 = texel iy, row 1 = texel ix (flat = iy*R+ix)
    tri_ref : (n_planes*RR, C_pad)  clamped feature tables stacked along K
    out_ref : (TM, C_pad)      f32
    """
    pix = pix_ref[...]                         # (TM, 2P)
    iy_lane = lane_ref[0:1, :]                 # (1, RR)
    ix_lane = lane_ref[1:2, :]                 # (1, RR)

    # Separable bilinear "tent" weights.  For each texel (ty, tx) the weight is
    # max(0, 1-|iy-ty|) * max(0, 1-|ix-tx|): in-bounds corners get their exact
    # bilinear weight, out-of-bounds corners simply don't exist in the table,
    # which is precisely padding_mode='zeros'.
    parts = []
    for p in range(n_planes):
        ix = pix[:, 2 * p + 0: 2 * p + 1]      # (TM, 1)
        iy = pix[:, 2 * p + 1: 2 * p + 2]      # (TM, 1)
        ty = jnp.maximum(1.0 - jnp.abs(iy - iy_lane), 0.0)   # (TM, RR)
        tx = jnp.maximum(1.0 - jnp.abs(ix - ix_lane), 0.0)   # (TM, RR)
        parts.append(ty * tx)
    w = jnp.concatenate(parts, axis=1)         # (TM, n_planes*RR)

    tri = tri_ref[...].astype(jnp.float32)     # (n_planes*RR, C_pad)
    # gather-as-matmul on the MXU; the K = 3*RR contraction also sums the planes
    out_ref[...] = jnp.dot(w, tri, preferred_element_type=jnp.float32)


def triplane_forward(coords, triplane, plane_axes, *, block_m=512,
                     feature_dtype=jnp.bfloat16):
    """coords: (M, 3); triplane: (1, 3, C, R, R); plane_axes: (3, 3, 3) -> (M, C) f32."""
    assert triplane.shape[0] == 1, "module uses n=1"
    _, P, C, R, _ = triplane.shape
    RR = R * R
    M = coords.shape[0]
    assert block_m % 8 == 0

    # ---------- hoisted precompute (wrapper / XLA, not the kernel) ----------
    # project_onto_planes: coords @ inv(plane_axes) (exact for permutation axes),
    # then align_corners=True grid->pixel mapping.
    inv = jnp.linalg.inv(plane_axes.astype(jnp.float32))                  # (3,3,3)
    proj = jnp.einsum("mk,pkj->pmj", coords.astype(jnp.float32), inv)     # (3,M,3)
    pix_xy = (proj[..., :2] + 1.0) * (0.5 * (R - 1))                      # (3,M,2) x->W, y->H
    pix = jnp.transpose(pix_xy, (1, 0, 2)).reshape(M, 2 * P)              # (M,6)

    # texel coordinate table for the flattened (R, R) plane (shared by planes)
    flat = jnp.arange(RR, dtype=jnp.int32)
    lane_grid = jnp.stack([(flat // R).astype(jnp.float32),
                           (flat - (flat // R) * R).astype(jnp.float32)], 0)  # (2, RR)

    # feature tables: clamp, channels-last, planes stacked along K, channels
    # zero-padded to a full lane tile (lane-dense MXU N dim and output stores).
    C_pad = _round_up(max(C, 128), 128)
    tri = jnp.clip(triplane.reshape(P, C, R, R).astype(jnp.float32), -1.0, 1.0)
    tri = jnp.transpose(tri, (0, 2, 3, 1)).reshape(P * RR, C)             # flat = p*RR + y*R + x
    tri = jnp.pad(tri, ((0, 0), (0, C_pad - C))).astype(feature_dtype)    # (3*RR, C_pad)

    # tile / pad the query dimension
    TM = min(block_m, _round_up(M, 8))
    M_pad = _round_up(M, TM)
    pix = jnp.pad(pix, ((0, M_pad - M), (0, 0)))

    kernel = functools.partial(_triplane_kernel, n_planes=P, RR=RR)

    out = pl.pallas_call(
        kernel,
        out_shape=jax.ShapeDtypeStruct((M_pad, C_pad), jnp.float32),
        grid_spec=pltpu.PrefetchScalarGridSpec(
            num_scalar_prefetch=0,
            grid=(M_pad // TM,),
            in_specs=[
                pl.BlockSpec((TM, 2 * P), lambda i: (i, 0)),       # query tile
                pl.BlockSpec((2, RR), lambda i: (0, 0)),           # texel (iy,ix) table
                pl.BlockSpec((P * RR, C_pad), lambda i: (0, 0)),   # stacked feature table
            ],
            out_specs=pl.BlockSpec((TM, C_pad), lambda i: (i, 0)), # lane-dense output slab
        ),
        compiler_params=pltpu.CompilerParams(
            dimension_semantics=("parallel",),        # shard M tiles across cores (v7x)
            vmem_limit_bytes=32 * 1024 * 1024,        # well above the ~2-3 MiB actually used
        ),
    )(pix, lane_grid, tri)

    return out[:M, :C]


def reference_forward(coords, triplane, plane_axes):
    """Pure-JAX reference mirroring the PyTorch forward semantics (f32)."""
    _, P, C, R, _ = triplane.shape
    inv = jnp.linalg.inv(plane_axes)                                   # (3,3,3)
    proj = jnp.einsum("mk,pkj->pmj", coords, inv)                      # (3,M,3)
    x, y = proj[..., 0], proj[..., 1]                                  # (3,M)

    tri = jnp.clip(triplane.reshape(P, C, R, R), -1.0, 1.0)
    tri_t = jnp.transpose(tri, (0, 2, 3, 1))                           # (3,R,R,C)

    ix = (x + 1.0) * (0.5 * (R - 1))
    iy = (y + 1.0) * (0.5 * (R - 1))
    ix0 = jnp.floor(ix)
    iy0 = jnp.floor(iy)
    wx = ix - ix0
    wy = iy - iy0
    ix0 = ix0.astype(jnp.int32)
    iy0 = iy0.astype(jnp.int32)
    ix1 = ix0 + 1
    iy1 = iy0 + 1
    pids = jnp.arange(P)[:, None]

    def corner(iix, iiy, w):
        valid = (iix >= 0) & (iix <= R - 1) & (iiy >= 0) & (iiy <= R - 1)
        v = tri_t[pids, jnp.clip(iiy, 0, R - 1), jnp.clip(iix, 0, R - 1)]   # (3,M,C)
        return jnp.where(valid[..., None], v, 0.0) * w[..., None]

    feat = (corner(ix0, iy0, (1.0 - wx) * (1.0 - wy))
            + corner(ix1, iy0, wx * (1.0 - wy))
            + corner(ix0, iy1, (1.0 - wx) * wy)
            + corner(ix1, iy1, wx * wy))
    return feat.sum(0)                                                  # (M,C)


if __name__ == "__main__":
    C, R = 8, 16          # channels, plane resolution
    M = 1000              # query points (not a multiple of the tile -> exercises padding)

    key = jax.random.PRNGKey(0)
    k_tri, k_pts = jax.random.split(key)

    # TODO(synk): the original __init__ builds the triplane via a weight-normed
    # Softplus MLP; here a deterministic Gaussian parameter of the same shape is used.
    triplane = jax.random.normal(k_tri, (1, 3, C, R, R), jnp.float32) * 0.7
    # range slightly outside [-1,1] to exercise the zeros-padding path
    coords = jax.random.uniform(k_pts, (M, 3), jnp.float32, -1.15, 1.15)

    plane_axes = jnp.array(
        [[[0, 1, 0], [1, 0, 0], [0, 0, 1]],
         [[0, 0, 1], [1, 0, 0], [0, 1, 0]],
         [[0, 1, 0], [0, 0, 1], [1, 0, 0]]],
        dtype=jnp.float32,
    )

    ref = reference_forward(coords, triplane, plane_axes)

    # exact-algorithm check with an f32 feature table (tight tolerance)
    out_f32 = triplane_forward(coords, triplane, plane_axes,
                               feature_dtype=jnp.float32)
    jax.block_until_ready(out_f32)
    assert out_f32.shape == (M, C)
    np.testing.assert_allclose(np.asarray(out_f32), np.asarray(ref),
                               rtol=1e-4, atol=1e-5)

    # default path: bf16 feature table (halved table DMA / VMEM); tolerance is
    # limited by bf16 quantization of the table values, accumulation stays f32.
    out_bf16 = triplane_forward(coords, triplane, plane_axes)
    jax.block_until_ready(out_bf16)
    assert out_bf16.shape == (M, C)
    np.testing.assert_allclose(np.asarray(out_bf16), np.asarray(ref),
                               rtol=2e-2, atol=2e-2)

    print("KERNEL_OK")
</pallas_src>

<mosaic_0001>
module attributes {stable_mosaic.version = 11 : i64} {
  func.func @_triplane_kernel(%arg0: i32, %arg1: memref<512x6xf32, #tpu.memory_space<vmem>>, %arg2: memref<2x256xf32, #tpu.memory_space<vmem>>, %arg3: memref<768x128xf32, #tpu.memory_space<vmem>>, %arg4: memref<512x128xf32, #tpu.memory_space<vmem>>) attributes {dimension_semantics = [#tpu.dimension_semantics<parallel>], iteration_bounds = array<i64: 2>, scalar_prefetch = 0 : i64, scratch_operands = 0 : i64, tpu.core_type = #tpu.core_type<tc>, window_params = [{transform_indices = @transform_0, window_bounds = array<i64: 512, 6>}, {pipeline_mode = #tpu.pipeline_mode<synchronous>, transform_indices = @transform_1, window_bounds = array<i64: 2, 256>}, {pipeline_mode = #tpu.pipeline_mode<synchronous>, transform_indices = @transform_2, window_bounds = array<i64: 768, 128>}, {transform_indices = @transform_3, window_bounds = array<i64: 512, 128>}]} {
    %c0 = arith.constant 0 : index
    %c0_0 = arith.constant 0 : index
    %0 = vector.load %arg1[%c0, %c0_0] : memref<512x6xf32, #tpu.memory_space<vmem>>, vector<512x6xf32>
    %c0_1 = arith.constant 0 : index
    %c0_2 = arith.constant 0 : index
    %1 = vector.load %arg2[%c0_1, %c0_2] : memref<2x256xf32, #tpu.memory_space<vmem>>, vector<1x256xf32>
    %c1 = arith.constant 1 : index
    %c0_3 = arith.constant 0 : index
    %2 = vector.load %arg2[%c1, %c0_3] : memref<2x256xf32, #tpu.memory_space<vmem>>, vector<1x256xf32>
    %3 = vector.extract_strided_slice %0 {offsets = [0, 0], sizes = [512, 1], strides = [1, 1]} : vector<512x6xf32> to vector<512x1xf32>
    %4 = vector.extract_strided_slice %0 {offsets = [0, 1], sizes = [512, 1], strides = [1, 1]} : vector<512x6xf32> to vector<512x1xf32>
    %5 = vector.broadcast %4 : vector<512x1xf32> to vector<512x256xf32>
    %6 = vector.broadcast %1 : vector<1x256xf32> to vector<512x256xf32>
    %7 = arith.subf %5, %6 : vector<512x256xf32>
    %8 = math.absf %7 : vector<512x256xf32>
    %cst = arith.constant 1.000000e+00 : f32
    %9 = vector.broadcast %cst : f32 to vector<512x256xf32>
    %10 = arith.subf %9, %8 : vector<512x256xf32>
    %cst_4 = arith.constant 0.000000e+00 : f32
    %11 = vector.broadcast %cst_4 : f32 to vector<512x256xf32>
    %12 = arith.maximumf %10, %11 : vector<512x256xf32>
    %13 = vector.broadcast %3 : vector<512x1xf32> to vector<512x256xf32>
    %14 = vector.broadcast %2 : vector<1x256xf32> to vector<512x256xf32>
    %15 = arith.subf %13, %14 : vector<512x256xf32>
    %16 = math.absf %15 : vector<512x256xf32>
    %cst_5 = arith.constant 1.000000e+00 : f32
    %17 = vector.broadcast %cst_5 : f32 to vector<512x256xf32>
    %18 = arith.subf %17, %16 : vector<512x256xf32>
    %cst_6 = arith.constant 0.000000e+00 : f32
    %19 = vector.broadcast %cst_6 : f32 to vector<512x256xf32>
    %20 = arith.maximumf %18, %19 : vector<512x256xf32>
    %21 = arith.mulf %12, %20 : vector<512x256xf32>
    %22 = vector.extract_strided_slice %0 {offsets = [0, 2], sizes = [512, 1], strides = [1, 1]} : vector<512x6xf32> to vector<512x1xf32>
    %23 = vector.extract_strided_slice %0 {offsets = [0, 3], sizes = [512, 1], strides = [1, 1]} : vector<512x6xf32> to vector<512x1xf32>
    %24 = vector.broadcast %23 : vector<512x1xf32> to vector<512x256xf32>
    %25 = vector.broadcast %1 : vector<1x256xf32> to vector<512x256xf32>
    %26 = arith.subf %24, %25 : vector<512x256xf32>
    %27 = math.absf %26 : vector<512x256xf32>
    %cst_7 = arith.constant 1.000000e+00 : f32
    %28 = vector.broadcast %cst_7 : f32 to vector<512x256xf32>
    %29 = arith.subf %28, %27 : vector<512x256xf32>
    %cst_8 = arith.constant 0.000000e+00 : f32
    %30 = vector.broadcast %cst_8 : f32 to vector<512x256xf32>
    %31 = arith.maximumf %29, %30 : vector<512x256xf32>
    %32 = vector.broadcast %22 : vector<512x1xf32> to vector<512x256xf32>
    %33 = vector.broadcast %2 : vector<1x256xf32> to vector<512x256xf32>
    %34 = arith.subf %32, %33 : vector<512x256xf32>
    %35 = math.absf %34 : vector<512x256xf32>
    %cst_9 = arith.constant 1.000000e+00 : f32
    %36 = vector.broadcast %cst_9 : f32 to vector<512x256xf32>
    %37 = arith.subf %36, %35 : vector<512x256xf32>
    %cst_10 = arith.constant 0.000000e+00 : f32
    %38 = vector.broadcast %cst_10 : f32 to vector<512x256xf32>
    %39 = arith.maximumf %37, %38 : vector<512x256xf32>
    %40 = arith.mulf %31, %39 : vector<512x256xf32>
    %41 = vector.extract_strided_slice %0 {offsets = [0, 4], sizes = [512, 1], strides = [1, 1]} : vector<512x6xf32> to vector<512x1xf32>
    %42 = vector.extract_strided_slice %0 {offsets = [0, 5], sizes = [512, 1], strides = [1, 1]} : vector<512x6xf32> to vector<512x1xf32>
    %43 = vector.broadcast %42 : vector<512x1xf32> to vector<512x256xf32>
    %44 = vector.broadcast %1 : vector<1x256xf32> to vector<512x256xf32>
    %45 = arith.subf %43, %44 : vector<512x256xf32>
    %46 = math.absf %45 : vector<512x256xf32>
    %cst_11 = arith.constant 1.000000e+00 : f32
    %47 = vector.broadcast %cst_11 : f32 to vector<512x256xf32>
    %48 = arith.subf %47, %46 : vector<512x256xf32>
    %cst_12 = arith.constant 0.000000e+00 : f32
    %49 = vector.broadcast %cst_12 : f32 to vector<512x256xf32>
    %50 = arith.maximumf %48, %49 : vector<512x256xf32>
    %51 = vector.broadcast %41 : vector<512x1xf32> to vector<512x256xf32>
    %52 = vector.broadcast %2 : vector<1x256xf32> to vector<512x256xf32>
    %53 = arith.subf %51, %52 : vector<512x256xf32>
    %54 = math.absf %53 : vector<512x256xf32>
    %cst_13 = arith.constant 1.000000e+00 : f32
    %55 = vector.broadcast %cst_13 : f32 to vector<512x256xf32>
    %56 = arith.subf %55, %54 : vector<512x256xf32>
    %cst_14 = arith.constant 0.000000e+00 : f32
    %57 = vector.broadcast %cst_14 : f32 to vector<512x256xf32>
    %58 = arith.maximumf %56, %57 : vector<512x256xf32>
    %59 = arith.mulf %50, %58 : vector<512x256xf32>
    %60 = tpu.concatenate %21, %40, %59 in 1 : vector<512x256xf32>, vector<512x256xf32>, vector<512x256xf32> -> vector<512x768xf32>
    %c0_15 = arith.constant 0 : index
    %c0_16 = arith.constant 0 : index
    %61 = vector.load %arg3[%c0_15, %c0_16] : memref<768x128xf32, #tpu.memory_space<vmem>>, vector<768x128xf32>
    %cst_17 = arith.constant dense<0.000000e+00> : vector<512x128xf32>
    %62 = tpu.matmul %60, %61, %cst_17 {dimension_numbers = #tpu.dot_dimension_numbers<[1], [0], [0], [1], [0, 0, 1, 1], [], []>} : vector<512x768xf32>, vector<768x128xf32>, vector<512x128xf32> -> vector<512x128xf32>
    %c0_18 = arith.constant 0 : index
    %c0_19 = arith.constant 0 : index
    %63 = vector.load %arg4[%c0_18, %c0_19] : memref<512x128xf32, #tpu.memory_space<vmem>>, vector<512x128xf32>
    tpu.vector_store %arg4[%c0_18, %c0_19], %62 {strides = array<i32>} : memref<512x128xf32, #tpu.memory_space<vmem>>, vector<512x128xf32>,
    return
  }
  func.func @transform_0(%arg0: i32) -> (i32, i32) {
    %c0_i32 = arith.constant 0 : i32
    %c0_i32_0 = arith.constant 0 : i32
    return %arg0, %c0_i32 : i32, i32
  }
  func.func @transform_1(%arg0: i32) -> (i32, i32) {
    %c0_i32 = arith.constant 0 : i32
    %c0_i32_0 = arith.constant 0 : i32
    %c0_i32_1 = arith.constant 0 : i32
    return %c0_i32, %c0_i32_0 : i32, i32
  }
  func.func @transform_2(%arg0: i32) -> (i32, i32) {
    %c0_i32 = arith.constant 0 : i32
    %c0_i32_0 = arith.constant 0 : i32
    %c0_i32_1 = arith.constant 0 : i32
    return %c0_i32, %c0_i32_0 : i32, i32
  }
  func.func @transform_3(%arg0: i32) -> (i32, i32) {
    %c0_i32 = arith.constant 0 : i32
    %c0_i32_0 = arith.constant 0 : i32
    return %arg0, %c0_i32 : i32, i32
  }
}

</mosaic_0001>

<llo_original>
// kernel: tpu_custom_call.1
$region0: #{tpu_custom_call.1}
  #allocation0 [shape = 'u32[]', space=smem, size = 0x4, offset = 0x4, fixed_abs, tag = 'smem constant byte address 0x4 - core index']
  #allocation1 [shape = 'u32[144,128]{1,0:T(1,128)}', space=vmem, size = 0x12000, scoped, tag = 'internal scratch']
  %s0 = inlined_call_operand.vmem [shape: f32[1024,6], index: 0, kind: input, shape index: {}]
  %s1 = inlined_call_operand.vmem [shape: f32[2,256], index: 1, kind: input, shape index: {}]
  %s2 = inlined_call_operand.vmem [shape: f32[768,128], index: 2, kind: input, shape index: {}]
  %s3 = inlined_call_operand.hbm [shape: f32[1024,128], index: 3, kind: output, shape index: {}]
  %s4 = sld [smem:[#allocation0]]
  $region45: #{tpu_custom_call.1} parent=0
    _
  %s6 = ssub.s32 1, %s4
  %s7 = scalar_select 0, %s6, %s4
  $region1: #{tpu_custom_call.1} parent=0
    #allocation2 [shape = 'u8[524288]{0}', space=vmem, size = 0x80000, scoped, tag = 'output window, operand 0']
    #allocation3 [shape = 's32[2]{0}', space=sflag, size = 0x8, scoped, tag = 'scoped memory for tpu_custom_call.1']
    %8 = vsyncpa [#allocation3], 0
    %s9 = scalar_lea.sflag [#allocation3], 1
    %10 = vsyncpa %s9, 0
    loop: start=0, step=1, limit=4
    $region2: #{tpu_custom_call.1} parent=1 // loop_pre_header
      _
    $region3: #{tpu_custom_call.1} parent=1 // loop_header
      %s12 = sphi 0, %s16
      %p13 = scmp.ge.s32.totalorder %s12, 4
      %s22 = sphi 0, %s24
      %s25 = sphi 0, %s22
      %s26 = sphi 0, %s25
      %s42 = sphi 0, %s26
      %s46 = sphi 0, %s46
      %s48 = sphi 0, %s46
      %s49 = sphi 0, %s48
      %s63 = sphi 0, %s49
      %s67 = sphi 0, %s67
      %s69 = sphi 0, %s67
      %s70 = sphi 0, %s69
      %s84 = sphi 0, %s70
      %s90 = sphi 0, %s92
      %s93 = sphi 0, %s90
      %s94 = sphi 0, %s93
      %s110 = sphi 0, %s94
    $region4: #{tpu_custom_call.1} parent=1 // loop_header_branch
      %15 = sbr.rel (%p13) target = $region8
    $region5: #{tpu_custom_call.1} parent=1 // loop_body
      %s17 = ssub.s32 %s12, 1
      %s18 = ssub.s32 %s12, 2
      %s19 = sadd.s32 %s12, 1
      %s20 = ssub.s32 %s12, %s19
      %p21 = scmp.eq.s32.totalorder %s20, 0
      %s23 = sadd.s32 %s22, 1
      %s24 = scalar_select %p21, %s22, %s23
      %p27 = pneg %p21
      %p28 = scmp.eq.s32.totalorder %s12, 1
      %p29 = por %p27, %p28
      %p30 = scmp.ne.s32.totalorder %s22, %s25
      %p31 = scmp.eq.s32.totalorder %s12, 0
      %p32 = por %p30, %p31
      %p33 = scmp.ne.s32.totalorder %s22, %s25
      %p34 = scmp.eq.s32.totalorder %s17, 1
      %p35 = por %p33, %p34
      %p36 = scmp.ne.s32.totalorder %s25, %s26
      %p37 = scmp.eq.s32.totalorder %s17, 0
      %p38 = por %p36, %p37
      %p39 = scmp.ne.s32.totalorder %s25, %s26
      %p40 = scmp.eq.s32.totalorder %s18, 1
      %p41 = por %p39, %p40
      %p43 = scmp.ne.s32.totalorder %s26, %s42
      %p44 = scmp.eq.s32.totalorder %s18, 0
      %p45 = por %p43, %p44
      %s47 = sadd.s32 %s46, 1
      %p50 = scmp.eq.s32.totalorder %s12, 1
      %p51 = scmp.ne.s32.totalorder %s46, %s48
      %p52 = scmp.eq.s32.totalorder %s12, 0
      %p53 = por %p51, %p52
      %p54 = scmp.ne.s32.totalorder %s46, %s48
      %p55 = scmp.eq.s32.totalorder %s17, 1
      %p56 = por %p54, %p55
      %p57 = scmp.ne.s32.totalorder %s48, %s49
      %p58 = scmp.eq.s32.totalorder %s17, 0
      %p59 = por %p57, %p58
      %p60 = scmp.ne.s32.totalorder %s48, %s49
      %p61 = scmp.eq.s32.totalorder %s18, 1
      %p62 = por %p60, %p61
      %p64 = scmp.ne.s32.totalorder %s49, %s63
      %p65 = scmp.eq.s32.totalorder %s18, 0
      %p66 = por %p64, %p65
      %s68 = sadd.s32 %s67, 1
      %p71 = scmp.eq.s32.totalorder %s12, 1
      %p72 = scmp.ne.s32.totalorder %s67, %s69
      %p73 = scmp.eq.s32.totalorder %s12, 0
      %p74 = por %p72, %p73
      %p75 = scmp.ne.s32.totalorder %s67, %s69
      %p76 = scmp.eq.s32.totalorder %s17, 1
      %p77 = por %p75, %p76
      %p78 = scmp.ne.s32.totalorder %s69, %s70
      %p79 = scmp.eq.s32.totalorder %s17, 0
      %p80 = por %p78, %p79
      %p81 = scmp.ne.s32.totalorder %s69, %s70
      %p82 = scmp.eq.s32.totalorder %s18, 1
      %p83 = por %p81, %p82
      %p85 = scmp.ne.s32.totalorder %s70, %s84
      %p86 = scmp.eq.s32.totalorder %s18, 0
      %p87 = por %p85, %p86
      %s88 = ssub.s32 %s12, %s19
      %p89 = scmp.eq.s32.totalorder %s88, 0
      %s91 = sadd.s32 %s90, 1
      %s92 = scalar_select %p89, %s90, %s91
      %p95 = pneg %p89
      %p96 = scmp.eq.s32.totalorder %s12, 1
      %p97 = por %p95, %p96
      %p98 = scmp.ne.s32.totalorder %s90, %s93
      %p99 = scmp.eq.s32.totalorder %s12, 0
      %p100 = por %p98, %p99
      %p101 = scmp.ne.s32.totalorder %s90, %s93
      %p102 = scmp.eq.s32.totalorder %s17, 1
      %p103 = por %p101, %p102
      %p104 = scmp.ne.s32.totalorder %s93, %s94
      %p105 = scmp.eq.s32.totalorder %s17, 0
      %p106 = por %p104, %p105
      %p107 = scmp.ne.s32.totalorder %s93, %s94
      %p108 = scmp.eq.s32.totalorder %s18, 1
      %p109 = por %p107, %p108
      %p111 = scmp.ne.s32.totalorder %s94, %s110
      %p112 = scmp.eq.s32.totalorder %s18, 0
      %p113 = por %p111, %p112
      %p114 = scmp.le.s32.totalorder 1, %s12
      %p115 = scmp.lt.s32.totalorder %s12, 3
      %p116 = pnand %p114, %p115
      %p117 = pneg %p116
      // Predicated region
      $region9: #{tpu_custom_call.1} parent=5 // pred_check
        _
      $region10: #{tpu_custom_call.1} parent=5 // pred_check_branch
        %119 = sbr.rel (%p116) target = $region12
      $region11: #{tpu_custom_call.1} parent=5 // pred_region
        %s120 = ssub.s32 %s12, 1
        // Predicated region
        $region13: #{tpu_custom_call.1} parent=11 // pred_check
          %p121 = pneg %p59
        $region14: #{tpu_custom_call.1} parent=11 // pred_check_branch
          %123 = sbr.rel (%p121) target = $region16
        $region15: #{tpu_custom_call.1} parent=11 // pred_region
          _
        $region16: #{tpu_custom_call.1} parent=11 // pred_fallthru
          _
        // Predicated region
        $region17: #{tpu_custom_call.1} parent=11 // pred_check
          %p124 = pneg %p80
        $region18: #{tpu_custom_call.1} parent=11 // pred_check_branch
          %126 = sbr.rel (%p124) target = $region20
        $region19: #{tpu_custom_call.1} parent=11 // pred_region
          _
        $region20: #{tpu_custom_call.1} parent=11 // pred_fallthru
          _
      $region12: #{tpu_custom_call.1} parent=5 // pred_fallthru
        _
      %p127 = scmp.lt.s32.totalorder %s12, 2
      // Predicated region
      $region21: #{tpu_custom_call.1} parent=5 // pred_check
        %p128 = pneg %p127
      $region22: #{tpu_custom_call.1} parent=5 // pred_check_branch
        %130 = sbr.rel (%p128) target = $region24
      $region23: #{tpu_custom_call.1} parent=5 // pred_region
        // Predicated region
        $region25: #{tpu_custom_call.1} parent=23 // pred_check
          %p131 = pneg %p32
        $region26: #{tpu_custom_call.1} parent=23 // pred_check_branch
          %133 = sbr.rel (%p131) target = $region28
        $region27: #{tpu_custom_call.1} parent=23 // pred_region
          %s134 = smul.u32 64, %s12
          %p135 = scmp.lt.s32.totalorder %s134, 127
          %s136 = scalar_select %p135, %s134, 127
          %s137 = smul.addr %s136, 8
          %s138 = scalar_lea.vmem %s0, %s137
          %s139 = smul.u32 64, %s12
        $region28: #{tpu_custom_call.1} parent=23 // pred_fallthru
          _
      $region24: #{tpu_custom_call.1} parent=5 // pred_fallthru
        _
      %p140 = scmp.le.s32.totalorder 1, %s12
      %p141 = scmp.lt.s32.totalorder %s12, 3
      %p142 = pnand %p140, %p141
      %p143 = pneg %p142
      // Predicated region
      $region29: #{tpu_custom_call.1} parent=5 // pred_check
        _
      $region30: #{tpu_custom_call.1} parent=5 // pred_check_branch
        %145 = sbr.rel (%p142) target = $region32
      $region31: #{tpu_custom_call.1} parent=5 // pred_region
        %s146 = ssub.s32 %s12, 1
        %s147 = smul.u32 64, %s17
        %p148 = scmp.lt.s32.totalorder %s147, 127
        %s149 = scalar_select %p148, %s147, 127
        %s150 = smul.addr %s149, 8
        %s151 = scalar_lea.vmem %s0, %s150
        %p152 = pneg %p38
        %p153 = pneg %p35
        %p154 = pneg %p59
        %p155 = pneg %p56
        %p156 = pneg %p80
        %p157 = pneg %p77
        %p158 = pneg %p106
        %p159 = pneg %p103
        %s160 = sand.u32 %s93, 1
        %s161 = scalar_lea.sflag [#allocation3], %s160
        %s162 = sand.u32 %s93, 1
        %s163 = smul.addr %s162, 512
        %s164 = scalar_lea.vmem [#allocation2], %s163
        %s165 = smul.u32 64, %s17
        %p166 = scmp.lt.s32.totalorder %s165, 127
        %s167 = scalar_select %p166, %s165, 127
        %s168 = smul.addr %s167, 8
        %s169 = scalar_lea.vmem %s0, %s168
        %s170 = smul.u32 64, %s17
        %s171 = smul.u32 64, %s17
        %v172 = vld [vmem:[%s169] sm:$0xff]
        %v173 = vld [vmem:[%s169 + $0x8] sm:$0xff]
        %v174 = vld [vmem:[%s169 + $0x10] sm:$0xff]
        %v175 = vld [vmem:[%s169 + $0x18] sm:$0xff]
        %v176 = vld [vmem:[%s169 + $0x20] sm:$0xff]
        %v177 = vld [vmem:[%s169 + $0x28] sm:$0xff]
        %v178 = vld [vmem:[%s169 + $0x30] sm:$0xff]
        %v179 = vld [vmem:[%s169 + $0x38] sm:$0xff]
        %v180 = vld [vmem:[%s169 + $0x40] sm:$0xff]
        %v181 = vld [vmem:[%s169 + $0x48] sm:$0xff]
        %v182 = vld [vmem:[%s169 + $0x50] sm:$0xff]
        %v183 = vld [vmem:[%s169 + $0x58] sm:$0xff]
        %v184 = vld [vmem:[%s169 + $0x60] sm:$0xff]
        %v185 = vld [vmem:[%s169 + $0x68] sm:$0xff]
        %v186 = vld [vmem:[%s169 + $0x70] sm:$0xff]
        %v187 = vld [vmem:[%s169 + $0x78] sm:$0xff]
        %v188 = vld [vmem:[%s169 + $0x80] sm:$0xff]
        %v189 = vld [vmem:[%s169 + $0x88] sm:$0xff]
        %v190 = vld [vmem:[%s169 + $0x90] sm:$0xff]
        %v191 = vld [vmem:[%s169 + $0x98] sm:$0xff]
        %v192 = vld [vmem:[%s169 + $0xa0] sm:$0xff]
        %v193 = vld [vmem:[%s169 + $0xa8] sm:$0xff]
        %v194 = vld [vmem:[%s169 + $0xb0] sm:$0xff]
        %v195 = vld [vmem:[%s169 + $0xb8] sm:$0xff]
        %v196 = vld [vmem:[%s169 + $0xc0] sm:$0xff]
        %v197 = vld [vmem:[%s169 + $0xc8] sm:$0xff]
        %v198 = vld [vmem:[%s169 + $0xd0] sm:$0xff]
        %v199 = vld [vmem:[%s169 + $0xd8] sm:$0xff]
        %v200 = vld [vmem:[%s169 + $0xe0] sm:$0xff]
        %v201 = vld [vmem:[%s169 + $0xe8] sm:$0xff]
        %v202 = vld [vmem:[%s169 + $0xf0] sm:$0xff]
        %v203 = vld [vmem:[%s169 + $0xf8] sm:$0xff]
        %v204 = vld [vmem:[%s169 + $0x100] sm:$0xff]
        %v205 = vld [vmem:[%s169 + $0x108] sm:$0xff]
        %v206 = vld [vmem:[%s169 + $0x110] sm:$0xff]
        %v207 = vld [vmem:[%s169 + $0x118] sm:$0xff]
        %v208 = vld [vmem:[%s169 + $0x120] sm:$0xff]
        %v209 = vld [vmem:[%s169 + $0x128] sm:$0xff]
        %v210 = vld [vmem:[%s169 + $0x130] sm:$0xff]
        %v211 = vld [vmem:[%s169 + $0x138] sm:$0xff]
        %v212 = vld [vmem:[%s169 + $0x140] sm:$0xff]
        %v213 = vld [vmem:[%s169 + $0x148] sm:$0xff]
        %v214 = vld [vmem:[%s169 + $0x150] sm:$0xff]
        %v215 = vld [vmem:[%s169 + $0x158] sm:$0xff]
        %v216 = vld [vmem:[%s169 + $0x160] sm:$0xff]
        %v217 = vld [vmem:[%s169 + $0x168] sm:$0xff]
        %v218 = vld [vmem:[%s169 + $0x170] sm:$0xff]
        %v219 = vld [vmem:[%s169 + $0x178] sm:$0xff]
        %v220 = vld [vmem:[%s169 + $0x180] sm:$0xff]
        %v221 = vld [vmem:[%s169 + $0x188] sm:$0xff]
        %v222 = vld [vmem:[%s169 + $0x190] sm:$0xff]
        %v223 = vld [vmem:[%s169 + $0x198] sm:$0xff]
        %v224 = vld [vmem:[%s169 + $0x1a0] sm:$0xff]
        %v225 = vld [vmem:[%s169 + $0x1a8] sm:$0xff]
        %v226 = vld [vmem:[%s169 + $0x1b0] sm:$0xff]
        %v227 = vld [vmem:[%s169 + $0x1b8] sm:$0xff]
        %v228 = vld [vmem:[%s169 + $0x1c0] sm:$0xff]
        %v229 = vld [vmem:[%s169 + $0x1c8] sm:$0xff]
        %v230 = vld [vmem:[%s169 + $0x1d0] sm:$0xff]
        %v231 = vld [vmem:[%s169 + $0x1d8] sm:$0xff]
        %v232 = vld [vmem:[%s169 + $0x1e0] sm:$0xff]
        %v233 = vld [vmem:[%s169 + $0x1e8] sm:$0xff]
        %v234 = vld [vmem:[%s169 + $0x1f0] sm:$0xff]
        %v235 = vld [vmem:[%s169 + $0x1f8] sm:$0xff]
        %v236 = vld [vmem:[%s1] ss:$2 sm:$0x3]
        %s237 = scalar_lea.vmem %s1, 1
        %v238 = vld [vmem:[%s237] ss:$2 sm:$0x3]
        %240 = vset.pattern.permute.xlu0 1
        %241 = vperm.xlu0 %240, %v172
        %v242 = vpop.permute.xlu0 %241
        %245 = vset.pattern.permute.xlu0 1
        %246 = vperm.xlu0 %245, %v173
        %v247 = vpop.permute.xlu0 %246
        %250 = vset.pattern.permute.xlu0 1
        %251 = vperm.xlu0 %250, %v174
        %v252 = vpop.permute.xlu0 %251
        %255 = vset.pattern.permute.xlu0 1
        %256 = vperm.xlu0 %255, %v175
        %v257 = vpop.permute.xlu0 %256
        %260 = vset.pattern.permute.xlu0 1
        %261 = vperm.xlu0 %260, %v176
        %v262 = vpop.permute.xlu0 %261
        %265 = vset.pattern.permute.xlu0 1
        %266 = vperm.xlu0 %265, %v177
        %v267 = vpop.permute.xlu0 %266
        %270 = vset.pattern.permute.xlu0 1
        %271 = vperm.xlu0 %270, %v178
        %v272 = vpop.permute.xlu0 %271
        %275 = vset.pattern.permute.xlu0 1
        %276 = vperm.xlu0 %275, %v179
        %v277 = vpop.permute.xlu0 %276
        %280 = vset.pattern.permute.xlu0 1
        %281 = vperm.xlu0 %280, %v180
        %v282 = vpop.permute.xlu0 %281
        %285 = vset.pattern.permute.xlu0 1
        %286 = vperm.xlu0 %285, %v181
        %v287 = vpop.permute.xlu0 %286
        %290 = vset.pattern.permute.xlu0 1
        %291 = vperm.xlu0 %290, %v182
        %v292 = vpop.permute.xlu0 %291
        %295 = vset.pattern.permute.xlu0 1
        %296 = vperm.xlu0 %295, %v183
        %v297 = vpop.permute.xlu0 %296
        %300 = vset.pattern.permute.xlu0 1
        %301 = vperm.xlu0 %300, %v184
        %v302 = vpop.permute.xlu0 %301
        %305 = vset.pattern.permute.xlu0 1
        %306 = vperm.xlu0 %305, %v185
        %v307 = vpop.permute.xlu0 %306
        %310 = vset.pattern.permute.xlu0 1
        %311 = vperm.xlu0 %310, %v186
        %v312 = vpop.permute.xlu0 %311
        %315 = vset.pattern.permute.xlu0 1
        %316 = vperm.xlu0 %315, %v187
        %v317 = vpop.permute.xlu0 %316
        %320 = vset.pattern.permute.xlu0 1
        %321 = vperm.xlu0 %320, %v188
        %v322 = vpop.permute.xlu0 %321
        %325 = vset.pattern.permute.xlu0 1
        %326 = vperm.xlu0 %325, %v189
        %v327 = vpop.permute.xlu0 %326
        %330 = vset.pattern.permute.xlu0 1
        %331 = vperm.xlu0 %330, %v190
        %v332 = vpop.permute.xlu0 %331
        %335 = vset.pattern.permute.xlu0 1
        %336 = vperm.xlu0 %335, %v191
        %v337 = vpop.permute.xlu0 %336
        %340 = vset.pattern.permute.xlu0 1
        %341 = vperm.xlu0 %340, %v192
        %v342 = vpop.permute.xlu0 %341
        %345 = vset.pattern.permute.xlu0 1
        %346 = vperm.xlu0 %345, %v193
        %v347 = vpop.permute.xlu0 %346
        %350 = vset.pattern.permute.xlu0 1
        %351 = vperm.xlu0 %350, %v194
        %v352 = vpop.permute.xlu0 %351
        %355 = vset.pattern.permute.xlu0 1
        %356 = vperm.xlu0 %355, %v195
        %v357 = vpop.permute.xlu0 %356
        %360 = vset.pattern.permute.xlu0 1
        %361 = vperm.xlu0 %360, %v196
        %v362 = vpop.permute.xlu0 %361
        %365 = vset.pattern.permute.xlu0 1
        %366 = vperm.xlu0 %365, %v197
        %v367 = vpop.permute.xlu0 %366
        %370 = vset.pattern.permute.xlu0 1
        %371 = vperm.xlu0 %370, %v198
        %v372 = vpop.permute.xlu0 %371
        %375 = vset.pattern.permute.xlu0 1
        %376 = vperm.xlu0 %375, %v199
        %v377 = vpop.permute.xlu0 %376
        %380 = vset.pattern.permute.xlu0 1
        %381 = vperm.xlu0 %380, %v200
        %v382 = vpop.permute.xlu0 %381
        %385 = vset.pattern.permute.xlu0 1
        %386 = vperm.xlu0 %385, %v201
        %v387 = vpop.permute.xlu0 %386
        %390 = vset.pattern.permute.xlu0 1
        %391 = vperm.xlu0 %390, %v202
        %v392 = vpop.permute.xlu0 %391
        %395 = vset.pattern.permute.xlu0 1
        %396 = vperm.xlu0 %395, %v203
        %v397 = vpop.permute.xlu0 %396
        %400 = vset.pattern.permute.xlu0 1
        %401 = vperm.xlu0 %400, %v204
        %v402 = vpop.permute.xlu0 %401
        %405 = vset.pattern.permute.xlu0 1
        %406 = vperm.xlu0 %405, %v205
        %v407 = vpop.permute.xlu0 %406
        %410 = vset.pattern.permute.xlu0 1
        %411 = vperm.xlu0 %410, %v206
        %v412 = vpop.permute.xlu0 %411
        %415 = vset.pattern.permute.xlu0 1
        %416 = vperm.xlu0 %415, %v207
        %v417 = vpop.permute.xlu0 %416
        %420 = vset.pattern.permute.xlu0 1
        %421 = vperm.xlu0 %420, %v208
        %v422 = vpop.permute.xlu0 %421
        %425 = vset.pattern.permute.xlu0 1
        %426 = vperm.xlu0 %425, %v209
        %v427 = vpop.permute.xlu0 %426
        %430 = vset.pattern.permute.xlu0 1
        %431 = vperm.xlu0 %430, %v210
        %v432 = vpop.permute.xlu0 %431
        %435 = vset.pattern.permute.xlu0 1
        %436 = vperm.xlu0 %435, %v211
        %v437 = vpop.permute.xlu0 %436
        %440 = vset.pattern.permute.xlu0 1
        %441 = vperm.xlu0 %440, %v212
        %v442 = vpop.permute.xlu0 %441
        %445 = vset.pattern.permute.xlu0 1
        %446 = vperm.xlu0 %445, %v213
        %v447 = vpop.permute.xlu0 %446
        %450 = vset.pattern.permute.xlu0 1
        %451 = vperm.xlu0 %450, %v214
        %v452 = vpop.permute.xlu0 %451
        %455 = vset.pattern.permute.xlu0 1
        %456 = vperm.xlu0 %455, %v215
        %v457 = vpop.permute.xlu0 %456
        %460 = vset.pattern.permute.xlu0 1
        %461 = vperm.xlu0 %460, %v216
        %v462 = vpop.permute.xlu0 %461
        %465 = vset.pattern.permute.xlu0 1
        %466 = vperm.xlu0 %465, %v217
        %v467 = vpop.permute.xlu0 %466
        %470 = vset.pattern.permute.xlu0 1
        %471 = vperm.xlu0 %470, %v218
        %v472 = vpop.permute.xlu0 %471
        %475 = vset.pattern.permute.xlu0 1
        %476 = vperm.xlu0 %475, %v219
        %v477 = vpop.permute.xlu0 %476
        %480 = vset.pattern.permute.xlu0 1
        %481 = vperm.xlu0 %480, %v220
        %v482 = vpop.permute.xlu0 %481
        %485 = vset.pattern.permute.xlu0 1
        %486 = vperm.xlu0 %485, %v221
        %v487 = vpop.permute.xlu0 %486
        %490 = vset.pattern.permute.xlu0 1
        %491 = vperm.xlu0 %490, %v222
        %v492 = vpop.permute.xlu0 %491
        %495 = vset.pattern.permute.xlu0 1
        %496 = vperm.xlu0 %495, %v223
        %v497 = vpop.permute.xlu0 %496
        %500 = vset.pattern.permute.xlu0 1
        %501 = vperm.xlu0 %500, %v224
        %v502 = vpop.permute.xlu0 %501
        %505 = vset.pattern.permute.xlu0 1
        %506 = vperm.xlu0 %505, %v225
        %v507 = vpop.permute.xlu0 %506
        %510 = vset.pattern.permute.xlu0 1
        %511 = vperm.xlu0 %510, %v226
        %v512 = vpop.permute.xlu0 %511
        %515 = vset.pattern.permute.xlu0 1
        %516 = vperm.xlu0 %515, %v227
        %v517 = vpop.permute.xlu0 %516
        %520 = vset.pattern.permute.xlu0 1
        %521 = vperm.xlu0 %520, %v228
        %v522 = vpop.permute.xlu0 %521
        %525 = vset.pattern.permute.xlu0 1
        %526 = vperm.xlu0 %525, %v229
        %v527 = vpop.permute.xlu0 %526
        %530 = vset.pattern.permute.xlu0 1
        %531 = vperm.xlu0 %530, %v230
        %v532 = vpop.permute.xlu0 %531
        %535 = vset.pattern.permute.xlu0 1
        %536 = vperm.xlu0 %535, %v231
        %v537 = vpop.permute.xlu0 %536
        %540 = vset.pattern.permute.xlu0 1
        %541 = vperm.xlu0 %540, %v232
        %v542 = vpop.permute.xlu0 %541
        %545 = vset.pattern.permute.xlu0 1
        %546 = vperm.xlu0 %545, %v233
        %v547 = vpop.permute.xlu0 %546
        %550 = vset.pattern.permute.xlu0 1
        %551 = vperm.xlu0 %550, %v234
        %v552 = vpop.permute.xlu0 %551
        %555 = vset.pattern.permute.xlu0 1
        %556 = vperm.xlu0 %555, %v235
        %v557 = vpop.permute.xlu0 %556
        %v560 = vlaneseq
        %v561 = vshrl.u32 %v560, 7
        %v562 = vsub.s32 0, %v561
        %v563 = vrot.slane %v236, %v562
        %v564 = vlaneseq
        %v565 = vshrl.u32 %v564, 7
        %v566 = vsub.s32 1, %v565
        %v567 = vrot.slane %v236, %v566
        %v570 = vsub.f32 %v242, %v563
        %v571 = vsub.f32 %v242, %v567
        %v572 = vsub.f32 %v247, %v563
        %v573 = vsub.f32 %v247, %v567
        %v574 = vsub.f32 %v252, %v563
        %v575 = vsub.f32 %v252, %v567
        %v576 = vsub.f32 %v257, %v563
        %v577 = vsub.f32 %v257, %v567
        %v578 = vsub.f32 %v262, %v563
        %v579 = vsub.f32 %v262, %v567
        %v580 = vsub.f32 %v267, %v563
        %v581 = vsub.f32 %v267, %v567
        %v582 = vsub.f32 %v272, %v563
        %v583 = vsub.f32 %v272, %v567
        %v584 = vsub.f32 %v277, %v563
        %v585 = vsub.f32 %v277, %v567
        %v586 = vsub.f32 %v282, %v563
        %v587 = vsub.f32 %v282, %v567
        %v588 = vsub.f32 %v287, %v563
        %v589 = vsub.f32 %v287, %v567
        %v590 = vsub.f32 %v292, %v563
        %v591 = vsub.f32 %v292, %v567
        %v592 = vsub.f32 %v297, %v563
        %v593 = vsub.f32 %v297, %v567
        %v594 = vsub.f32 %v302, %v563
        %v595 = vsub.f32 %v302, %v567
        %v596 = vsub.f32 %v307, %v563
        %v597 = vsub.f32 %v307, %v567
        %v598 = vsub.f32 %v312, %v563
        %v599 = vsub.f32 %v312, %v567
        %v600 = vsub.f32 %v317, %v563
        %v601 = vsub.f32 %v317, %v567
        %v602 = vsub.f32 %v322, %v563
        %v603 = vsub.f32 %v322, %v567
        %v604 = vsub.f32 %v327, %v563
        %v605 = vsub.f32 %v327, %v567
        %v606 = vsub.f32 %v332, %v563
        %v607 = vsub.f32 %v332, %v567
        %v608 = vsub.f32 %v337, %v563
        %v609 = vsub.f32 %v337, %v567
        %v610 = vsub.f32 %v342, %v563
        %v611 = vsub.f32 %v342, %v567
        %v612 = vsub.f32 %v347, %v563
        %v613 = vsub.f32 %v347, %v567
        %v614 = vsub.f32 %v352, %v563
        %v615 = vsub.f32 %v352, %v567
        %v616 = vsub.f32 %v357, %v563
        %v617 = vsub.f32 %v357, %v567
        %v618 = vsub.f32 %v362, %v563
        %v619 = vsub.f32 %v362, %v567
        %v620 = vsub.f32 %v367, %v563
        %v621 = vsub.f32 %v367, %v567
        %v622 = vsub.f32 %v372, %v563
        %v623 = vsub.f32 %v372, %v567
        %v624 = vsub.f32 %v377, %v563
        %v625 = vsub.f32 %v377, %v567
        %v626 = vsub.f32 %v382, %v563
        %v627 = vsub.f32 %v382, %v567
        %v628 = vsub.f32 %v387, %v563
        %v629 = vsub.f32 %v387, %v567
        %v630 = vsub.f32 %v392, %v563
        %v631 = vsub.f32 %v392, %v567
        %v632 = vsub.f32 %v397, %v563
        %v633 = vsub.f32 %v397, %v567
        %v634 = vsub.f32 %v402, %v563
        %v635 = vsub.f32 %v402, %v567
        %v636 = vsub.f32 %v407, %v563
        %v637 = vsub.f32 %v407, %v567
        %v638 = vsub.f32 %v412, %v563
        %v639 = vsub.f32 %v412, %v567
        %v640 = vsub.f32 %v417, %v563
        %v641 = vsub.f32 %v417, %v567
        %v642 = vsub.f32 %v422, %v563
        %v643 = vsub.f32 %v422, %v567
        %v644 = vsub.f32 %v427, %v563
        %v645 = vsub.f32 %v427, %v567
        %v646 = vsub.f32 %v432, %v563
        %v647 = vsub.f32 %v432, %v567
        %v648 = vsub.f32 %v437, %v563
        %v649 = vsub.f32 %v437, %v567
        %v650 = vsub.f32 %v442, %v563
        %v651 = vsub.f32 %v442, %v567
        %v652 = vsub.f32 %v447, %v563
        %v653 = vsub.f32 %v447, %v567
        %v654 = vsub.f32 %v452, %v563
        %v655 = vsub.f32 %v452, %v567
        %v656 = vsub.f32 %v457, %v563
        %v657 = vsub.f32 %v457, %v567
        %v658 = vsub.f32 %v462, %v563
        %v659 = vsub.f32 %v462, %v567
        %v660 = vsub.f32 %v467, %v563
        %v661 = vsub.f32 %v467, %v567
        %v662 = vsub.f32 %v472, %v563
        %v663 = vsub.f32 %v472, %v567
        %v664 = vsub.f32 %v477, %v563
        %v665 = vsub.f32 %v477, %v567
        %v666 = vsub.f32 %v482, %v563
        %v667 = vsub.f32 %v482, %v567
        %v668 = vsub.f32 %v487, %v563
        %v669 = vsub.f32 %v487, %v567
        %v670 = vsub.f32 %v492, %v563
        %v671 = vsub.f32 %v492, %v567
        %v672 = vsub.f32 %v497, %v563
        %v673 = vsub.f32 %v497, %v567
        %v674 = vsub.f32 %v502, %v563
        %v675 = vsub.f32 %v502, %v567
        %v676 = vsub.f32 %v507, %v563
        %v677 = vsub.f32 %v507, %v567
        %v678 = vsub.f32 %v512, %v563
        %v679 = vsub.f32 %v512, %v567
        %v680 = vsub.f32 %v517, %v563
        %v681 = vsub.f32 %v517, %v567
        %v682 = vsub.f32 %v522, %v563
        %v683 = vsub.f32 %v522, %v567
        %v684 = vsub.f32 %v527, %v563
        %v685 = vsub.f32 %v527, %v567
        %v686 = vsub.f32 %v532, %v563
        %v687 = vsub.f32 %v532, %v567
        %v688 = vsub.f32 %v537, %v563
        %v689 = vsub.f32 %v537, %v567
        %v690 = vsub.f32 %v542, %v563
        %v691 = vsub.f32 %v542, %v567
        %v692 = vsub.f32 %v547, %v563
        %v693 = vsub.f32 %v547, %v567
        %v694 = vsub.f32 %v552, %v563
        %v695 = vsub.f32 %v552, %v567
        %v696 = vsub.f32 %v557, %v563
        %v697 = vsub.f32 %v557, %v567
        %v698 = vand.u32 2147483647, %v570
        %v699 = vand.u32 2147483647, %v571
        %v700 = vand.u32 2147483647, %v572
        %v701 = vand.u32 2147483647, %v573
        %v702 = vand.u32 2147483647, %v574
        %v703 = vand.u32 2147483647, %v575
        %v704 = vand.u32 2147483647, %v576
        %v705 = vand.u32 2147483647, %v577
        %v706 = vand.u32 2147483647, %v578
        %v707 = vand.u32 2147483647, %v579
        %v708 = vand.u32 2147483647, %v580
        %v709 = vand.u32 2147483647, %v581
        %v710 = vand.u32 2147483647, %v582
        %v711 = vand.u32 2147483647, %v583
        %v712 = vand.u32 2147483647, %v584
        %v713 = vand.u32 2147483647, %v585
        %v714 = vand.u32 2147483647, %v586
        %v715 = vand.u32 2147483647, %v587
        %v716 = vand.u32 2147483647, %v588
        %v717 = vand.u32 2147483647, %v589
        %v718 = vand.u32 2147483647, %v590
        %v719 = vand.u32 2147483647, %v591
        %v720 = vand.u32 2147483647, %v592
        %v721 = vand.u32 2147483647, %v593
        %v722 = vand.u32 2147483647, %v594
        %v723 = vand.u32 2147483647, %v595
        %v724 = vand.u32 2147483647, %v596
        %v725 = vand.u32 2147483647, %v597
        %v726 = vand.u32 2147483647, %v598
        %v727 = vand.u32 2147483647, %v599
        %v728 = vand.u32 2147483647, %v600
        %v729 = vand.u32 2147483647, %v601
        %v730 = vand.u32 2147483647, %v602
        %v731 = vand.u32 2147483647, %v603
        %v732 = vand.u32 2147483647, %v604
        %v733 = vand.u32 2147483647, %v605
        %v734 = vand.u32 2147483647, %v606
        %v735 = vand.u32 2147483647, %v607
        %v736 = vand.u32 2147483647, %v608
        %v737 = vand.u32 2147483647, %v609
        %v738 = vand.u32 2147483647, %v610
        %v739 = vand.u32 2147483647, %v611
        %v740 = vand.u32 2147483647, %v612
        %v741 = vand.u32 2147483647, %v613
        %v742 = vand.u32 2147483647, %v614
        %v743 = vand.u32 2147483647, %v615
        %v744 = vand.u32 2147483647, %v616
        %v745 = vand.u32 2147483647, %v617
        %v746 = vand.u32 2147483647, %v618
        %v747 = vand.u32 2147483647, %v619
        %v748 = vand.u32 2147483647, %v620
        %v749 = vand.u32 2147483647, %v621
        %v750 = vand.u32 2147483647, %v622
        %v751 = vand.u32 2147483647, %v623
        %v752 = vand.u32 2147483647, %v624
        %v753 = vand.u32 2147483647, %v625
        %v754 = vand.u32 2147483647, %v626
        %v755 = vand.u32 2147483647, %v627
        %v756 = vand.u32 2147483647, %v628
        %v757 = vand.u32 2147483647, %v629
        %v758 = vand.u32 2147483647, %v630
        %v759 = vand.u32 2147483647, %v631
        %v760 = vand.u32 2147483647, %v632
        %v761 = vand.u32 2147483647, %v633
        %v762 = vand.u32 2147483647, %v634
        %v763 = vand.u32 2147483647, %v635
        %v764 = vand.u32 2147483647, %v636
        %v765 = vand.u32 2147483647, %v637
        %v766 = vand.u32 2147483647, %v638
        %v767 = vand.u32 2147483647, %v639
        %v768 = vand.u32 2147483647, %v640
        %v769 = vand.u32 2147483647, %v641
        %v770 = vand.u32 2147483647, %v642
        %v771 = vand.u32 2147483647, %v643
        %v772 = vand.u32 2147483647, %v644
        %v773 = vand.u32 2147483647, %v645
        %v774 = vand.u32 2147483647, %v646
        %v775 = vand.u32 2147483647, %v647
        %v776 = vand.u32 2147483647, %v648
        %v777 = vand.u32 2147483647, %v649
        %v778 = vand.u32 2147483647, %v650
        %v779 = vand.u32 2147483647, %v651
        %v780 = vand.u32 2147483647, %v652
        %v781 = vand.u32 2147483647, %v653
        %v782 = vand.u32 2147483647, %v654
        %v783 = vand.u32 2147483647, %v655
        %v784 = vand.u32 2147483647, %v656
        %v785 = vand.u32 2147483647, %v657
        %v786 = vand.u32 2147483647, %v658
        %v787 = vand.u32 2147483647, %v659
        %v788 = vand.u32 2147483647, %v660
        %v789 = vand.u32 2147483647, %v661
        %v790 = vand.u32 2147483647, %v662
        %v791 = vand.u32 2147483647, %v663
        %v792 = vand.u32 2147483647, %v664
        %v793 = vand.u32 2147483647, %v665
        %v794 = vand.u32 2147483647, %v666
        %v795 = vand.u32 2147483647, %v667
        %v796 = vand.u32 2147483647, %v668
        %v797 = vand.u32 2147483647, %v669
        %v798 = vand.u32 2147483647, %v670
        %v799 = vand.u32 2147483647, %v671
        %v800 = vand.u32 2147483647, %v672
        %v801 = vand.u32 2147483647, %v673
        %v802 = vand.u32 2147483647, %v674
        %v803 = vand.u32 2147483647, %v675
        %v804 = vand.u32 2147483647, %v676
        %v805 = vand.u32 2147483647, %v677
        %v806 = vand.u32 2147483647, %v678
        %v807 = vand.u32 2147483647, %v679
        %v808 = vand.u32 2147483647, %v680
        %v809 = vand.u32 2147483647, %v681
        %v810 = vand.u32 2147483647, %v682
        %v811 = vand.u32 2147483647, %v683
        %v812 = vand.u32 2147483647, %v684
        %v813 = vand.u32 2147483647, %v685
        %v814 = vand.u32 2147483647, %v686
        %v815 = vand.u32 2147483647, %v687
        %v816 = vand.u32 2147483647, %v688
        %v817 = vand.u32 2147483647, %v689
        %v818 = vand.u32 2147483647, %v690
        %v819 = vand.u32 2147483647, %v691
        %v820 = vand.u32 2147483647, %v692
        %v821 = vand.u32 2147483647, %v693
        %v822 = vand.u32 2147483647, %v694
        %v823 = vand.u32 2147483647, %v695
        %v824 = vand.u32 2147483647, %v696
        %v825 = vand.u32 2147483647, %v697
        %v826 = vsub.f32 1.0, %v698
        %v827 = vsub.f32 1.0, %v699
        %v828 = vsub.f32 1.0, %v700
        %v829 = vsub.f32 1.0, %v701
        %v830 = vsub.f32 1.0, %v702
        %v831 = vsub.f32 1.0, %v703
        %v832 = vsub.f32 1.0, %v704
        %v833 = vsub.f32 1.0, %v705
        %v834 = vsub.f32 1.0, %v706
        %v835 = vsub.f32 1.0, %v707
        %v836 = vsub.f32 1.0, %v708
        %v837 = vsub.f32 1.0, %v709
        %v838 = vsub.f32 1.0, %v710
        %v839 = vsub.f32 1.0, %v711
        %v840 = vsub.f32 1.0, %v712
        %v841 = vsub.f32 1.0, %v713
        %v842 = vsub.f32 1.0, %v714
        %v843 = vsub.f32 1.0, %v715
        %v844 = vsub.f32 1.0, %v716
        %v845 = vsub.f32 1.0, %v717
        %v846 = vsub.f32 1.0, %v718
        %v847 = vsub.f32 1.0, %v719
        %v848 = vsub.f32 1.0, %v720
        %v849 = vsub.f32 1.0, %v721
        %v850 = vsub.f32 1.0, %v722
        %v851 = vsub.f32 1.0, %v723
        %v852 = vsub.f32 1.0, %v724
        %v853 = vsub.f32 1.0, %v725
        %v854 = vsub.f32 1.0, %v726
        %v855 = vsub.f32 1.0, %v727
        %v856 = vsub.f32 1.0, %v728
        %v857 = vsub.f32 1.0, %v729
        %v858 = vsub.f32 1.0, %v730
        %v859 = vsub.f32 1.0, %v731
        %v860 = vsub.f32 1.0, %v732
        %v861 = vsub.f32 1.0, %v733
        %v862 = vsub.f32 1.0, %v734
        %v863 = vsub.f32 1.0, %v735
        %v864 = vsub.f32 1.0, %v736
        %v865 = vsub.f32 1.0, %v737
        %v866 = vsub.f32 1.0, %v738
        %v867 = vsub.f32 1.0, %v739
        %v868 = vsub.f32 1.0, %v740
        %v869 = vsub.f32 1.0, %v741
        %v870 = vsub.f32 1.0, %v742
        %v871 = vsub.f32 1.0, %v743
        %v872 = vsub.f32 1.0, %v744
        %v873 = vsub.f32 1.0, %v745
        %v874 = vsub.f32 1.0, %v746
        %v875 = vsub.f32 1.0, %v747
        %v876 = vsub.f32 1.0, %v748
        %v877 = vsub.f32 1.0, %v749
        %v878 = vsub.f32 1.0, %v750
        %v879 = vsub.f32 1.0, %v751
        %v880 = vsub.f32 1.0, %v752
        %v881 = vsub.f32 1.0, %v753
        %v882 = vsub.f32 1.0, %v754
        %v883 = vsub.f32 1.0, %v755
        %v884 = vsub.f32 1.0, %v756
        %v885 = vsub.f32 1.0, %v757
        %v886 = vsub.f32 1.0, %v758
        %v887 = vsub.f32 1.0, %v759
        %v888 = vsub.f32 1.0, %v760
        %v889 = vsub.f32 1.0, %v761
        %v890 = vsub.f32 1.0, %v762
        %v891 = vsub.f32 1.0, %v763
        %v892 = vsub.f32 1.0, %v764
        %v893 = vsub.f32 1.0, %v765
        %v894 = vsub.f32 1.0, %v766
        %v895 = vsub.f32 1.0, %v767
        %v896 = vsub.f32 1.0, %v768
        %v897 = vsub.f32 1.0, %v769
        %v898 = vsub.f32 1.0, %v770
        %v899 = vsub.f32 1.0, %v771
        %v900 = vsub.f32 1.0, %v772
        %v901 = vsub.f32 1.0, %v773
        %v902 = vsub.f32 1.0, %v774
        %v903 = vsub.f32 1.0, %v775
        %v904 = vsub.f32 1.0, %v776
        %v905 = vsub.f32 1.0, %v777
        %v906 = vsub.f32 1.0, %v778
        %v907 = vsub.f32 1.0, %v779
        %v908 = vsub.f32 1.0, %v780
        %v909 = vsub.f32 1.0, %v781
        %v910 = vsub.f32 1.0, %v782
        %v911 = vsub.f32 1.0, %v783
        %v912 = vsub.f32 1.0, %v784
        %v913 = vsub.f32 1.0, %v785
        %v914 = vsub.f32 1.0, %v786
        %v915 = vsub.f32 1.0, %v787
        %v916 = vsub.f32 1.0, %v788
        %v917 = vsub.f32 1.0, %v789
        %v918 = vsub.f32 1.0, %v790
        %v919 = vsub.f32 1.0, %v791
        %v920 = vsub.f32 1.0, %v792
        %v921 = vsub.f32 1.0, %v793
        %v922 = vsub.f32 1.0, %v794
        %v923 = vsub.f32 1.0, %v795
        %v924 = vsub.f32 1.0, %v796
        %v925 = vsub.f32 1.0, %v797
        %v926 = vsub.f32 1.0, %v798
        %v927 = vsub.f32 1.0, %v799
        %v928 = vsub.f32 1.0, %v800
        %v929 = vsub.f32 1.0, %v801
        %v930 = vsub.f32 1.0, %v802
        %v931 = vsub.f32 1.0, %v803
        %v932 = vsub.f32 1.0, %v804
        %v933 = vsub.f32 1.0, %v805
        %v934 = vsub.f32 1.0, %v806
        %v935 = vsub.f32 1.0, %v807
        %v936 = vsub.f32 1.0, %v808
        %v937 = vsub.f32 1.0, %v809
        %v938 = vsub.f32 1.0, %v810
        %v939 = vsub.f32 1.0, %v811
        %v940 = vsub.f32 1.0, %v812
        %v941 = vsub.f32 1.0, %v813
        %v942 = vsub.f32 1.0, %v814
        %v943 = vsub.f32 1.0, %v815
        %v944 = vsub.f32 1.0, %v816
        %v945 = vsub.f32 1.0, %v817
        %v946 = vsub.f32 1.0, %v818
        %v947 = vsub.f32 1.0, %v819
        %v948 = vsub.f32 1.0, %v820
        %v949 = vsub.f32 1.0, %v821
        %v950 = vsub.f32 1.0, %v822
        %v951 = vsub.f32 1.0, %v823
        %v952 = vsub.f32 1.0, %v824
        %v953 = vsub.f32 1.0, %v825
        %v954 = vmax.f32 %v826, 0.0
        %v955 = vmax.f32 %v827, 0.0
        %v956 = vmax.f32 %v828, 0.0
        %v957 = vmax.f32 %v829, 0.0
        %v958 = vmax.f32 %v830, 0.0
        %v959 = vmax.f32 %v831, 0.0
        %v960 = vmax.f32 %v832, 0.0
        %v961 = vmax.f32 %v833, 0.0
        %v962 = vmax.f32 %v834, 0.0
        %v963 = vmax.f32 %v835, 0.0
        %v964 = vmax.f32 %v836, 0.0
        %v965 = vmax.f32 %v837, 0.0
        %v966 = vmax.f32 %v838, 0.0
        %v967 = vmax.f32 %v839, 0.0
        %v968 = vmax.f32 %v840, 0.0
        %v969 = vmax.f32 %v841, 0.0
        %v970 = vmax.f32 %v842, 0.0
        %v971 = vmax.f32 %v843, 0.0
        %v972 = vmax.f32 %v844, 0.0
        %v973 = vmax.f32 %v845, 0.0
        %v974 = vmax.f32 %v846, 0.0
        %v975 = vmax.f32 %v847, 0.0
        %v976 = vmax.f32 %v848, 0.0
        %v977 = vmax.f32 %v849, 0.0
        %v978 = vmax.f32 %v850, 0.0
        %v979 = vmax.f32 %v851, 0.0
        %v980 = vmax.f32 %v852, 0.0
        %v981 = vmax.f32 %v853, 0.0
        %v982 = vmax.f32 %v854, 0.0
        %v983 = vmax.f32 %v855, 0.0
        %v984 = vmax.f32 %v856, 0.0
        %v985 = vmax.f32 %v857, 0.0
        %v986 = vmax.f32 %v858, 0.0
        %v987 = vmax.f32 %v859, 0.0
        %v988 = vmax.f32 %v860, 0.0
        %v989 = vmax.f32 %v861, 0.0
        %v990 = vmax.f32 %v862, 0.0
        %v991 = vmax.f32 %v863, 0.0
        %v992 = vmax.f32 %v864, 0.0
        %v993 = vmax.f32 %v865, 0.0
        %v994 = vmax.f32 %v866, 0.0
        %v995 = vmax.f32 %v867, 0.0
        %v996 = vmax.f32 %v868, 0.0
        %v997 = vmax.f32 %v869, 0.0
        %v998 = vmax.f32 %v870, 0.0
        %v999 = vmax.f32 %v871, 0.0
        %v1000 = vmax.f32 %v872, 0.0
        %v1001 = vmax.f32 %v873, 0.0
        %v1002 = vmax.f32 %v874, 0.0
        %v1003 = vmax.f32 %v875, 0.0
        %v1004 = vmax.f32 %v876, 0.0
        %v1005 = vmax.f32 %v877, 0.0
        %v1006 = vmax.f32 %v878, 0.0
        %v1007 = vmax.f32 %v879, 0.0
        %v1008 = vmax.f32 %v880, 0.0
        %v1009 = vmax.f32 %v881, 0.0
        %v1010 = vmax.f32 %v882, 0.0
        %v1011 = vmax.f32 %v883, 0.0
        %v1012 = vmax.f32 %v884, 0.0
        %v1013 = vmax.f32 %v885, 0.0
        %v1014 = vmax.f32 %v886, 0.0
        %v1015 = vmax.f32 %v887, 0.0
        %v1016 = vmax.f32 %v888, 0.0
        %v1017 = vmax.f32 %v889, 0.0
        %v1018 = vmax.f32 %v890, 0.0
        %v1019 = vmax.f32 %v891, 0.0
        %v1020 = vmax.f32 %v892, 0.0
        %v1021 = vmax.f32 %v893, 0.0
        %v1022 = vmax.f32 %v894, 0.0
        %v1023 = vmax.f32 %v895, 0.0
        %v1024 = vmax.f32 %v896, 0.0
        %v1025 = vmax.f32 %v897, 0.0
        %v1026 = vmax.f32 %v898, 0.0
        %v1027 = vmax.f32 %v899, 0.0
        %v1028 = vmax.f32 %v900, 0.0
        %v1029 = vmax.f32 %v901, 0.0
        %v1030 = vmax.f32 %v902, 0.0
        %v1031 = vmax.f32 %v903, 0.0
        %v1032 = vmax.f32 %v904, 0.0
        %v1033 = vmax.f32 %v905, 0.0
        %v1034 = vmax.f32 %v906, 0.0
        %v1035 = vmax.f32 %v907, 0.0
        %v1036 = vmax.f32 %v908, 0.0
        %v1037 = vmax.f32 %v909, 0.0
        %v1038 = vmax.f32 %v910, 0.0
        %v1039 = vmax.f32 %v911, 0.0
        %v1040 = vmax.f32 %v912, 0.0
        %v1041 = vmax.f32 %v913, 0.0
        %v1042 = vmax.f32 %v914, 0.0
        %v1043 = vmax.f32 %v915, 0.0
        %v1044 = vmax.f32 %v916, 0.0
        %v1045 = vmax.f32 %v917, 0.0
        %v1046 = vmax.f32 %v918, 0.0
        %v1047 = vmax.f32 %v919, 0.0
        %v1048 = vmax.f32 %v920, 0.0
        %v1049 = vmax.f32 %v921, 0.0
        %v1050 = vmax.f32 %v922, 0.0
        %v1051 = vmax.f32 %v923, 0.0
        %v1052 = vmax.f32 %v924, 0.0
        %v1053 = vmax.f32 %v925, 0.0
        %v1054 = vmax.f32 %v926, 0.0
        %v1055 = vmax.f32 %v927, 0.0
        %v1056 = vmax.f32 %v928, 0.0
        %v1057 = vmax.f32 %v929, 0.0
        %v1058 = vmax.f32 %v930, 0.0
        %v1059 = vmax.f32 %v931, 0.0
        %v1060 = vmax.f32 %v932, 0.0
        %v1061 = vmax.f32 %v933, 0.0
        %v1062 = vmax.f32 %v934, 0.0
        %v1063 = vmax.f32 %v935, 0.0
        %v1064 = vmax.f32 %v936, 0.0
        %v1065 = vmax.f32 %v937, 0.0
        %v1066 = vmax.f32 %v938, 0.0
        %v1067 = vmax.f32 %v939, 0.0
        %v1068 = vmax.f32 %v940, 0.0
        %v1069 = vmax.f32 %v941, 0.0
        %v1070 = vmax.f32 %v942, 0.0
        %v1071 = vmax.f32 %v943, 0.0
        %v1072 = vmax.f32 %v944, 0.0
        %v1073 = vmax.f32 %v945, 0.0
        %v1074 = vmax.f32 %v946, 0.0
        %v1075 = vmax.f32 %v947, 0.0
        %v1076 = vmax.f32 %v948, 0.0
        %v1077 = vmax.f32 %v949, 0.0
        %v1078 = vmax.f32 %v950, 0.0
        %v1079 = vmax.f32 %v951, 0.0
        %v1080 = vmax.f32 %v952, 0.0
        %v1081 = vmax.f32 %v953, 0.0
        %1082 = vset.pattern.permute.xlu0 0
        %1083 = vperm.xlu0 %1082, %v172
        %v1084 = vpop.permute.xlu0 %1083
        %1086 = vset.pattern.permute.xlu0 0
        %1087 = vperm.xlu0 %1086, %v173
        %v1088 = vpop.permute.xlu0 %1087
        %1090 = vset.pattern.permute.xlu0 0
        %1091 = vperm.xlu0 %1090, %v174
        %v1092 = vpop.permute.xlu0 %1091
        %1094 = vset.pattern.permute.xlu0 0
        %1095 = vperm.xlu0 %1094, %v175
        %v1096 = vpop.permute.xlu0 %1095
        %1098 = vset.pattern.permute.xlu0 0
        %1099 = vperm.xlu0 %1098, %v176
        %v1100 = vpop.permute.xlu0 %1099
        %1102 = vset.pattern.permute.xlu0 0
        %1103 = vperm.xlu0 %1102, %v177
        %v1104 = vpop.permute.xlu0 %1103
        %1106 = vset.pattern.permute.xlu0 0
        %1107 = vperm.xlu0 %1106, %v178
        %v1108 = vpop.permute.xlu0 %1107
        %1110 = vset.pattern.permute.xlu0 0
        %1111 = vperm.xlu0 %1110, %v179
        %v1112 = vpop.permute.xlu0 %1111
        %1114 = vset.pattern.permute.xlu0 0
        %1115 = vperm.xlu0 %1114, %v180
        %v1116 = vpop.permute.xlu0 %1115
        %1118 = vset.pattern.permute.xlu0 0
        %1119 = vperm.xlu0 %1118, %v181
        %v1120 = vpop.permute.xlu0 %1119
        %1122 = vset.pattern.permute.xlu0 0
        %1123 = vperm.xlu0 %1122, %v182
        %v1124 = vpop.permute.xlu0 %1123
        %1126 = vset.pattern.permute.xlu0 0
        %1127 = vperm.xlu0 %1126, %v183
        %v1128 = vpop.permute.xlu0 %1127
        %1130 = vset.pattern.permute.xlu0 0
        %1131 = vperm.xlu0 %1130, %v184
        %v1132 = vpop.permute.xlu0 %1131
        %1134 = vset.pattern.permute.xlu0 0
        %1135 = vperm.xlu0 %1134, %v185
        %v1136 = vpop.permute.xlu0 %1135
        %1138 = vset.pattern.permute.xlu0 0
        %1139 = vperm.xlu0 %1138, %v186
        %v1140 = vpop.permute.xlu0 %1139
        %1142 = vset.pattern.permute.xlu0 0
        %1143 = vperm.xlu0 %1142, %v187
        %v1144 = vpop.permute.xlu0 %1143
        %1146 = vset.pattern.permute.xlu0 0
        %1147 = vperm.xlu0 %1146, %v188
        %v1148 = vpop.permute.xlu0 %1147
        %1150 = vset.pattern.permute.xlu0 0
        %1151 = vperm.xlu0 %1150, %v189
        %v1152 = vpop.permute.xlu0 %1151
        %1154 = vset.pattern.permute.xlu0 0
        %1155 = vperm.xlu0 %1154, %v190
        %v1156 = vpop.permute.xlu0 %1155
        %1158 = vset.pattern.permute.xlu0 0
        %1159 = vperm.xlu0 %1158, %v191
        %v1160 = vpop.permute.xlu0 %1159
        %1162 = vset.pattern.permute.xlu0 0
        %1163 = vperm.xlu0 %1162, %v192
        %v1164 = vpop.permute.xlu0 %1163
        %1166 = vset.pattern.permute.xlu0 0
        %1167 = vperm.xlu0 %1166, %v193
        %v1168 = vpop.permute.xlu0 %1167
        %1170 = vset.pattern.permute.xlu0 0
        %1171 = vperm.xlu0 %1170, %v194
        %v1172 = vpop.permute.xlu0 %1171
        %1174 = vset.pattern.permute.xlu0 0
        %1175 = vperm.xlu0 %1174, %v195
        %v1176 = vpop.permute.xlu0 %1175
        %1178 = vset.pattern.permute.xlu0 0
        %1179 = vperm.xlu0 %1178, %v196
        %v1180 = vpop.permute.xlu0 %1179
        %1182 = vset.pattern.permute.xlu0 0
        %1183 = vperm.xlu0 %1182, %v197
        %v1184 = vpop.permute.xlu0 %1183
        %1186 = vset.pattern.permute.xlu0 0
        %1187 = vperm.xlu0 %1186, %v198
        %v1188 = vpop.permute.xlu0 %1187
        %1190 = vset.pattern.permute.xlu0 0
        %1191 = vperm.xlu0 %1190, %v199
        %v1192 = vpop.permute.xlu0 %1191
        %1194 = vset.pattern.permute.xlu0 0
        %1195 = vperm.xlu0 %1194, %v200
        %v1196 = vpop.permute.xlu0 %1195
        %1198 = vset.pattern.permute.xlu0 0
        %1199 = vperm.xlu0 %1198, %v201
        %v1200 = vpop.permute.xlu0 %1199
        %1202 = vset.pattern.permute.xlu0 0
        %1203 = vperm.xlu0 %1202, %v202
        %v1204 = vpop.permute.xlu0 %1203
        %1206 = vset.pattern.permute.xlu0 0
        %1207 = vperm.xlu0 %1206, %v203
        %v1208 = vpop.permute.xlu0 %1207
        %1210 = vset.pattern.permute.xlu0 0
        %1211 = vperm.xlu0 %1210, %v204
        %v1212 = vpop.permute.xlu0 %1211
        %1214 = vset.pattern.permute.xlu0 0
        %1215 = vperm.xlu0 %1214, %v205
        %v1216 = vpop.permute.xlu0 %1215
        %1218 = vset.pattern.permute.xlu0 0
        %1219 = vperm.xlu0 %1218, %v206
        %v1220 = vpop.permute.xlu0 %1219
        %1222 = vset.pattern.permute.xlu0 0
        %1223 = vperm.xlu0 %1222, %v207
        %v1224 = vpop.permute.xlu0 %1223
        %1226 = vset.pattern.permute.xlu0 0
        %1227 = vperm.xlu0 %1226, %v208
        %v1228 = vpop.permute.xlu0 %1227
        %1230 = vset.pattern.permute.xlu0 0
        %1231 = vperm.xlu0 %1230, %v209
        %v1232 = vpop.permute.xlu0 %1231
        %1234 = vset.pattern.permute.xlu0 0
        %1235 = vperm.xlu0 %1234, %v210
        %v1236 = vpop.permute.xlu0 %1235
        %1238 = vset.pattern.permute.xlu0 0
        %1239 = vperm.xlu0 %1238, %v211
        %v1240 = vpop.permute.xlu0 %1239
        %1242 = vset.pattern.permute.xlu0 0
        %1243 = vperm.xlu0 %1242, %v212
        %v1244 = vpop.permute.xlu0 %1243
        %1246 = vset.pattern.permute.xlu0 0
        %1247 = vperm.xlu0 %1246, %v213
        %v1248 = vpop.permute.xlu0 %1247
        %1250 = vset.pattern.permute.xlu0 0
        %1251 = vperm.xlu0 %1250, %v214
        %v1252 = vpop.permute.xlu0 %1251
        %1254 = vset.pattern.permute.xlu0 0
        %1255 = vperm.xlu0 %1254, %v215
        %v1256 = vpop.permute.xlu0 %1255
        %1258 = vset.pattern.permute.xlu0 0
        %1259 = vperm.xlu0 %1258, %v216
        %v1260 = vpop.permute.xlu0 %1259
        %1262 = vset.pattern.permute.xlu0 0
        %1263 = vperm.xlu0 %1262, %v217
        %v1264 = vpop.permute.xlu0 %1263
        %1266 = vset.pattern.permute.xlu0 0
        %1267 = vperm.xlu0 %1266, %v218
        %v1268 = vpop.permute.xlu0 %1267
        %1270 = vset.pattern.permute.xlu0 0
        %1271 = vperm.xlu0 %1270, %v219
        %v1272 = vpop.permute.xlu0 %1271
        %1274 = vset.pattern.permute.xlu0 0
        %1275 = vperm.xlu0 %1274, %v220
        %v1276 = vpop.permute.xlu0 %1275
        %1278 = vset.pattern.permute.xlu0 0
        %1279 = vperm.xlu0 %1278, %v221
        %v1280 = vpop.permute.xlu0 %1279
        %1282 = vset.pattern.permute.xlu0 0
        %1283 = vperm.xlu0 %1282, %v222
        %v1284 = vpop.permute.xlu0 %1283
        %1286 = vset.pattern.permute.xlu0 0
        %1287 = vperm.xlu0 %1286, %v223
        %v1288 = vpop.permute.xlu0 %1287
        %1290 = vset.pattern.permute.xlu0 0
        %1291 = vperm.xlu0 %1290, %v224
        %v1292 = vpop.permute.xlu0 %1291
        %1294 = vset.pattern.permute.xlu0 0
        %1295 = vperm.xlu0 %1294, %v225
        %v1296 = vpop.permute.xlu0 %1295
        %1298 = vset.pattern.permute.xlu0 0
        %1299 = vperm.xlu0 %1298, %v226
        %v1300 = vpop.permute.xlu0 %1299
        %1302 = vset.pattern.permute.xlu0 0
        %1303 = vperm.xlu0 %1302, %v227
        %v1304 = vpop.permute.xlu0 %1303
        %1306 = vset.pattern.permute.xlu0 0
        %1307 = vperm.xlu0 %1306, %v228
        %v1308 = vpop.permute.xlu0 %1307
        %1310 = vset.pattern.permute.xlu0 0
        %1311 = vperm.xlu0 %1310, %v229
        %v1312 = vpop.permute.xlu0 %1311
        %1314 = vset.pattern.permute.xlu0 0
        %1315 = vperm.xlu0 %1314, %v230
        %v1316 = vpop.permute.xlu0 %1315
        %1318 = vset.pattern.permute.xlu0 0
        %1319 = vperm.xlu0 %1318, %v231
        %v1320 = vpop.permute.xlu0 %1319
        %1322 = vset.pattern.permute.xlu0 0
        %1323 = vperm.xlu0 %1322, %v232
        %v1324 = vpop.permute.xlu0 %1323
        %1326 = vset.pattern.permute.xlu0 0
        %1327 = vperm.xlu0 %1326, %v233
        %v1328 = vpop.permute.xlu0 %1327
        %1330 = vset.pattern.permute.xlu0 0
        %1331 = vperm.xlu0 %1330, %v234
        %v1332 = vpop.permute.xlu0 %1331
        %1334 = vset.pattern.permute.xlu0 0
        %1335 = vperm.xlu0 %1334, %v235
        %v1336 = vpop.permute.xlu0 %1335
        %v1339 = vlaneseq
        %v1340 = vshrl.u32 %v1339, 7
        %v1341 = vsub.s32 0, %v1340
        %v1342 = vrot.slane %v238, %v1341
        %v1343 = vlaneseq
        %v1344 = vshrl.u32 %v1343, 7
        %v1345 = vsub.s32 1, %v1344
        %v1346 = vrot.slane %v238, %v1345
        %v1349 = vsub.f32 %v1084, %v1342
        %v1350 = vsub.f32 %v1084, %v1346
        %v1351 = vsub.f32 %v1088, %v1342
        %v1352 = vsub.f32 %v1088, %v1346
        %v1353 = vsub.f32 %v1092, %v1342
        %v1354 = vsub.f32 %v1092, %v1346
        %v1355 = vsub.f32 %v1096, %v1342
        %v1356 = vsub.f32 %v1096, %v1346
        %v1357 = vsub.f32 %v1100, %v1342
        %v1358 = vsub.f32 %v1100, %v1346
        %v1359 = vsub.f32 %v1104, %v1342
        %v1360 = vsub.f32 %v1104, %v1346
        %v1361 = vsub.f32 %v1108, %v1342
        %v1362 = vsub.f32 %v1108, %v1346
        %v1363 = vsub.f32 %v1112, %v1342
        %v1364 = vsub.f32 %v1112, %v1346
        %v1365 = vsub.f32 %v1116, %v1342
        %v1366 = vsub.f32 %v1116, %v1346
        %v1367 = vsub.f32 %v1120, %v1342
        %v1368 = vsub.f32 %v1120, %v1346
        %v1369 = vsub.f32 %v1124, %v1342
        %v1370 = vsub.f32 %v1124, %v1346
        %v1371 = vsub.f32 %v1128, %v1342
        %v1372 = vsub.f32 %v1128, %v1346
        %v1373 = vsub.f32 %v1132, %v1342
        %v1374 = vsub.f32 %v1132, %v1346
        %v1375 = vsub.f32 %v1136, %v1342
        %v1376 = vsub.f32 %v1136, %v1346
        %v1377 = vsub.f32 %v1140, %v1342
        %v1378 = vsub.f32 %v1140, %v1346
        %v1379 = vsub.f32 %v1144, %v1342
        %v1380 = vsub.f32 %v1144, %v1346
        %v1381 = vsub.f32 %v1148, %v1342
        %v1382 = vsub.f32 %v1148, %v1346
        %v1383 = vsub.f32 %v1152, %v1342
        %v1384 = vsub.f32 %v1152, %v1346
        %v1385 = vsub.f32 %v1156, %v1342
        %v1386 = vsub.f32 %v1156, %v1346
        %v1387 = vsub.f32 %v1160, %v1342
        %v1388 = vsub.f32 %v1160, %v1346
        %v1389 = vsub.f32 %v1164, %v1342
        %v1390 = vsub.f32 %v1164, %v1346
        %v1391 = vsub.f32 %v1168, %v1342
        %v1392 = vsub.f32 %v1168, %v1346
        %v1393 = vsub.f32 %v1172, %v1342
        %v1394 = vsub.f32 %v1172, %v1346
        %v1395 = vsub.f32 %v1176, %v1342
        %v1396 = vsub.f32 %v1176, %v1346
        %v1397 = vsub.f32 %v1180, %v1342
        %v1398 = vsub.f32 %v1180, %v1346
        %v1399 = vsub.f32 %v1184, %v1342
        %v1400 = vsub.f32 %v1184, %v1346
        %v1401 = vsub.f32 %v1188, %v1342
        %v1402 = vsub.f32 %v1188, %v1346
        %v1403 = vsub.f32 %v1192, %v1342
        %v1404 = vsub.f32 %v1192, %v1346
        %v1405 = vsub.f32 %v1196, %v1342
        %v1406 = vsub.f32 %v1196, %v1346
        %v1407 = vsub.f32 %v1200, %v1342
        %v1408 = vsub.f32 %v1200, %v1346
        %v1409 = vsub.f32 %v1204, %v1342
        %v1410 = vsub.f32 %v1204, %v1346
        %v1411 = vsub.f32 %v1208, %v1342
        %v1412 = vsub.f32 %v1208, %v1346
        %v1413 = vsub.f32 %v1212, %v1342
        %v1414 = vsub.f32 %v1212, %v1346
        %v1415 = vsub.f32 %v1216, %v1342
        %v1416 = vsub.f32 %v1216, %v1346
        %v1417 = vsub.f32 %v1220, %v1342
        %v1418 = vsub.f32 %v1220, %v1346
        %v1419 = vsub.f32 %v1224, %v1342
        %v1420 = vsub.f32 %v1224, %v1346
        %v1421 = vsub.f32 %v1228, %v1342
        %v1422 = vsub.f32 %v1228, %v1346
        %v1423 = vsub.f32 %v1232, %v1342
        %v1424 = vsub.f32 %v1232, %v1346
        %v1425 = vsub.f32 %v1236, %v1342
        %v1426 = vsub.f32 %v1236, %v1346
        %v1427 = vsub.f32 %v1240, %v1342
        %v1428 = vsub.f32 %v1240, %v1346
        %v1429 = vsub.f32 %v1244, %v1342
        %v1430 = vsub.f32 %v1244, %v1346
        %v1431 = vsub.f32 %v1248, %v1342
        %v1432 = vsub.f32 %v1248, %v1346
        %v1433 = vsub.f32 %v1252, %v1342
        %v1434 = vsub.f32 %v1252, %v1346
        %v1435 = vsub.f32 %v1256, %v1342
        %v1436 = vsub.f32 %v1256, %v1346
        %v1437 = vsub.f32 %v1260, %v1342
        %v1438 = vsub.f32 %v1260, %v1346
        %v1439 = vsub.f32 %v1264, %v1342
        %v1440 = vsub.f32 %v1264, %v1346
        %v1441 = vsub.f32 %v1268, %v1342
        %v1442 = vsub.f32 %v1268, %v1346
        %v1443 = vsub.f32 %v1272, %v1342
        %v1444 = vsub.f32 %v1272, %v1346
        %v1445 = vsub.f32 %v1276, %v1342
        %v1446 = vsub.f32 %v1276, %v1346
        %v1447 = vsub.f32 %v1280, %v1342
        %v1448 = vsub.f32 %v1280, %v1346
        %v1449 = vsub.f32 %v1284, %v1342
        %v1450 = vsub.f32 %v1284, %v1346
        %v1451 = vsub.f32 %v1288, %v1342
        %v1452 = vsub.f32 %v1288, %v1346
        %v1453 = vsub.f32 %v1292, %v1342
        %v1454 = vsub.f32 %v1292, %v1346
        %v1455 = vsub.f32 %v1296, %v1342
        %v1456 = vsub.f32 %v1296, %v1346
        %v1457 = vsub.f32 %v1300, %v1342
        %v1458 = vsub.f32 %v1300, %v1346
        %v1459 = vsub.f32 %v1304, %v1342
        %v1460 = vsub.f32 %v1304, %v1346
        %v1461 = vsub.f32 %v1308, %v1342
        %v1462 = vsub.f32 %v1308, %v1346
        %v1463 = vsub.f32 %v1312, %v1342
        %v1464 = vsub.f32 %v1312, %v1346
        %v1465 = vsub.f32 %v1316, %v1342
        %v1466 = vsub.f32 %v1316, %v1346
        %v1467 = vsub.f32 %v1320, %v1342
        %v1468 = vsub.f32 %v1320, %v1346
        %v1469 = vsub.f32 %v1324, %v1342
        %v1470 = vsub.f32 %v1324, %v1346
        %v1471 = vsub.f32 %v1328, %v1342
        %v1472 = vsub.f32 %v1328, %v1346
        %v1473 = vsub.f32 %v1332, %v1342
        %v1474 = vsub.f32 %v1332, %v1346
        %v1475 = vsub.f32 %v1336, %v1342
        %v1476 = vsub.f32 %v1336, %v1346
        %v1477 = vand.u32 2147483647, %v1349
        %v1478 = vand.u32 2147483647, %v1350
        %v1479 = vand.u32 2147483647, %v1351
        %v1480 = vand.u32 2147483647, %v1352
        %v1481 = vand.u32 2147483647, %v1353
        %v1482 = vand.u32 2147483647, %v1354
        %v1483 = vand.u32 2147483647, %v1355
        %v1484 = vand.u32 2147483647, %v1356
        %v1485 = vand.u32 2147483647, %v1357
        %v1486 = vand.u32 2147483647, %v1358
        %v1487 = vand.u32 2147483647, %v1359
        %v1488 = vand.u32 2147483647, %v1360
        %v1489 = vand.u32 2147483647, %v1361
        %v1490 = vand.u32 2147483647, %v1362
        %v1491 = vand.u32 2147483647, %v1363
        %v1492 = vand.u32 2147483647, %v1364
        %v1493 = vand.u32 2147483647, %v1365
        %v1494 = vand.u32 2147483647, %v1366
        %v1495 = vand.u32 2147483647, %v1367
        %v1496 = vand.u32 2147483647, %v1368
        %v1497 = vand.u32 2147483647, %v1369
        %v1498 = vand.u32 2147483647, %v1370
        %v1499 = vand.u32 2147483647, %v1371
        %v1500 = vand.u32 2147483647, %v1372
        %v1501 = vand.u32 2147483647, %v1373
        %v1502 = vand.u32 2147483647, %v1374
        %v1503 = vand.u32 2147483647, %v1375
        %v1504 = vand.u32 2147483647, %v1376
        %v1505 = vand.u32 2147483647, %v1377
        %v1506 = vand.u32 2147483647, %v1378
        %v1507 = vand.u32 2147483647, %v1379
        %v1508 = vand.u32 2147483647, %v1380
        %v1509 = vand.u32 2147483647, %v1381
        %v1510 = vand.u32 2147483647, %v1382
        %v1511 = vand.u32 2147483647, %v1383
        %v1512 = vand.u32 2147483647, %v1384
        %v1513 = vand.u32 2147483647, %v1385
        %v1514 = vand.u32 2147483647, %v1386
        %v1515 = vand.u32 2147483647, %v1387
        %v1516 = vand.u32 2147483647, %v1388
        %v1517 = vand.u32 2147483647, %v1389
        %v1518 = vand.u32 2147483647, %v1390
        %v1519 = vand.u32 2147483647, %v1391
        %v1520 = vand.u32 2147483647, %v1392
        %v1521 = vand.u32 2147483647, %v1393
        %v1522 = vand.u32 2147483647, %v1394
        %v1523 = vand.u32 2147483647, %v1395
        %v1524 = vand.u32 2147483647, %v1396
        %v1525 = vand.u32 2147483647, %v1397
        %v1526 = vand.u32 2147483647, %v1398
        %v1527 = vand.u32 2147483647, %v1399
        %v1528 = vand.u32 2147483647, %v1400
        %v1529 = vand.u32 2147483647, %v1401
        %v1530 = vand.u32 2147483647, %v1402
        %v1531 = vand.u32 2147483647, %v1403
        %v1532 = vand.u32 2147483647, %v1404
        %v1533 = vand.u32 2147483647, %v1405
        %v1534 = vand.u32 2147483647, %v1406
        %v1535 = vand.u32 2147483647, %v1407
        %v1536 = vand.u32 2147483647, %v1408
        %v1537 = vand.u32 2147483647, %v1409
        %v1538 = vand.u32 2147483647, %v1410
        %v1539 = vand.u32 2147483647, %v1411
        %v1540 = vand.u32 2147483647, %v1412
        %v1541 = vand.u32 2147483647, %v1413
        %v1542 = vand.u32 2147483647, %v1414
        %v1543 = vand.u32 2147483647, %v1415
        %v1544 = vand.u32 2147483647, %v1416
        %v1545 = vand.u32 2147483647, %v1417
        %v1546 = vand.u32 2147483647, %v1418
        %v1547 = vand.u32 2147483647, %v1419
        %v1548 = vand.u32 2147483647, %v1420
        %v1549 = vand.u32 2147483647, %v1421
        %v1550 = vand.u32 2147483647, %v1422
        %v1551 = vand.u32 2147483647, %v1423
        %v1552 = vand.u32 2147483647, %v1424
        %v1553 = vand.u32 2147483647, %v1425
        %v1554 = vand.u32 2147483647, %v1426
        %v1555 = vand.u32 2147483647, %v1427
        %v1556 = vand.u32 2147483647, %v1428
        %v1557 = vand.u32 2147483647, %v1429
        %v1558 = vand.u32 2147483647, %v1430
        %v1559 = vand.u32 2147483647, %v1431
        %v1560 = vand.u32 2147483647, %v1432
        %v1561 = vand.u32 2147483647, %v1433
        %v1562 = vand.u32 2147483647, %v1434
        %v1563 = vand.u32 2147483647, %v1435
        %v1564 = vand.u32 2147483647, %v1436
        %v1565 = vand.u32 2147483647, %v1437
        %v1566 = vand.u32 2147483647, %v1438
        %v1567 = vand.u32 2147483647, %v1439
        %v1568 = vand.u32 2147483647, %v1440
        %v1569 = vand.u32 2147483647, %v1441
        %v1570 = vand.u32 2147483647, %v1442
        %v1571 = vand.u32 2147483647, %v1443
        %v1572 = vand.u32 2147483647, %v1444
        %v1573 = vand.u32 2147483647, %v1445
        %v1574 = vand.u32 2147483647, %v1446
        %v1575 = vand.u32 2147483647, %v1447
        %v1576 = vand.u32 2147483647, %v1448
        %v1577 = vand.u32 2147483647, %v1449
        %v1578 = vand.u32 2147483647, %v1450
        %v1579 = vand.u32 2147483647, %v1451
        %v1580 = vand.u32 2147483647, %v1452
        %v1581 = vand.u32 2147483647, %v1453
        %v1582 = vand.u32 2147483647, %v1454
        %v1583 = vand.u32 2147483647, %v1455
        %v1584 = vand.u32 2147483647, %v1456
        %v1585 = vand.u32 2147483647, %v1457
        %v1586 = vand.u32 2147483647, %v1458
        %v1587 = vand.u32 2147483647, %v1459
        %v1588 = vand.u32 2147483647, %v1460
        %v1589 = vand.u32 2147483647, %v1461
        %v1590 = vand.u32 2147483647, %v1462
        %v1591 = vand.u32 2147483647, %v1463
        %v1592 = vand.u32 2147483647, %v1464
        %v1593 = vand.u32 2147483647, %v1465
        %v1594 = vand.u32 2147483647, %v1466
        %v1595 = vand.u32 2147483647, %v1467
        %v1596 = vand.u32 2147483647, %v1468
        %v1597 = vand.u32 2147483647, %v1469
        %v1598 = vand.u32 2147483647, %v1470
        %v1599 = vand.u32 2147483647, %v1471
        %v1600 = vand.u32 2147483647, %v1472
        %v1601 = vand.u32 2147483647, %v1473
        %v1602 = vand.u32 2147483647, %v1474
        %v1603 = vand.u32 2147483647, %v1475
        %v1604 = vand.u32 2147483647, %v1476
        %v1605 = vsub.f32 1.0, %v1477
        %v1606 = vsub.f32 1.0, %v1478
        %v1607 = vsub.f32 1.0, %v1479
        %v1608 = vsub.f32 1.0, %v1480
        %v1609 = vsub.f32 1.0, %v1481
        %v1610 = vsub.f32 1.0, %v1482
        %v1611 = vsub.f32 1.0, %v1483
        %v1612 = vsub.f32 1.0, %v1484
        %v1613 = vsub.f32 1.0, %v1485
        %v1614 = vsub.f32 1.0, %v1486
        %v1615 = vsub.f32 1.0, %v1487
        %v1616 = vsub.f32 1.0, %v1488
        %v1617 = vsub.f32 1.0, %v1489
        %v1618 = vsub.f32 1.0, %v1490
        %v1619 = vsub.f32 1.0, %v1491
        %v1620 = vsub.f32 1.0, %v1492
        %v1621 = vsub.f32 1.0, %v1493
        %v1622 = vsub.f32 1.0, %v1494
        %v1623 = vsub.f32 1.0, %v1495
        %v1624 = vsub.f32 1.0, %v1496
        %v1625 = vsub.f32 1.0, %v1497
        %v1626 = vsub.f32 1.0, %v1498
        %v1627 = vsub.f32 1.0, %v1499
        %v1628 = vsub.f32 1.0, %v1500
        %v1629 = vsub.f32 1.0, %v1501
        %v1630 = vsub.f32 1.0, %v1502
        %v1631 = vsub.f32 1.0, %v1503
        %v1632 = vsub.f32 1.0, %v1504
        %v1633 = vsub.f32 1.0, %v1505
        %v1634 = vsub.f32 1.0, %v1506
        %v1635 = vsub.f32 1.0, %v1507
        %v1636 = vsub.f32 1.0, %v1508
        %v1637 = vsub.f32 1.0, %v1509
        %v1638 = vsub.f32 1.0, %v1510
        %v1639 = vsub.f32 1.0, %v1511
        %v1640 = vsub.f32 1.0, %v1512
        %v1641 = vsub.f32 1.0, %v1513
        %v1642 = vsub.f32 1.0, %v1514
        %v1643 = vsub.f32 1.0, %v1515
        %v1644 = vsub.f32 1.0, %v1516
        %v1645 = vsub.f32 1.0, %v1517
        %v1646 = vsub.f32 1.0, %v1518
        %v1647 = vsub.f32 1.0, %v1519
        %v1648 = vsub.f32 1.0, %v1520
        %v1649 = vsub.f32 1.0, %v1521
        %v1650 = vsub.f32 1.0, %v1522
        %v1651 = vsub.f32 1.0, %v1523
        %v1652 = vsub.f32 1.0, %v1524
        %v1653 = vsub.f32 1.0, %v1525
        %v1654 = vsub.f32 1.0, %v1526
        %v1655 = vsub.f32 1.0, %v1527
        %v1656 = vsub.f32 1.0, %v1528
        %v1657 = vsub.f32 1.0, %v1529
        %v1658 = vsub.f32 1.0, %v1530
        %v1659 = vsub.f32 1.0, %v1531
        %v1660 = vsub.f32 1.0, %v1532
        %v1661 = vsub.f32 1.0, %v1533
        %v1662 = vsub.f32 1.0, %v1534
        %v1663 = vsub.f32 1.0, %v1535
        %v1664 = vsub.f32 1.0, %v1536
        %v1665 = vsub.f32 1.0, %v1537
        %v1666 = vsub.f32 1.0, %v1538
        %v1667 = vsub.f32 1.0, %v1539
        %v1668 = vsub.f32 1.0, %v1540
        %v1669 = vsub.f32 1.0, %v1541
        %v1670 = vsub.f32 1.0, %v1542
        %v1671 = vsub.f32 1.0, %v1543
        %v1672 = vsub.f32 1.0, %v1544
        %v1673 = vsub.f32 1.0, %v1545
        %v1674 = vsub.f32 1.0, %v1546
        %v1675 = vsub.f32 1.0, %v1547
        %v1676 = vsub.f32 1.0, %v1548
        %v1677 = vsub.f32 1.0, %v1549
        %v1678 = vsub.f32 1.0, %v1550
        %v1679 = vsub.f32 1.0, %v1551
        %v1680 = vsub.f32 1.0, %v1552
        %v1681 = vsub.f32 1.0, %v1553
        %v1682 = vsub.f32 1.0, %v1554
        %v1683 = vsub.f32 1.0, %v1555
        %v1684 = vsub.f32 1.0, %v1556
        %v1685 = vsub.f32 1.0, %v1557
        %v1686 = vsub.f32 1.0, %v1558
        %v1687 = vsub.f32 1.0, %v1559
        %v1688 = vsub.f32 1.0, %v1560
        %v1689 = vsub.f32 1.0, %v1561
        %v1690 = vsub.f32 1.0, %v1562
        %v1691 = vsub.f32 1.0, %v1563
        %v1692 = vsub.f32 1.0, %v1564
        %v1693 = vsub.f32 1.0, %v1565
        %v1694 = vsub.f32 1.0, %v1566
        %v1695 = vsub.f32 1.0, %v1567
        %v1696 = vsub.f32 1.0, %v1568
        %v1697 = vsub.f32 1.0, %v1569
        %v1698 = vsub.f32 1.0, %v1570
        %v1699 = vsub.f32 1.0, %v1571
        %v1700 = vsub.f32 1.0, %v1572
        %v1701 = vsub.f32 1.0, %v1573
        %v1702 = vsub.f32 1.0, %v1574
        %v1703 = vsub.f32 1.0, %v1575
        %v1704 = vsub.f32 1.0, %v1576
        %v1705 = vsub.f32 1.0, %v1577
        %v1706 = vsub.f32 1.0, %v1578
        %v1707 = vsub.f32 1.0, %v1579
        %v1708 = vsub.f32 1.0, %v1580
        %v1709 = vsub.f32 1.0, %v1581
        %v1710 = vsub.f32 1.0, %v1582
        %v1711 = vsub.f32 1.0, %v1583
        %v1712 = vsub.f32 1.0, %v1584
        %v1713 = vsub.f32 1.0, %v1585
        %v1714 = vsub.f32 1.0, %v1586
        %v1715 = vsub.f32 1.0, %v1587
        %v1716 = vsub.f32 1.0, %v1588
        %v1717 = vsub.f32 1.0, %v1589
        %v1718 = vsub.f32 1.0, %v1590
        %v1719 = vsub.f32 1.0, %v1591
        %v1720 = vsub.f32 1.0, %v1592
        %v1721 = vsub.f32 1.0, %v1593
        %v1722 = vsub.f32 1.0, %v1594
        %v1723 = vsub.f32 1.0, %v1595
        %v1724 = vsub.f32 1.0, %v1596
        %v1725 = vsub.f32 1.0, %v1597
        %v1726 = vsub.f32 1.0, %v1598
        %v1727 = vsub.f32 1.0, %v1599
        %v1728 = vsub.f32 1.0, %v1600
        %v1729 = vsub.f32 1.0, %v1601
        %v1730 = vsub.f32 1.0, %v1602
        %v1731 = vsub.f32 1.0, %v1603
        %v1732 = vsub.f32 1.0, %v1604
        %v1733 = vmax.f32 %v1605, 0.0
        %v1734 = vmax.f32 %v1606, 0.0
        %v1735 = vmax.f32 %v1607, 0.0
        %v1736 = vmax.f32 %v1608, 0.0
        %v1737 = vmax.f32 %v1609, 0.0
        %v1738 = vmax.f32 %v1610, 0.0
        %v1739 = vmax.f32 %v1611, 0.0
        %v1740 = vmax.f32 %v1612, 0.0
        %v1741 = vmax.f32 %v1613, 0.0
        %v1742 = vmax.f32 %v1614, 0.0
        %v1743 = vmax.f32 %v1615, 0.0
        %v1744 = vmax.f32 %v1616, 0.0
        %v1745 = vmax.f32 %v1617, 0.0
        %v1746 = vmax.f32 %v1618, 0.0
        %v1747 = vmax.f32 %v1619, 0.0
        %v1748 = vmax.f32 %v1620, 0.0
        %v1749 = vmax.f32 %v1621, 0.0
        %v1750 = vmax.f32 %v1622, 0.0
        %v1751 = vmax.f32 %v1623, 0.0
        %v1752 = vmax.f32 %v1624, 0.0
        %v1753 = vmax.f32 %v1625, 0.0
        %v1754 = vmax.f32 %v1626, 0.0
        %v1755 = vmax.f32 %v1627, 0.0
        %v1756 = vmax.f32 %v1628, 0.0
        %v1757 = vmax.f32 %v1629, 0.0
        %v1758 = vmax.f32 %v1630, 0.0
        %v1759 = vmax.f32 %v1631, 0.0
        %v1760 = vmax.f32 %v1632, 0.0
        %v1761 = vmax.f32 %v1633, 0.0
        %v1762 = vmax.f32 %v1634, 0.0
        %v1763 = vmax.f32 %v1635, 0.0
        %v1764 = vmax.f32 %v1636, 0.0
        %v1765 = vmax.f32 %v1637, 0.0
        %v1766 = vmax.f32 %v1638, 0.0
        %v1767 = vmax.f32 %v1639, 0.0
        %v1768 = vmax.f32 %v1640, 0.0
        %v1769 = vmax.f32 %v1641, 0.0
        %v1770 = vmax.f32 %v1642, 0.0
        %v1771 = vmax.f32 %v1643, 0.0
        %v1772 = vmax.f32 %v1644, 0.0
        %v1773 = vmax.f32 %v1645, 0.0
        %v1774 = vmax.f32 %v1646, 0.0
        %v1775 = vmax.f32 %v1647, 0.0
        %v1776 = vmax.f32 %v1648, 0.0
        %v1777 = vmax.f32 %v1649, 0.0
        %v1778 = vmax.f32 %v1650, 0.0
        %v1779 = vmax.f32 %v1651, 0.0
        %v1780 = vmax.f32 %v1652, 0.0
        %v1781 = vmax.f32 %v1653, 0.0
        %v1782 = vmax.f32 %v1654, 0.0
        %v1783 = vmax.f32 %v1655, 0.0
        %v1784 = vmax.f32 %v1656, 0.0
        %v1785 = vmax.f32 %v1657, 0.0
        %v1786 = vmax.f32 %v1658, 0.0
        %v1787 = vmax.f32 %v1659, 0.0
        %v1788 = vmax.f32 %v1660, 0.0
        %v1789 = vmax.f32 %v1661, 0.0
        %v1790 = vmax.f32 %v1662, 0.0
        %v1791 = vmax.f32 %v1663, 0.0
        %v1792 = vmax.f32 %v1664, 0.0
        %v1793 = vmax.f32 %v1665, 0.0
        %v1794 = vmax.f32 %v1666, 0.0
        %v1795 = vmax.f32 %v1667, 0.0
        %v1796 = vmax.f32 %v1668, 0.0
        %v1797 = vmax.f32 %v1669, 0.0
        %v1798 = vmax.f32 %v1670, 0.0
        %v1799 = vmax.f32 %v1671, 0.0
        %v1800 = vmax.f32 %v1672, 0.0
        %v1801 = vmax.f32 %v1673, 0.0
        %v1802 = vmax.f32 %v1674, 0.0
        %v1803 = vmax.f32 %v1675, 0.0
        %v1804 = vmax.f32 %v1676, 0.0
        %v1805 = vmax.f32 %v1677, 0.0
        %v1806 = vmax.f32 %v1678, 0.0
        %v1807 = vmax.f32 %v1679, 0.0
        %v1808 = vmax.f32 %v1680, 0.0
        %v1809 = vmax.f32 %v1681, 0.0
        %v1810 = vmax.f32 %v1682, 0.0
        %v1811 = vmax.f32 %v1683, 0.0
        %v1812 = vmax.f32 %v1684, 0.0
        %v1813 = vmax.f32 %v1685, 0.0
        %v1814 = vmax.f32 %v1686, 0.0
        %v1815 = vmax.f32 %v1687, 0.0
        %v1816 = vmax.f32 %v1688, 0.0
        %v1817 = vmax.f32 %v1689, 0.0
        %v1818 = vmax.f32 %v1690, 0.0
        %v1819 = vmax.f32 %v1691, 0.0
        %v1820 = vmax.f32 %v1692, 0.0
        %v1821 = vmax.f32 %v1693, 0.0
        %v1822 = vmax.f32 %v1694, 0.0
        %v1823 = vmax.f32 %v1695, 0.0
        %v1824 = vmax.f32 %v1696, 0.0
        %v1825 = vmax.f32 %v1697, 0.0
        %v1826 = vmax.f32 %v1698, 0.0
        %v1827 = vmax.f32 %v1699, 0.0
        %v1828 = vmax.f32 %v1700, 0.0
        %v1829 = vmax.f32 %v1701, 0.0
        %v1830 = vmax.f32 %v1702, 0.0
        %v1831 = vmax.f32 %v1703, 0.0
        %v1832 = vmax.f32 %v1704, 0.0
        %v1833 = vmax.f32 %v1705, 0.0
        %v1834 = vmax.f32 %v1706, 0.0
        %v1835 = vmax.f32 %v1707, 0.0
        %v1836 = vmax.f32 %v1708, 0.0
        %v1837 = vmax.f32 %v1709, 0.0
        %v1838 = vmax.f32 %v1710, 0.0
        %v1839 = vmax.f32 %v1711, 0.0
        %v1840 = vmax.f32 %v1712, 0.0
        %v1841 = vmax.f32 %v1713, 0.0
        %v1842 = vmax.f32 %v1714, 0.0
        %v1843 = vmax.f32 %v1715, 0.0
        %v1844 = vmax.f32 %v1716, 0.0
        %v1845 = vmax.f32 %v1717, 0.0
        %v1846 = vmax.f32 %v1718, 0.0
        %v1847 = vmax.f32 %v1719, 0.0
        %v1848 = vmax.f32 %v1720, 0.0
        %v1849 = vmax.f32 %v1721, 0.0
        %v1850 = vmax.f32 %v1722, 0.0
        %v1851 = vmax.f32 %v1723, 0.0
        %v1852 = vmax.f32 %v1724, 0.0
        %v1853 = vmax.f32 %v1725, 0.0
        %v1854 = vmax.f32 %v1726, 0.0
        %v1855 = vmax.f32 %v1727, 0.0
        %v1856 = vmax.f32 %v1728, 0.0
        %v1857 = vmax.f32 %v1729, 0.0
        %v1858 = vmax.f32 %v1730, 0.0
        %v1859 = vmax.f32 %v1731, 0.0
        %v1860 = vmax.f32 %v1732, 0.0
        %v1861 = vmul.f32 %v954, %v1733
        %v1862 = vmul.f32 %v955, %v1734
        %v1863 = vmul.f32 %v956, %v1735
        %v1864 = vmul.f32 %v957, %v1736
        %v1865 = vmul.f32 %v958, %v1737
        %v1866 = vmul.f32 %v959, %v1738
        %v1867 = vmul.f32 %v960, %v1739
        %v1868 = vmul.f32 %v961, %v1740
        %v1869 = vmul.f32 %v962, %v1741
        %v1870 = vmul.f32 %v963, %v1742
        %v1871 = vmul.f32 %v964, %v1743
        %v1872 = vmul.f32 %v965, %v1744
        %v1873 = vmul.f32 %v966, %v1745
        %v1874 = vmul.f32 %v967, %v1746
        %v1875 = vmul.f32 %v968, %v1747
        %v1876 = vmul.f32 %v969, %v1748
        %v1877 = vmul.f32 %v970, %v1749
        %v1878 = vmul.f32 %v971, %v1750
        %v1879 = vmul.f32 %v972, %v1751
        %v1880 = vmul.f32 %v973, %v1752
        %v1881 = vmul.f32 %v974, %v1753
        %v1882 = vmul.f32 %v975, %v1754
        %v1883 = vmul.f32 %v976, %v1755
        %v1884 = vmul.f32 %v977, %v1756
        %v1885 = vmul.f32 %v978, %v1757
        %v1886 = vmul.f32 %v979, %v1758
        %v1887 = vmul.f32 %v980, %v1759
        %v1888 = vmul.f32 %v981, %v1760
        %v1889 = vmul.f32 %v982, %v1761
        %v1890 = vmul.f32 %v983, %v1762
        %v1891 = vmul.f32 %v984, %v1763
        %v1892 = vmul.f32 %v985, %v1764
        %v1893 = vmul.f32 %v986, %v1765
        %v1894 = vmul.f32 %v987, %v1766
        %v1895 = vmul.f32 %v988, %v1767
        %v1896 = vmul.f32 %v989, %v1768
        %v1897 = vmul.f32 %v990, %v1769
        %v1898 = vmul.f32 %v991, %v1770
        %v1899 = vmul.f32 %v992, %v1771
        %v1900 = vmul.f32 %v993, %v1772
        %v1901 = vmul.f32 %v994, %v1773
        %v1902 = vmul.f32 %v995, %v1774
        %v1903 = vmul.f32 %v996, %v1775
        %v1904 = vmul.f32 %v997, %v1776
        %v1905 = vmul.f32 %v998, %v1777
        %v1906 = vmul.f32 %v999, %v1778
        %v1907 = vmul.f32 %v1000, %v1779
        %v1908 = vmul.f32 %v1001, %v1780
        %v1909 = vmul.f32 %v1002, %v1781
        %v1910 = vmul.f32 %v1003, %v1782
        %v1911 = vmul.f32 %v1004, %v1783
        %v1912 = vmul.f32 %v1005, %v1784
        %v1913 = vmul.f32 %v1006, %v1785
        %v1914 = vmul.f32 %v1007, %v1786
        %v1915 = vmul.f32 %v1008, %v1787
        %v1916 = vmul.f32 %v1009, %v1788
        %v1917 = vmul.f32 %v1010, %v1789
        %v1918 = vmul.f32 %v1011, %v1790
        %v1919 = vmul.f32 %v1012, %v1791
        %v1920 = vmul.f32 %v1013, %v1792
        %v1921 = vmul.f32 %v1014, %v1793
        %v1922 = vmul.f32 %v1015, %v1794
        %v1923 = vmul.f32 %v1016, %v1795
        %v1924 = vmul.f32 %v1017, %v1796
        %v1925 = vmul.f32 %v1018, %v1797
        %v1926 = vmul.f32 %v1019, %v1798
        %v1927 = vmul.f32 %v1020, %v1799
        %v1928 = vmul.f32 %v1021, %v1800
        %v1929 = vmul.f32 %v1022, %v1801
        %v1930 = vmul.f32 %v1023, %v1802
        %v1931 = vmul.f32 %v1024, %v1803
        %v1932 = vmul.f32 %v1025, %v1804
        %v1933 = vmul.f32 %v1026, %v1805
        %v1934 = vmul.f32 %v1027, %v1806
        %v1935 = vmul.f32 %v1028, %v1807
        %v1936 = vmul.f32 %v1029, %v1808
        %v1937 = vmul.f32 %v1030, %v1809
        %v1938 = vmul.f32 %v1031, %v1810
        %v1939 = vmul.f32 %v1032, %v1811
        %v1940 = vmul.f32 %v1033, %v1812
        %v1941 = vmul.f32 %v1034, %v1813
        %v1942 = vmul.f32 %v1035, %v1814
        %v1943 = vmul.f32 %v1036, %v1815
        %v1944 = vmul.f32 %v1037, %v1816
        %v1945 = vmul.f32 %v1038, %v1817
        %v1946 = vmul.f32 %v1039, %v1818
        %v1947 = vmul.f32 %v1040, %v1819
        %v1948 = vmul.f32 %v1041, %v1820
        %v1949 = vmul.f32 %v1042, %v1821
        %v1950 = vmul.f32 %v1043, %v1822
        %v1951 = vmul.f32 %v1044, %v1823
        %v1952 = vmul.f32 %v1045, %v1824
        %v1953 = vmul.f32 %v1046, %v1825
        %v1954 = vmul.f32 %v1047, %v1826
        %v1955 = vmul.f32 %v1048, %v1827
        %v1956 = vmul.f32 %v1049, %v1828
        %v1957 = vmul.f32 %v1050, %v1829
        %v1958 = vmul.f32 %v1051, %v1830
        %v1959 = vmul.f32 %v1052, %v1831
        %v1960 = vmul.f32 %v1053, %v1832
        %v1961 = vmul.f32 %v1054, %v1833
        %v1962 = vmul.f32 %v1055, %v1834
        %v1963 = vmul.f32 %v1056, %v1835
        %v1964 = vmul.f32 %v1057, %v1836
        %v1965 = vmul.f32 %v1058, %v1837
        %v1966 = vmul.f32 %v1059, %v1838
        %v1967 = vmul.f32 %v1060, %v1839
        %v1968 = vmul.f32 %v1061, %v1840
        %v1969 = vmul.f32 %v1062, %v1841
        %v1970 = vmul.f32 %v1063, %v1842
        %v1971 = vmul.f32 %v1064, %v1843
        %v1972 = vmul.f32 %v1065, %v1844
        %v1973 = vmul.f32 %v1066, %v1845
        %v1974 = vmul.f32 %v1067, %v1846
        %v1975 = vmul.f32 %v1068, %v1847
        %v1976 = vmul.f32 %v1069, %v1848
        %v1977 = vmul.f32 %v1070, %v1849
        %v1978 = vmul.f32 %v1071, %v1850
        %v1979 = vmul.f32 %v1072, %v1851
        %v1980 = vmul.f32 %v1073, %v1852
        %v1981 = vmul.f32 %v1074, %v1853
        %v1982 = vmul.f32 %v1075, %v1854
        %v1983 = vmul.f32 %v1076, %v1855
        %v1984 = vmul.f32 %v1077, %v1856
        %v1985 = vmul.f32 %v1078, %v1857
        %v1986 = vmul.f32 %v1079, %v1858
        %v1987 = vmul.f32 %v1080, %v1859
        %v1988 = vmul.f32 %v1081, %v1860
        %1989 = vset.pattern.permute.xlu0 3
        %1990 = vperm.xlu0 %1989, %v172
        %v1991 = vpop.permute.xlu0 %1990
        %1993 = vset.pattern.permute.xlu0 3
        %1994 = vperm.xlu0 %1993, %v173
        %v1995 = vpop.permute.xlu0 %1994
        %1997 = vset.pattern.permute.xlu0 3
        %1998 = vperm.xlu0 %1997, %v174
        %v1999 = vpop.permute.xlu0 %1998
        %2001 = vset.pattern.permute.xlu0 3
        %2002 = vperm.xlu0 %2001, %v175
        %v2003 = vpop.permute.xlu0 %2002
        %2005 = vset.pattern.permute.xlu0 3
        %2006 = vperm.xlu0 %2005, %v176
        %v2007 = vpop.permute.xlu0 %2006
        %2009 = vset.pattern.permute.xlu0 3
        %2010 = vperm.xlu0 %2009, %v177
        %v2011 = vpop.permute.xlu0 %2010
        %2013 = vset.pattern.permute.xlu0 3
        %2014 = vperm.xlu0 %2013, %v178
        %v2015 = vpop.permute.xlu0 %2014
        %2017 = vset.pattern.permute.xlu0 3
        %2018 = vperm.xlu0 %2017, %v179
        %v2019 = vpop.permute.xlu0 %2018
        %2021 = vset.pattern.permute.xlu0 3
        %2022 = vperm.xlu0 %2021, %v180
        %v2023 = vpop.permute.xlu0 %2022
        %2025 = vset.pattern.permute.xlu0 3
        %2026 = vperm.xlu0 %2025, %v181
        %v2027 = vpop.permute.xlu0 %2026
        %2029 = vset.pattern.permute.xlu0 3
        %2030 = vperm.xlu0 %2029, %v182
        %v2031 = vpop.permute.xlu0 %2030
        %2033 = vset.pattern.permute.xlu0 3
        %2034 = vperm.xlu0 %2033, %v183
        %v2035 = vpop.permute.xlu0 %2034
        %2037 = vset.pattern.permute.xlu0 3
        %2038 = vperm.xlu0 %2037, %v184
        %v2039 = vpop.permute.xlu0 %2038
        %2041 = vset.pattern.permute.xlu0 3
        %2042 = vperm.xlu0 %2041, %v185
        %v2043 = vpop.permute.xlu0 %2042
        %2045 = vset.pattern.permute.xlu0 3
        %2046 = vperm.xlu0 %2045, %v186
        %v2047 = vpop.permute.xlu0 %2046
        %2049 = vset.pattern.permute.xlu0 3
        %2050 = vperm.xlu0 %2049, %v187
        %v2051 = vpop.permute.xlu0 %2050
        %2053 = vset.pattern.permute.xlu0 3
        %2054 = vperm.xlu0 %2053, %v188
        %v2055 = vpop.permute.xlu0 %2054
        %2057 = vset.pattern.permute.xlu0 3
        %2058 = vperm.xlu0 %2057, %v189
        %v2059 = vpop.permute.xlu0 %2058
        %2061 = vset.pattern.permute.xlu0 3
        %2062 = vperm.xlu0 %2061, %v190
        %v2063 = vpop.permute.xlu0 %2062
        %2065 = vset.pattern.permute.xlu0 3
        %2066 = vperm.xlu0 %2065, %v191
        %v2067 = vpop.permute.xlu0 %2066
        %2069 = vset.pattern.permute.xlu0 3
        %2070 = vperm.xlu0 %2069, %v192
        %v2071 = vpop.permute.xlu0 %2070
        %2073 = vset.pattern.permute.xlu0 3
        %2074 = vperm.xlu0 %2073, %v193
        %v2075 = vpop.permute.xlu0 %2074
        %2077 = vset.pattern.permute.xlu0 3
        %2078 = vperm.xlu0 %2077, %v194
        %v2079 = vpop.permute.xlu0 %2078
        %2081 = vset.pattern.permute.xlu0 3
        %2082 = vperm.xlu0 %2081, %v195
        %v2083 = vpop.permute.xlu0 %2082
        %2085 = vset.pattern.permute.xlu0 3
        %2086 = vperm.xlu0 %2085, %v196
        %v2087 = vpop.permute.xlu0 %2086
        %2089 = vset.pattern.permute.xlu0 3
        %2090 = vperm.xlu0 %2089, %v197
        %v2091 = vpop.permute.xlu0 %2090
        %2093 = vset.pattern.permute.xlu0 3
        %2094 = vperm.xlu0 %2093, %v198
        %v2095 = vpop.permute.xlu0 %2094
        %2097 = vset.pattern.permute.xlu0 3
        %2098 = vperm.xlu0 %2097, %v199
        %v2099 = vpop.permute.xlu0 %2098
        %2101 = vset.pattern.permute.xlu0 3
        %2102 = vperm.xlu0 %2101, %v200
        %v2103 = vpop.permute.xlu0 %2102
        %2105 = vset.pattern.permute.xlu0 3
        %2106 = vperm.xlu0 %2105, %v201
        %v2107 = vpop.permute.xlu0 %2106
        %2109 = vset.pattern.permute.xlu0 3
        %2110 = vperm.xlu0 %2109, %v202
        %v2111 = vpop.permute.xlu0 %2110
        %2113 = vset.pattern.permute.xlu0 3
        %2114 = vperm.xlu0 %2113, %v203
        %v2115 = vpop.permute.xlu0 %2114
        %2117 = vset.pattern.permute.xlu0 3
        %2118 = vperm.xlu0 %2117, %v204
        %v2119 = vpop.permute.xlu0 %2118
        %2121 = vset.pattern.permute.xlu0 3
        %2122 = vperm.xlu0 %2121, %v205
        %v2123 = vpop.permute.xlu0 %2122
        %2125 = vset.pattern.permute.xlu0 3
        %2126 = vperm.xlu0 %2125, %v206
        %v2127 = vpop.permute.xlu0 %2126
        %2129 = vset.pattern.permute.xlu0 3
        %2130 = vperm.xlu0 %2129, %v207
        %v2131 = vpop.permute.xlu0 %2130
        %2133 = vset.pattern.permute.xlu0 3
        %2134 = vperm.xlu0 %2133, %v208
        %v2135 = vpop.permute.xlu0 %2134
        %2137 = vset.pattern.permute.xlu0 3
        %2138 = vperm.xlu0 %2137, %v209
        %v2139 = vpop.permute.xlu0 %2138
        %2141 = vset.pattern.permute.xlu0 3
        %2142 = vperm.xlu0 %2141, %v210
        %v2143 = vpop.permute.xlu0 %2142
        %2145 = vset.pattern.permute.xlu0 3
        %2146 = vperm.xlu0 %2145, %v211
        %v2147 = vpop.permute.xlu0 %2146
        %2149 = vset.pattern.permute.xlu0 3
        %2150 = vperm.xlu0 %2149, %v212
        %v2151 = vpop.permute.xlu0 %2150
        %2153 = vset.pattern.permute.xlu0 3
        %2154 = vperm.xlu0 %2153, %v213
        %v2155 = vpop.permute.xlu0 %2154
        %2157 = vset.pattern.permute.xlu0 3
        %2158 = vperm.xlu0 %2157, %v214
        %v2159 = vpop.permute.xlu0 %2158
        %2161 = vset.pattern.permute.xlu0 3
        %2162 = vperm.xlu0 %2161, %v215
        %v2163 = vpop.permute.xlu0 %2162
        %2165 = vset.pattern.permute.xlu0 3
        %2166 = vperm.xlu0 %2165, %v216
        %v2167 = vpop.permute.xlu0 %2166
        %2169 = vset.pattern.permute.xlu0 3
        %2170 = vperm.xlu0 %2169, %v217
        %v2171 = vpop.permute.xlu0 %2170
        %2173 = vset.pattern.permute.xlu0 3
        %2174 = vperm.xlu0 %2173, %v218
        %v2175 = vpop.permute.xlu0 %2174
        %2177 = vset.pattern.permute.xlu0 3
        %2178 = vperm.xlu0 %2177, %v219
        %v2179 = vpop.permute.xlu0 %2178
        %2181 = vset.pattern.permute.xlu0 3
        %2182 = vperm.xlu0 %2181, %v220
        %v2183 = vpop.permute.xlu0 %2182
        %2185 = vset.pattern.permute.xlu0 3
        %2186 = vperm.xlu0 %2185, %v221
        %v2187 = vpop.permute.xlu0 %2186
        %2189 = vset.pattern.permute.xlu0 3
        %2190 = vperm.xlu0 %2189, %v222
        %v2191 = vpop.permute.xlu0 %2190
        %2193 = vset.pattern.permute.xlu0 3
        %2194 = vperm.xlu0 %2193, %v223
        %v2195 = vpop.permute.xlu0 %2194
        %2197 = vset.pattern.permute.xlu0 3
        %2198 = vperm.xlu0 %2197, %v224
        %v2199 = vpop.permute.xlu0 %2198
        %2201 = vset.pattern.permute.xlu0 3
        %2202 = vperm.xlu0 %2201, %v225
        %v2203 = vpop.permute.xlu0 %2202
        %2205 = vset.pattern.permute.xlu0 3
        %2206 = vperm.xlu0 %2205, %v226
        %v2207 = vpop.permute.xlu0 %2206
        %2209 = vset.pattern.permute.xlu0 3
        %2210 = vperm.xlu0 %2209, %v227
        %v2211 = vpop.permute.xlu0 %2210
        %2213 = vset.pattern.permute.xlu0 3
        %2214 = vperm.xlu0 %2213, %v228
        %v2215 = vpop.permute.xlu0 %2214
        %2217 = vset.pattern.permute.xlu0 3
        %2218 = vperm.xlu0 %2217, %v229
        %v2219 = vpop.permute.xlu0 %2218
        %2221 = vset.pattern.permute.xlu0 3
        %2222 = vperm.xlu0 %2221, %v230
        %v2223 = vpop.permute.xlu0 %2222
        %2225 = vset.pattern.permute.xlu0 3
        %2226 = vperm.xlu0 %2225, %v231
        %v2227 = vpop.permute.xlu0 %2226
        %2229 = vset.pattern.permute.xlu0 3
        %2230 = vperm.xlu0 %2229, %v232
        %v2231 = vpop.permute.xlu0 %2230
        %2233 = vset.pattern.permute.xlu0 3
        %2234 = vperm.xlu0 %2233, %v233
        %v2235 = vpop.permute.xlu0 %2234
        %2237 = vset.pattern.permute.xlu0 3
        %2238 = vperm.xlu0 %2237, %v234
        %v2239 = vpop.permute.xlu0 %2238
        %2241 = vset.pattern.permute.xlu0 3
        %2242 = vperm.xlu0 %2241, %v235
        %v2243 = vpop.permute.xlu0 %2242
        %v2245 = vsub.f32 %v1991, %v563
        %v2246 = vsub.f32 %v1991, %v567
        %v2247 = vsub.f32 %v1995, %v563
        %v2248 = vsub.f32 %v1995, %v567
        %v2249 = vsub.f32 %v1999, %v563
        %v2250 = vsub.f32 %v1999, %v567
        %v2251 = vsub.f32 %v2003, %v563
        %v2252 = vsub.f32 %v2003, %v567
        %v2253 = vsub.f32 %v2007, %v563
        %v2254 = vsub.f32 %v2007, %v567
        %v2255 = vsub.f32 %v2011, %v563
        %v2256 = vsub.f32 %v2011, %v567
        %v2257 = vsub.f32 %v2015, %v563
        %v2258 = vsub.f32 %v2015, %v567
        %v2259 = vsub.f32 %v2019, %v563
        %v2260 = vsub.f32 %v2019, %v567
        %v2261 = vsub.f32 %v2023, %v563
        %v2262 = vsub.f32 %v2023, %v567
        %v2263 = vsub.f32 %v2027, %v563
        %v2264 = vsub.f32 %v2027, %v567
        %v2265 = vsub.f32 %v2031, %v563
        %v2266 = vsub.f32 %v2031, %v567
        %v2267 = vsub.f32 %v2035, %v563
        %v2268 = vsub.f32 %v2035, %v567
        %v2269 = vsub.f32 %v2039, %v563
        %v2270 = vsub.f32 %v2039, %v567
        %v2271 = vsub.f32 %v2043, %v563
        %v2272 = vsub.f32 %v2043, %v567
        %v2273 = vsub.f32 %v2047, %v563
        %v2274 = vsub.f32 %v2047, %v567
        %v2275 = vsub.f32 %v2051, %v563
        %v2276 = vsub.f32 %v2051, %v567
        %v2277 = vsub.f32 %v2055, %v563
        %v2278 = vsub.f32 %v2055, %v567
        %v2279 = vsub.f32 %v2059, %v563
        %v2280 = vsub.f32 %v2059, %v567
        %v2281 = vsub.f32 %v2063, %v563
        %v2282 = vsub.f32 %v2063, %v567
        %v2283 = vsub.f32 %v2067, %v563
        %v2284 = vsub.f32 %v2067, %v567
        %v2285 = vsub.f32 %v2071, %v563
        %v2286 = vsub.f32 %v2071, %v567
        %v2287 = vsub.f32 %v2075, %v563
        %v2288 = vsub.f32 %v2075, %v567
        %v2289 = vsub.f32 %v2079, %v563
        %v2290 = vsub.f32 %v2079, %v567
        %v2291 = vsub.f32 %v2083, %v563
        %v2292 = vsub.f32 %v2083, %v567
        %v2293 = vsub.f32 %v2087, %v563
        %v2294 = vsub.f32 %v2087, %v567
        %v2295 = vsub.f32 %v2091, %v563
        %v2296 = vsub.f32 %v2091, %v567
        %v2297 = vsub.f32 %v2095, %v563
        %v2298 = vsub.f32 %v2095, %v567
        %v2299 = vsub.f32 %v2099, %v563
        %v2300 = vsub.f32 %v2099, %v567
        %v2301 = vsub.f32 %v2103, %v563
        %v2302 = vsub.f32 %v2103, %v567
        %v2303 = vsub.f32 %v2107, %v563
        %v2304 = vsub.f32 %v2107, %v567
        %v2305 = vsub.f32 %v2111, %v563
        %v2306 = vsub.f32 %v2111, %v567
        %v2307 = vsub.f32 %v2115, %v563
        %v2308 = vsub.f32 %v2115, %v567
        %v2309 = vsub.f32 %v2119, %v563
        %v2310 = vsub.f32 %v2119, %v567
        %v2311 = vsub.f32 %v2123, %v563
        %v2312 = vsub.f32 %v2123, %v567
        %v2313 = vsub.f32 %v2127, %v563
        %v2314 = vsub.f32 %v2127, %v567
        %v2315 = vsub.f32 %v2131, %v563
        %v2316 = vsub.f32 %v2131, %v567
        %v2317 = vsub.f32 %v2135, %v563
        %v2318 = vsub.f32 %v2135, %v567
        %v2319 = vsub.f32 %v2139, %v563
        %v2320 = vsub.f32 %v2139, %v567
        %v2321 = vsub.f32 %v2143, %v563
        %v2322 = vsub.f32 %v2143, %v567
        %v2323 = vsub.f32 %v2147, %v563
        %v2324 = vsub.f32 %v2147, %v567
        %v2325 = vsub.f32 %v2151, %v563
        %v2326 = vsub.f32 %v2151, %v567
        %v2327 = vsub.f32 %v2155, %v563
        %v2328 = vsub.f32 %v2155, %v567
        %v2329 = vsub.f32 %v2159, %v563
        %v2330 = vsub.f32 %v2159, %v567
        %v2331 = vsub.f32 %v2163, %v563
        %v2332 = vsub.f32 %v2163, %v567
        %v2333 = vsub.f32 %v2167, %v563
        %v2334 = vsub.f32 %v2167, %v567
        %v2335 = vsub.f32 %v2171, %v563
        %v2336 = vsub.f32 %v2171, %v567
        %v2337 = vsub.f32 %v2175, %v563
        %v2338 = vsub.f32 %v2175, %v567
        %v2339 = vsub.f32 %v2179, %v563
        %v2340 = vsub.f32 %v2179, %v567
        %v2341 = vsub.f32 %v2183, %v563
        %v2342 = vsub.f32 %v2183, %v567
        %v2343 = vsub.f32 %v2187, %v563
        %v2344 = vsub.f32 %v2187, %v567
        %v2345 = vsub.f32 %v2191, %v563
        %v2346 = vsub.f32 %v2191, %v567
        %v2347 = vsub.f32 %v2195, %v563
        %v2348 = vsub.f32 %v2195, %v567
        %v2349 = vsub.f32 %v2199, %v563
        %v2350 = vsub.f32 %v2199, %v567
        %v2351 = vsub.f32 %v2203, %v563
        %v2352 = vsub.f32 %v2203, %v567
        %v2353 = vsub.f32 %v2207, %v563
        %v2354 = vsub.f32 %v2207, %v567
        %v2355 = vsub.f32 %v2211, %v563
        %v2356 = vsub.f32 %v2211, %v567
        %v2357 = vsub.f32 %v2215, %v563
        %v2358 = vsub.f32 %v2215, %v567
        %v2359 = vsub.f32 %v2219, %v563
        %v2360 = vsub.f32 %v2219, %v567
        %v2361 = vsub.f32 %v2223, %v563
        %v2362 = vsub.f32 %v2223, %v567
        %v2363 = vsub.f32 %v2227, %v563
        %v2364 = vsub.f32 %v2227, %v567
        %v2365 = vsub.f32 %v2231, %v563
        %v2366 = vsub.f32 %v2231, %v567
        %v2367 = vsub.f32 %v2235, %v563
        %v2368 = vsub.f32 %v2235, %v567
        %v2369 = vsub.f32 %v2239, %v563
        %v2370 = vsub.f32 %v2239, %v567
        %v2371 = vsub.f32 %v2243, %v563
        %v2372 = vsub.f32 %v2243, %v567
        %v2373 = vand.u32 2147483647, %v2245
        %v2374 = vand.u32 2147483647, %v2246
        %v2375 = vand.u32 2147483647, %v2247
        %v2376 = vand.u32 2147483647, %v2248
        %v2377 = vand.u32 2147483647, %v2249
        %v2378 = vand.u32 2147483647, %v2250
        %v2379 = vand.u32 2147483647, %v2251
        %v2380 = vand.u32 2147483647, %v2252
        %v2381 = vand.u32 2147483647, %v2253
        %v2382 = vand.u32 2147483647, %v2254
        %v2383 = vand.u32 2147483647, %v2255
        %v2384 = vand.u32 2147483647, %v2256
        %v2385 = vand.u32 2147483647, %v2257
        %v2386 = vand.u32 2147483647, %v2258
        %v2387 = vand.u32 2147483647, %v2259
        %v2388 = vand.u32 2147483647, %v2260
        %v2389 = vand.u32 2147483647, %v2261
        %v2390 = vand.u32 2147483647, %v2262
        %v2391 = vand.u32 2147483647, %v2263
        %v2392 = vand.u32 2147483647, %v2264
        %v2393 = vand.u32 2147483647, %v2265
        %v2394 = vand.u32 2147483647, %v2266
        %v2395 = vand.u32 2147483647, %v2267
        %v2396 = vand.u32 2147483647, %v2268
        %v2397 = vand.u32 2147483647, %v2269
        %v2398 = vand.u32 2147483647, %v2270
        %v2399 = vand.u32 2147483647, %v2271
        %v2400 = vand.u32 2147483647, %v2272
        %v2401 = vand.u32 2147483647, %v2273
        %v2402 = vand.u32 2147483647, %v2274
        %v2403 = vand.u32 2147483647, %v2275
        %v2404 = vand.u32 2147483647, %v2276
        %v2405 = vand.u32 2147483647, %v2277
        %v2406 = vand.u32 2147483647, %v2278
        %v2407 = vand.u32 2147483647, %v2279
        %v2408 = vand.u32 2147483647, %v2280
        %v2409 = vand.u32 2147483647, %v2281
        %v2410 = vand.u32 2147483647, %v2282
        %v2411 = vand.u32 2147483647, %v2283
        %v2412 = vand.u32 2147483647, %v2284
        %v2413 = vand.u32 2147483647, %v2285
        %v2414 = vand.u32 2147483647, %v2286
        %v2415 = vand.u32 2147483647, %v2287
        %v2416 = vand.u32 2147483647, %v2288
        %v2417 = vand.u32 2147483647, %v2289
        %v2418 = vand.u32 2147483647, %v2290
        %v2419 = vand.u32 2147483647, %v2291
        %v2420 = vand.u32 2147483647, %v2292
        %v2421 = vand.u32 2147483647, %v2293
        %v2422 = vand.u32 2147483647, %v2294
        %v2423 = vand.u32 2147483647, %v2295
        %v2424 = vand.u32 2147483647, %v2296
        %v2425 = vand.u32 2147483647, %v2297
        %v2426 = vand.u32 2147483647, %v2298
        %v2427 = vand.u32 2147483647, %v2299
        %v2428 = vand.u32 2147483647, %v2300
        %v2429 = vand.u32 2147483647, %v2301
        %v2430 = vand.u32 2147483647, %v2302
        %v2431 = vand.u32 2147483647, %v2303
        %v2432 = vand.u32 2147483647, %v2304
        %v2433 = vand.u32 2147483647, %v2305
        %v2434 = vand.u32 2147483647, %v2306
        %v2435 = vand.u32 2147483647, %v2307
        %v2436 = vand.u32 2147483647, %v2308
        %v2437 = vand.u32 2147483647, %v2309
        %v2438 = vand.u32 2147483647, %v2310
        %v2439 = vand.u32 2147483647, %v2311
        %v2440 = vand.u32 2147483647, %v2312
        %v2441 = vand.u32 2147483647, %v2313
        %v2442 = vand.u32 2147483647, %v2314
        %v2443 = vand.u32 2147483647, %v2315
        %v2444 = vand.u32 2147483647, %v2316
        %v2445 = vand.u32 2147483647, %v2317
        %v2446 = vand.u32 2147483647, %v2318
        %v2447 = vand.u32 2147483647, %v2319
        %v2448 = vand.u32 2147483647, %v2320
        %v2449 = vand.u32 2147483647, %v2321
        %v2450 = vand.u32 2147483647, %v2322
        %v2451 = vand.u32 2147483647, %v2323
        %v2452 = vand.u32 2147483647, %v2324
        %v2453 = vand.u32 2147483647, %v2325
        %v2454 = vand.u32 2147483647, %v2326
        %v2455 = vand.u32 2147483647, %v2327
        %v2456 = vand.u32 2147483647, %v2328
        %v2457 = vand.u32 2147483647, %v2329
        %v2458 = vand.u32 2147483647, %v2330
        %v2459 = vand.u32 2147483647, %v2331
        %v2460 = vand.u32 2147483647, %v2332
        %v2461 = vand.u32 2147483647, %v2333
        %v2462 = vand.u32 2147483647, %v2334
        %v2463 = vand.u32 2147483647, %v2335
        %v2464 = vand.u32 2147483647, %v2336
        %v2465 = vand.u32 2147483647, %v2337
        %v2466 = vand.u32 2147483647, %v2338
        %v2467 = vand.u32 2147483647, %v2339
        %v2468 = vand.u32 2147483647, %v2340
        %v2469 = vand.u32 2147483647, %v2341
        %v2470 = vand.u32 2147483647, %v2342
        %v2471 = vand.u32 2147483647, %v2343
        %v2472 = vand.u32 2147483647, %v2344
        %v2473 = vand.u32 2147483647, %v2345
        %v2474 = vand.u32 2147483647, %v2346
        %v2475 = vand.u32 2147483647, %v2347
        %v2476 = vand.u32 2147483647, %v2348
        %v2477 = vand.u32 2147483647, %v2349
        %v2478 = vand.u32 2147483647, %v2350
        %v2479 = vand.u32 2147483647, %v2351
        %v2480 = vand.u32 2147483647, %v2352
        %v2481 = vand.u32 2147483647, %v2353
        %v2482 = vand.u32 2147483647, %v2354
        %v2483 = vand.u32 2147483647, %v2355
        %v2484 = vand.u32 2147483647, %v2356
        %v2485 = vand.u32 2147483647, %v2357
        %v2486 = vand.u32 2147483647, %v2358
        %v2487 = vand.u32 2147483647, %v2359
        %v2488 = vand.u32 2147483647, %v2360
        %v2489 = vand.u32 2147483647, %v2361
        %v2490 = vand.u32 2147483647, %v2362
        %v2491 = vand.u32 2147483647, %v2363
        %v2492 = vand.u32 2147483647, %v2364
        %v2493 = vand.u32 2147483647, %v2365
        %v2494 = vand.u32 2147483647, %v2366
        %v2495 = vand.u32 2147483647, %v2367
        %v2496 = vand.u32 2147483647, %v2368
        %v2497 = vand.u32 2147483647, %v2369
        %v2498 = vand.u32 2147483647, %v2370
        %v2499 = vand.u32 2147483647, %v2371
        %v2500 = vand.u32 2147483647, %v2372
        %v2501 = vsub.f32 1.0, %v2373
        %v2502 = vsub.f32 1.0, %v2374
        %v2503 = vsub.f32 1.0, %v2375
        %v2504 = vsub.f32 1.0, %v2376
        %v2505 = vsub.f32 1.0, %v2377
        %v2506 = vsub.f32 1.0, %v2378
        %v2507 = vsub.f32 1.0, %v2379
        %v2508 = vsub.f32 1.0, %v2380
        %v2509 = vsub.f32 1.0, %v2381
        %v2510 = vsub.f32 1.0, %v2382
        %v2511 = vsub.f32 1.0, %v2383
        %v2512 = vsub.f32 1.0, %v2384
        %v2513 = vsub.f32 1.0, %v2385
        %v2514 = vsub.f32 1.0, %v2386
        %v2515 = vsub.f32 1.0, %v2387
        %v2516 = vsub.f32 1.0, %v2388
        %v2517 = vsub.f32 1.0, %v2389
        %v2518 = vsub.f32 1.0, %v2390
        %v2519 = vsub.f32 1.0, %v2391
        %v2520 = vsub.f32 1.0, %v2392
        %v2521 = vsub.f32 1.0, %v2393
        %v2522 = vsub.f32 1.0, %v2394
        %v2523 = vsub.f32 1.0, %v2395
        %v2524 = vsub.f32 1.0, %v2396
        %v2525 = vsub.f32 1.0, %v2397
        %v2526 = vsub.f32 1.0, %v2398
        %v2527 = vsub.f32 1.0, %v2399
        %v2528 = vsub.f32 1.0, %v2400
        %v2529 = vsub.f32 1.0, %v2401
        %v2530 = vsub.f32 1.0, %v2402
        %v2531 = vsub.f32 1.0, %v2403
        %v2532 = vsub.f32 1.0, %v2404
        %v2533 = vsub.f32 1.0, %v2405
        %v2534 = vsub.f32 1.0, %v2406
        %v2535 = vsub.f32 1.0, %v2407
        %v2536 = vsub.f32 1.0, %v2408
        %v2537 = vsub.f32 1.0, %v2409
        %v2538 = vsub.f32 1.0, %v2410
        %v2539 = vsub.f32 1.0, %v2411
        %v2540 = vsub.f32 1.0, %v2412
        %v2541 = vsub.f32 1.0, %v2413
        %v2542 = vsub.f32 1.0, %v2414
        %v2543 = vsub.f32 1.0, %v2415
        %v2544 = vsub.f32 1.0, %v2416
        %v2545 = vsub.f32 1.0, %v2417
        %v2546 = vsub.f32 1.0, %v2418
        %v2547 = vsub.f32 1.0, %v2419
        %v2548 = vsub.f32 1.0, %v2420
        %v2549 = vsub.f32 1.0, %v2421
        %v2550 = vsub.f32 1.0, %v2422
        %v2551 = vsub.f32 1.0, %v2423
        %v2552 = vsub.f32 1.0, %v2424
        %v2553 = vsub.f32 1.0, %v2425
        %v2554 = vsub.f32 1.0, %v2426
        %v2555 = vsub.f32 1.0, %v2427
        %v2556 = vsub.f32 1.0, %v2428
        %v2557 = vsub.f32 1.0, %v2429
        %v2558 = vsub.f32 1.0, %v2430
        %v2559 = vsub.f32 1.0, %v2431
        %v2560 = vsub.f32 1.0, %v2432
        %v2561 = vsub.f32 1.0, %v2433
        %v2562 = vsub.f32 1.0, %v2434
        %v2563 = vsub.f32 1.0, %v2435
        %v2564 = vsub.f32 1.0, %v2436
        %v2565 = vsub.f32 1.0, %v2437
        %v2566 = vsub.f32 1.0, %v2438
        %v2567 = vsub.f32 1.0, %v2439
        %v2568 = vsub.f32 1.0, %v2440
        %v2569 = vsub.f32 1.0, %v2441
        %v2570 = vsub.f32 1.0, %v2442
        %v2571 = vsub.f32 1.0, %v2443
        %v2572 = vsub.f32 1.0, %v2444
        %v2573 = vsub.f32 1.0, %v2445
        %v2574 = vsub.f32 1.0, %v2446
        %v2575 = vsub.f32 1.0, %v2447
        %v2576 = vsub.f32 1.0, %v2448
        %v2577 = vsub.f32 1.0, %v2449
        %v2578 = vsub.f32 1.0, %v2450
        %v2579 = vsub.f32 1.0, %v2451
        %v2580 = vsub.f32 1.0, %v2452
        %v2581 = vsub.f32 1.0, %v2453
        %v2582 = vsub.f32 1.0, %v2454
        %v2583 = vsub.f32 1.0, %v2455
        %v2584 = vsub.f32 1.0, %v2456
        %v2585 = vsub.f32 1.0, %v2457
        %v2586 = vsub.f32 1.0, %v2458
        %v2587 = vsub.f32 1.0, %v2459
        %v2588 = vsub.f32 1.0, %v2460
        %v2589 = vsub.f32 1.0, %v2461
        %v2590 = vsub.f32 1.0, %v2462
        %v2591 = vsub.f32 1.0, %v2463
        %v2592 = vsub.f32 1.0, %v2464
        %v2593 = vsub.f32 1.0, %v2465
        %v2594 = vsub.f32 1.0, %v2466
        %v2595 = vsub.f32 1.0, %v2467
        %v2596 = vsub.f32 1.0, %v2468
        %v2597 = vsub.f32 1.0, %v2469
        %v2598 = vsub.f32 1.0, %v2470
        %v2599 = vsub.f32 1.0, %v2471
        %v2600 = vsub.f32 1.0, %v2472
        %v2601 = vsub.f32 1.0, %v2473
        %v2602 = vsub.f32 1.0, %v2474
        %v2603 = vsub.f32 1.0, %v2475
        %v2604 = vsub.f32 1.0, %v2476
        %v2605 = vsub.f32 1.0, %v2477
        %v2606 = vsub.f32 1.0, %v2478
        %v2607 = vsub.f32 1.0, %v2479
        %v2608 = vsub.f32 1.0, %v2480
        %v2609 = vsub.f32 1.0, %v2481
        %v2610 = vsub.f32 1.0, %v2482
        %v2611 = vsub.f32 1.0, %v2483
        %v2612 = vsub.f32 1.0, %v2484
        %v2613 = vsub.f32 1.0, %v2485
        %v2614 = vsub.f32 1.0, %v2486
        %v2615 = vsub.f32 1.0, %v2487
        %v2616 = vsub.f32 1.0, %v2488
        %v2617 = vsub.f32 1.0, %v2489
        %v2618 = vsub.f32 1.0, %v2490
        %v2619 = vsub.f32 1.0, %v2491
        %v2620 = vsub.f32 1.0, %v2492
        %v2621 = vsub.f32 1.0, %v2493
        %v2622 = vsub.f32 1.0, %v2494
        %v2623 = vsub.f32 1.0, %v2495
        %v2624 = vsub.f32 1.0, %v2496
        %v2625 = vsub.f32 1.0, %v2497
        %v2626 = vsub.f32 1.0, %v2498
        %v2627 = vsub.f32 1.0, %v2499
        %v2628 = vsub.f32 1.0, %v2500
        %v2629 = vmax.f32 %v2501, 0.0
        %v2630 = vmax.f32 %v2502, 0.0
        %v2631 = vmax.f32 %v2503, 0.0
        %v2632 = vmax.f32 %v2504, 0.0
        %v2633 = vmax.f32 %v2505, 0.0
        %v2634 = vmax.f32 %v2506, 0.0
        %v2635 = vmax.f32 %v2507, 0.0
        %v2636 = vmax.f32 %v2508, 0.0
        %v2637 = vmax.f32 %v2509, 0.0
        %v2638 = vmax.f32 %v2510, 0.0
        %v2639 = vmax.f32 %v2511, 0.0
        %v2640 = vmax.f32 %v2512, 0.0
        %v2641 = vmax.f32 %v2513, 0.0
        %v2642 = vmax.f32 %v2514, 0.0
        %v2643 = vmax.f32 %v2515, 0.0
        %v2644 = vmax.f32 %v2516, 0.0
        %v2645 = vmax.f32 %v2517, 0.0
        %v2646 = vmax.f32 %v2518, 0.0
        %v2647 = vmax.f32 %v2519, 0.0
        %v2648 = vmax.f32 %v2520, 0.0
        %v2649 = vmax.f32 %v2521, 0.0
        %v2650 = vmax.f32 %v2522, 0.0
        %v2651 = vmax.f32 %v2523, 0.0
        %v2652 = vmax.f32 %v2524, 0.0
        %v2653 = vmax.f32 %v2525, 0.0
        %v2654 = vmax.f32 %v2526, 0.0
        %v2655 = vmax.f32 %v2527, 0.0
        %v2656 = vmax.f32 %v2528, 0.0
        %v2657 = vmax.f32 %v2529, 0.0
        %v2658 = vmax.f32 %v2530, 0.0
        %v2659 = vmax.f32 %v2531, 0.0
        %v2660 = vmax.f32 %v2532, 0.0
        %v2661 = vmax.f32 %v2533, 0.0
        %v2662 = vmax.f32 %v2534, 0.0
        %v2663 = vmax.f32 %v2535, 0.0
        %v2664 = vmax.f32 %v2536, 0.0
        %v2665 = vmax.f32 %v2537, 0.0
        %v2666 = vmax.f32 %v2538, 0.0
        %v2667 = vmax.f32 %v2539, 0.0
        %v2668 = vmax.f32 %v2540, 0.0
        %v2669 = vmax.f32 %v2541, 0.0
        %v2670 = vmax.f32 %v2542, 0.0
        %v2671 = vmax.f32 %v2543, 0.0
        %v2672 = vmax.f32 %v2544, 0.0
        %v2673 = vmax.f32 %v2545, 0.0
        %v2674 = vmax.f32 %v2546, 0.0
        %v2675 = vmax.f32 %v2547, 0.0
        %v2676 = vmax.f32 %v2548, 0.0
        %v2677 = vmax.f32 %v2549, 0.0
        %v2678 = vmax.f32 %v2550, 0.0
        %v2679 = vmax.f32 %v2551, 0.0
        %v2680 = vmax.f32 %v2552, 0.0
        %v2681 = vmax.f32 %v2553, 0.0
        %v2682 = vmax.f32 %v2554, 0.0
        %v2683 = vmax.f32 %v2555, 0.0
        %v2684 = vmax.f32 %v2556, 0.0
        %v2685 = vmax.f32 %v2557, 0.0
        %v2686 = vmax.f32 %v2558, 0.0
        %v2687 = vmax.f32 %v2559, 0.0
        %v2688 = vmax.f32 %v2560, 0.0
        %v2689 = vmax.f32 %v2561, 0.0
        %v2690 = vmax.f32 %v2562, 0.0
        %v2691 = vmax.f32 %v2563, 0.0
        %v2692 = vmax.f32 %v2564, 0.0
        %v2693 = vmax.f32 %v2565, 0.0
        %v2694 = vmax.f32 %v2566, 0.0
        %v2695 = vmax.f32 %v2567, 0.0
        %v2696 = vmax.f32 %v2568, 0.0
        %v2697 = vmax.f32 %v2569, 0.0
        %v2698 = vmax.f32 %v2570, 0.0
        %v2699 = vmax.f32 %v2571, 0.0
        %v2700 = vmax.f32 %v2572, 0.0
        %v2701 = vmax.f32 %v2573, 0.0
        %v2702 = vmax.f32 %v2574, 0.0
        %v2703 = vmax.f32 %v2575, 0.0
        %v2704 = vmax.f32 %v2576, 0.0
        %v2705 = vmax.f32 %v2577, 0.0
        %v2706 = vmax.f32 %v2578, 0.0
        %v2707 = vmax.f32 %v2579, 0.0
        %v2708 = vmax.f32 %v2580, 0.0
        %v2709 = vmax.f32 %v2581, 0.0
        %v2710 = vmax.f32 %v2582, 0.0
        %v2711 = vmax.f32 %v2583, 0.0
        %v2712 = vmax.f32 %v2584, 0.0
        %v2713 = vmax.f32 %v2585, 0.0
        %v2714 = vmax.f32 %v2586, 0.0
        %v2715 = vmax.f32 %v2587, 0.0
        %v2716 = vmax.f32 %v2588, 0.0
        %v2717 = vmax.f32 %v2589, 0.0
        %v2718 = vmax.f32 %v2590, 0.0
        %v2719 = vmax.f32 %v2591, 0.0
        %v2720 = vmax.f32 %v2592, 0.0
        %v2721 = vmax.f32 %v2593, 0.0
        %v2722 = vmax.f32 %v2594, 0.0
        %v2723 = vmax.f32 %v2595, 0.0
        %v2724 = vmax.f32 %v2596, 0.0
        %v2725 = vmax.f32 %v2597, 0.0
        %v2726 = vmax.f32 %v2598, 0.0
        %v2727 = vmax.f32 %v2599, 0.0
        %v2728 = vmax.f32 %v2600, 0.0
        %v2729 = vmax.f32 %v2601, 0.0
        %v2730 = vmax.f32 %v2602, 0.0
        %v2731 = vmax.f32 %v2603, 0.0
        %v2732 = vmax.f32 %v2604, 0.0
        %v2733 = vmax.f32 %v2605, 0.0
        %v2734 = vmax.f32 %v2606, 0.0
        %v2735 = vmax.f32 %v2607, 0.0
        %v2736 = vmax.f32 %v2608, 0.0
        %v2737 = vmax.f32 %v2609, 0.0
        %v2738 = vmax.f32 %v2610, 0.0
        %v2739 = vmax.f32 %v2611, 0.0
        %v2740 = vmax.f32 %v2612, 0.0
        %v2741 = vmax.f32 %v2613, 0.0
        %v2742 = vmax.f32 %v2614, 0.0
        %v2743 = vmax.f32 %v2615, 0.0
        %v2744 = vmax.f32 %v2616, 0.0
        %v2745 = vmax.f32 %v2617, 0.0
        %v2746 = vmax.f32 %v2618, 0.0
        %v2747 = vmax.f32 %v2619, 0.0
        %v2748 = vmax.f32 %v2620, 0.0
        %v2749 = vmax.f32 %v2621, 0.0
        %v2750 = vmax.f32 %v2622, 0.0
        %v2751 = vmax.f32 %v2623, 0.0
        %v2752 = vmax.f32 %v2624, 0.0
        %v2753 = vmax.f32 %v2625, 0.0
        %v2754 = vmax.f32 %v2626, 0.0
        %v2755 = vmax.f32 %v2627, 0.0
        %v2756 = vmax.f32 %v2628, 0.0
        %2757 = vset.pattern.permute.xlu0 2
        %2758 = vperm.xlu0 %2757, %v172
        %v2759 = vpop.permute.xlu0 %2758
        %2761 = vset.pattern.permute.xlu0 2
        %2762 = vperm.xlu0 %2761, %v173
        %v2763 = vpop.permute.xlu0 %2762
        %2765 = vset.pattern.permute.xlu0 2
        %2766 = vperm.xlu0 %2765, %v174
        %v2767 = vpop.permute.xlu0 %2766
        %2769 = vset.pattern.permute.xlu0 2
        %2770 = vperm.xlu0 %2769, %v175
        %v2771 = vpop.permute.xlu0 %2770
        %2773 = vset.pattern.permute.xlu0 2
        %2774 = vperm.xlu0 %2773, %v176
        %v2775 = vpop.permute.xlu0 %2774
        %2777 = vset.pattern.permute.xlu0 2
        %2778 = vperm.xlu0 %2777, %v177
        %v2779 = vpop.permute.xlu0 %2778
        %2781 = vset.pattern.permute.xlu0 2
        %2782 = vperm.xlu0 %2781, %v178
        %v2783 = vpop.permute.xlu0 %2782
        %2785 = vset.pattern.permute.xlu0 2
        %2786 = vperm.xlu0 %2785, %v179
        %v2787 = vpop.permute.xlu0 %2786
        %2789 = vset.pattern.permute.xlu0 2
        %2790 = vperm.xlu0 %2789, %v180
        %v2791 = vpop.permute.xlu0 %2790
        %2793 = vset.pattern.permute.xlu0 2
        %2794 = vperm.xlu0 %2793, %v181
        %v2795 = vpop.permute.xlu0 %2794
        %2797 = vset.pattern.permute.xlu0 2
        %2798 = vperm.xlu0 %2797, %v182
        %v2799 = vpop.permute.xlu0 %2798
        %2801 = vset.pattern.permute.xlu0 2
        %2802 = vperm.xlu0 %2801, %v183
        %v2803 = vpop.permute.xlu0 %2802
        %2805 = vset.pattern.permute.xlu0 2
        %2806 = vperm.xlu0 %2805, %v184
        %v2807 = vpop.permute.xlu0 %2806
        %2809 = vset.pattern.permute.xlu0 2
        %2810 = vperm.xlu0 %2809, %v185
        %v2811 = vpop.permute.xlu0 %2810
        %2813 = vset.pattern.permute.xlu0 2
        %2814 = vperm.xlu0 %2813, %v186
        %v2815 = vpop.permute.xlu0 %2814
        %2817 = vset.pattern.permute.xlu0 2
        %2818 = vperm.xlu0 %2817, %v187
        %v2819 = vpop.permute.xlu0 %2818
        %2821 = vset.pattern.permute.xlu0 2
        %2822 = vperm.xlu0 %2821, %v188
        %v2823 = vpop.permute.xlu0 %2822
        %2825 = vset.pattern.permute.xlu0 2
        %2826 = vperm.xlu0 %2825, %v189
        %v2827 = vpop.permute.xlu0 %2826
        %2829 = vset.pattern.permute.xlu0 2
        %2830 = vperm.xlu0 %2829, %v190
        %v2831 = vpop.permute.xlu0 %2830
        %2833 = vset.pattern.permute.xlu0 2
        %2834 = vperm.xlu0 %2833, %v191
        %v2835 = vpop.permute.xlu0 %2834
        %2837 = vset.pattern.permute.xlu0 2
        %2838 = vperm.xlu0 %2837, %v192
        %v2839 = vpop.permute.xlu0 %2838
        %2841 = vset.pattern.permute.xlu0 2
        %2842 = vperm.xlu0 %2841, %v193
        %v2843 = vpop.permute.xlu0 %2842
        %2845 = vset.pattern.permute.xlu0 2
        %2846 = vperm.xlu0 %2845, %v194
        %v2847 = vpop.permute.xlu0 %2846
        %2849 = vset.pattern.permute.xlu0 2
        %2850 = vperm.xlu0 %2849, %v195
        %v2851 = vpop.permute.xlu0 %2850
        %2853 = vset.pattern.permute.xlu0 2
        %2854 = vperm.xlu0 %2853, %v196
        %v2855 = vpop.permute.xlu0 %2854
        %2857 = vset.pattern.permute.xlu0 2
        %2858 = vperm.xlu0 %2857, %v197
        %v2859 = vpop.permute.xlu0 %2858
        %2861 = vset.pattern.permute.xlu0 2
        %2862 = vperm.xlu0 %2861, %v198
        %v2863 = vpop.permute.xlu0 %2862
        %2865 = vset.pattern.permute.xlu0 2
        %2866 = vperm.xlu0 %2865, %v199
        %v2867 = vpop.permute.xlu0 %2866
        %2869 = vset.pattern.permute.xlu0 2
        %2870 = vperm.xlu0 %2869, %v200
        %v2871 = vpop.permute.xlu0 %2870
        %2873 = vset.pattern.permute.xlu0 2
        %2874 = vperm.xlu0 %2873, %v201
        %v2875 = vpop.permute.xlu0 %2874
        %2877 = vset.pattern.permute.xlu0 2
        %2878 = vperm.xlu0 %2877, %v202
        %v2879 = vpop.permute.xlu0 %2878
        %2881 = vset.pattern.permute.xlu0 2
        %2882 = vperm.xlu0 %2881, %v203
        %v2883 = vpop.permute.xlu0 %2882
        %2885 = vset.pattern.permute.xlu0 2
        %2886 = vperm.xlu0 %2885, %v204
        %v2887 = vpop.permute.xlu0 %2886
        %2889 = vset.pattern.permute.xlu0 2
        %2890 = vperm.xlu0 %2889, %v205
        %v2891 = vpop.permute.xlu0 %2890
        %2893 = vset.pattern.permute.xlu0 2
        %2894 = vperm.xlu0 %2893, %v206
        %v2895 = vpop.permute.xlu0 %2894
        %2897 = vset.pattern.permute.xlu0 2
        %2898 = vperm.xlu0 %2897, %v207
        %v2899 = vpop.permute.xlu0 %2898
        %2901 = vset.pattern.permute.xlu0 2
        %2902 = vperm.xlu0 %2901, %v208
        %v2903 = vpop.permute.xlu0 %2902
        %2905 = vset.pattern.permute.xlu0 2
        %2906 = vperm.xlu0 %2905, %v209
        %v2907 = vpop.permute.xlu0 %2906
        %2909 = vset.pattern.permute.xlu0 2
        %2910 = vperm.xlu0 %2909, %v210
        %v2911 = vpop.permute.xlu0 %2910
        %2913 = vset.pattern.permute.xlu0 2
        %2914 = vperm.xlu0 %2913, %v211
        %v2915 = vpop.permute.xlu0 %2914
        %2917 = vset.pattern.permute.xlu0 2
        %2918 = vperm.xlu0 %2917, %v212
        %v2919 = vpop.permute.xlu0 %2918
        %2921 = vset.pattern.permute.xlu0 2
        %2922 = vperm.xlu0 %2921, %v213
        %v2923 = vpop.permute.xlu0 %2922
        %2925 = vset.pattern.permute.xlu0 2
        %2926 = vperm.xlu0 %2925, %v214
        %v2927 = vpop.permute.xlu0 %2926
        %2929 = vset.pattern.permute.xlu0 2
        %2930 = vperm.xlu0 %2929, %v215
        %v2931 = vpop.permute.xlu0 %2930
        %2933 = vset.pattern.permute.xlu0 2
        %2934 = vperm.xlu0 %2933, %v216
        %v2935 = vpop.permute.xlu0 %2934
        %2937 = vset.pattern.permute.xlu0 2
        %2938 = vperm.xlu0 %2937, %v217
        %v2939 = vpop.permute.xlu0 %2938
        %2941 = vset.pattern.permute.xlu0 2
        %2942 = vperm.xlu0 %2941, %v218
        %v2943 = vpop.permute.xlu0 %2942
        %2945 = vset.pattern.permute.xlu0 2
        %2946 = vperm.xlu0 %2945, %v219
        %v2947 = vpop.permute.xlu0 %2946
        %2949 = vset.pattern.permute.xlu0 2
        %2950 = vperm.xlu0 %2949, %v220
        %v2951 = vpop.permute.xlu0 %2950
        %2953 = vset.pattern.permute.xlu0 2
        %2954 = vperm.xlu0 %2953, %v221
        %v2955 = vpop.permute.xlu0 %2954
        %2957 = vset.pattern.permute.xlu0 2
        %2958 = vperm.xlu0 %2957, %v222
        %v2959 = vpop.permute.xlu0 %2958
        %2961 = vset.pattern.permute.xlu0 2
        %2962 = vperm.xlu0 %2961, %v223
        %v2963 = vpop.permute.xlu0 %2962
        %2965 = vset.pattern.permute.xlu0 2
        %2966 = vperm.xlu0 %2965, %v224
        %v2967 = vpop.permute.xlu0 %2966
        %2969 = vset.pattern.permute.xlu0 2
        %2970 = vperm.xlu0 %2969, %v225
        %v2971 = vpop.permute.xlu0 %2970
        %2973 = vset.pattern.permute.xlu0 2
        %2974 = vperm.xlu0 %2973, %v226
        %v2975 = vpop.permute.xlu0 %2974
        %2977 = vset.pattern.permute.xlu0 2
        %2978 = vperm.xlu0 %2977, %v227
        %v2979 = vpop.permute.xlu0 %2978
        %2981 = vset.pattern.permute.xlu0 2
        %2982 = vperm.xlu0 %2981, %v228
        %v2983 = vpop.permute.xlu0 %2982
        %2985 = vset.pattern.permute.xlu0 2
        %2986 = vperm.xlu0 %2985, %v229
        %v2987 = vpop.permute.xlu0 %2986
        %2989 = vset.pattern.permute.xlu0 2
        %2990 = vperm.xlu0 %2989, %v230
        %v2991 = vpop.permute.xlu0 %2990
        %2993 = vset.pattern.permute.xlu0 2
        %2994 = vperm.xlu0 %2993, %v231
        %v2995 = vpop.permute.xlu0 %2994
        %2997 = vset.pattern.permute.xlu0 2
        %2998 = vperm.xlu0 %2997, %v232
        %v2999 = vpop.permute.xlu0 %2998
        %3001 = vset.pattern.permute.xlu0 2
        %3002 = vperm.xlu0 %3001, %v233
        %v3003 = vpop.permute.xlu0 %3002
        %3005 = vset.pattern.permute.xlu0 2
        %3006 = vperm.xlu0 %3005, %v234
        %v3007 = vpop.permute.xlu0 %3006
        %3009 = vset.pattern.permute.xlu0 2
        %3010 = vperm.xlu0 %3009, %v235
        %v3011 = vpop.permute.xlu0 %3010
        %v3013 = vsub.f32 %v2759, %v1342
        %v3014 = vsub.f32 %v2759, %v1346
        %v3015 = vsub.f32 %v2763, %v1342
        %v3016 = vsub.f32 %v2763, %v1346
        %v3017 = vsub.f32 %v2767, %v1342
        %v3018 = vsub.f32 %v2767, %v1346
        %v3019 = vsub.f32 %v2771, %v1342
        %v3020 = vsub.f32 %v2771, %v1346
        %v3021 = vsub.f32 %v2775, %v1342
        %v3022 = vsub.f32 %v2775, %v1346
        %v3023 = vsub.f32 %v2779, %v1342
        %v3024 = vsub.f32 %v2779, %v1346
        %v3025 = vsub.f32 %v2783, %v1342
        %v3026 = vsub.f32 %v2783, %v1346
        %v3027 = vsub.f32 %v2787, %v1342
        %v3028 = vsub.f32 %v2787, %v1346
        %v3029 = vsub.f32 %v2791, %v1342
        %v3030 = vsub.f32 %v2791, %v1346
        %v3031 = vsub.f32 %v2795, %v1342
        %v3032 = vsub.f32 %v2795, %v1346
        %v3033 = vsub.f32 %v2799, %v1342
        %v3034 = vsub.f32 %v2799, %v1346
        %v3035 = vsub.f32 %v2803, %v1342
        %v3036 = vsub.f32 %v2803, %v1346
        %v3037 = vsub.f32 %v2807, %v1342
        %v3038 = vsub.f32 %v2807, %v1346
        %v3039 = vsub.f32 %v2811, %v1342
        %v3040 = vsub.f32 %v2811, %v1346
        %v3041 = vsub.f32 %v2815, %v1342
        %v3042 = vsub.f32 %v2815, %v1346
        %v3043 = vsub.f32 %v2819, %v1342
        %v3044 = vsub.f32 %v2819, %v1346
        %v3045 = vsub.f32 %v2823, %v1342
        %v3046 = vsub.f32 %v2823, %v1346
        %v3047 = vsub.f32 %v2827, %v1342
        %v3048 = vsub.f32 %v2827, %v1346
        %v3049 = vsub.f32 %v2831, %v1342
        %v3050 = vsub.f32 %v2831, %v1346
        %v3051 = vsub.f32 %v2835, %v1342
        %v3052 = vsub.f32 %v2835, %v1346
        %v3053 = vsub.f32 %v2839, %v1342
        %v3054 = vsub.f32 %v2839, %v1346
        %v3055 = vsub.f32 %v2843, %v1342
        %v3056 = vsub.f32 %v2843, %v1346
        %v3057 = vsub.f32 %v2847, %v1342
        %v3058 = vsub.f32 %v2847, %v1346
        %v3059 = vsub.f32 %v2851, %v1342
        %v3060 = vsub.f32 %v2851, %v1346
        %v3061 = vsub.f32 %v2855, %v1342
        %v3062 = vsub.f32 %v2855, %v1346
        %v3063 = vsub.f32 %v2859, %v1342
        %v3064 = vsub.f32 %v2859, %v1346
        %v3065 = vsub.f32 %v2863, %v1342
        %v3066 = vsub.f32 %v2863, %v1346
        %v3067 = vsub.f32 %v2867, %v1342
        %v3068 = vsub.f32 %v2867, %v1346
        %v3069 = vsub.f32 %v2871, %v1342
        %v3070 = vsub.f32 %v2871, %v1346
        %v3071 = vsub.f32 %v2875, %v1342
        %v3072 = vsub.f32 %v2875, %v1346
        %v3073 = vsub.f32 %v2879, %v1342
        %v3074 = vsub.f32 %v2879, %v1346
        %v3075 = vsub.f32 %v2883, %v1342
        %v3076 = vsub.f32 %v2883, %v1346
        %v3077 = vsub.f32 %v2887, %v1342
        %v3078 = vsub.f32 %v2887, %v1346
        %v3079 = vsub.f32 %v2891, %v1342
        %v3080 = vsub.f32 %v2891, %v1346
        %v3081 = vsub.f32 %v2895, %v1342
        %v3082 = vsub.f32 %v2895, %v1346
        %v3083 = vsub.f32 %v2899, %v1342
        %v3084 = vsub.f32 %v2899, %v1346
        %v3085 = vsub.f32 %v2903, %v1342
        %v3086 = vsub.f32 %v2903, %v1346
        %v3087 = vsub.f32 %v2907, %v1342
        %v3088 = vsub.f32 %v2907, %v1346
        %v3089 = vsub.f32 %v2911, %v1342
        %v3090 = vsub.f32 %v2911, %v1346
        %v3091 = vsub.f32 %v2915, %v1342
        %v3092 = vsub.f32 %v2915, %v1346
        %v3093 = vsub.f32 %v2919, %v1342
        %v3094 = vsub.f32 %v2919, %v1346
        %v3095 = vsub.f32 %v2923, %v1342
        %v3096 = vsub.f32 %v2923, %v1346
        %v3097 = vsub.f32 %v2927, %v1342
        %v3098 = vsub.f32 %v2927, %v1346
        %v3099 = vsub.f32 %v2931, %v1342
        %v3100 = vsub.f32 %v2931, %v1346
        %v3101 = vsub.f32 %v2935, %v1342
        %v3102 = vsub.f32 %v2935, %v1346
        %v3103 = vsub.f32 %v2939, %v1342
        %v3104 = vsub.f32 %v2939, %v1346
        %v3105 = vsub.f32 %v2943, %v1342
        %v3106 = vsub.f32 %v2943, %v1346
        %v3107 = vsub.f32 %v2947, %v1342
        %v3108 = vsub.f32 %v2947, %v1346
        %v3109 = vsub.f32 %v2951, %v1342
        %v3110 = vsub.f32 %v2951, %v1346
        %v3111 = vsub.f32 %v2955, %v1342
        %v3112 = vsub.f32 %v2955, %v1346
        %v3113 = vsub.f32 %v2959, %v1342
        %v3114 = vsub.f32 %v2959, %v1346
        %v3115 = vsub.f32 %v2963, %v1342
        %v3116 = vsub.f32 %v2963, %v1346
        %v3117 = vsub.f32 %v2967, %v1342
        %v3118 = vsub.f32 %v2967, %v1346
        %v3119 = vsub.f32 %v2971, %v1342
        %v3120 = vsub.f32 %v2971, %v1346
        %v3121 = vsub.f32 %v2975, %v1342
        %v3122 = vsub.f32 %v2975, %v1346
        %v3123 = vsub.f32 %v2979, %v1342
        %v3124 = vsub.f32 %v2979, %v1346
        %v3125 = vsub.f32 %v2983, %v1342
        %v3126 = vsub.f32 %v2983, %v1346
        %v3127 = vsub.f32 %v2987, %v1342
        %v3128 = vsub.f32 %v2987, %v1346
        %v3129 = vsub.f32 %v2991, %v1342
        %v3130 = vsub.f32 %v2991, %v1346
        %v3131 = vsub.f32 %v2995, %v1342
        %v3132 = vsub.f32 %v2995, %v1346
        %v3133 = vsub.f32 %v2999, %v1342
        %v3134 = vsub.f32 %v2999, %v1346
        %v3135 = vsub.f32 %v3003, %v1342
        %v3136 = vsub.f32 %v3003, %v1346
        %v3137 = vsub.f32 %v3007, %v1342
        %v3138 = vsub.f32 %v3007, %v1346
        %v3139 = vsub.f32 %v3011, %v1342
        %v3140 = vsub.f32 %v3011, %v1346
        %v3141 = vand.u32 2147483647, %v3013
        %v3142 = vand.u32 2147483647, %v3014
        %v3143 = vand.u32 2147483647, %v3015
        %v3144 = vand.u32 2147483647, %v3016
        %v3145 = vand.u32 2147483647, %v3017
        %v3146 = vand.u32 2147483647, %v3018
        %v3147 = vand.u32 2147483647, %v3019
        %v3148 = vand.u32 2147483647, %v3020
        %v3149 = vand.u32 2147483647, %v3021
        %v3150 = vand.u32 2147483647, %v3022
        %v3151 = vand.u32 2147483647, %v3023
        %v3152 = vand.u32 2147483647, %v3024
        %v3153 = vand.u32 2147483647, %v3025
        %v3154 = vand.u32 2147483647, %v3026
        %v3155 = vand.u32 2147483647, %v3027
        %v3156 = vand.u32 2147483647, %v3028
        %v3157 = vand.u32 2147483647, %v3029
        %v3158 = vand.u32 2147483647, %v3030
        %v3159 = vand.u32 2147483647, %v3031
        %v3160 = vand.u32 2147483647, %v3032
        %v3161 = vand.u32 2147483647, %v3033
        %v3162 = vand.u32 2147483647, %v3034
        %v3163 = vand.u32 2147483647, %v3035
        %v3164 = vand.u32 2147483647, %v3036
        %v3165 = vand.u32 2147483647, %v3037
        %v3166 = vand.u32 2147483647, %v3038
        %v3167 = vand.u32 2147483647, %v3039
        %v3168 = vand.u32 2147483647, %v3040
        %v3169 = vand.u32 2147483647, %v3041
        %v3170 = vand.u32 2147483647, %v3042
        %v3171 = vand.u32 2147483647, %v3043
        %v3172 = vand.u32 2147483647, %v3044
        %v3173 = vand.u32 2147483647, %v3045
        %v3174 = vand.u32 2147483647, %v3046
        %v3175 = vand.u32 2147483647, %v3047
        %v3176 = vand.u32 2147483647, %v3048
        %v3177 = vand.u32 2147483647, %v3049
        %v3178 = vand.u32 2147483647, %v3050
        %v3179 = vand.u32 2147483647, %v3051
        %v3180 = vand.u32 2147483647, %v3052
        %v3181 = vand.u32 2147483647, %v3053
        %v3182 = vand.u32 2147483647, %v3054
        %v3183 = vand.u32 2147483647, %v3055
        %v3184 = vand.u32 2147483647, %v3056
        %v3185 = vand.u32 2147483647, %v3057
        %v3186 = vand.u32 2147483647, %v3058
        %v3187 = vand.u32 2147483647, %v3059
        %v3188 = vand.u32 2147483647, %v3060
        %v3189 = vand.u32 2147483647, %v3061
        %v3190 = vand.u32 2147483647, %v3062
        %v3191 = vand.u32 2147483647, %v3063
        %v3192 = vand.u32 2147483647, %v3064
        %v3193 = vand.u32 2147483647, %v3065
        %v3194 = vand.u32 2147483647, %v3066
        %v3195 = vand.u32 2147483647, %v3067
        %v3196 = vand.u32 2147483647, %v3068
        %v3197 = vand.u32 2147483647, %v3069
        %v3198 = vand.u32 2147483647, %v3070
        %v3199 = vand.u32 2147483647, %v3071
        %v3200 = vand.u32 2147483647, %v3072
        %v3201 = vand.u32 2147483647, %v3073
        %v3202 = vand.u32 2147483647, %v3074
        %v3203 = vand.u32 2147483647, %v3075
        %v3204 = vand.u32 2147483647, %v3076
        %v3205 = vand.u32 2147483647, %v3077
        %v3206 = vand.u32 2147483647, %v3078
        %v3207 = vand.u32 2147483647, %v3079
        %v3208 = vand.u32 2147483647, %v3080
        %v3209 = vand.u32 2147483647, %v3081
        %v3210 = vand.u32 2147483647, %v3082
        %v3211 = vand.u32 2147483647, %v3083
        %v3212 = vand.u32 2147483647, %v3084
        %v3213 = vand.u32 2147483647, %v3085
        %v3214 = vand.u32 2147483647, %v3086
        %v3215 = vand.u32 2147483647, %v3087
        %v3216 = vand.u32 2147483647, %v3088
        %v3217 = vand.u32 2147483647, %v3089
        %v3218 = vand.u32 2147483647, %v3090
        %v3219 = vand.u32 2147483647, %v3091
        %v3220 = vand.u32 2147483647, %v3092
        %v3221 = vand.u32 2147483647, %v3093
        %v3222 = vand.u32 2147483647, %v3094
        %v3223 = vand.u32 2147483647, %v3095
        %v3224 = vand.u32 2147483647, %v3096
        %v3225 = vand.u32 2147483647, %v3097
        %v3226 = vand.u32 2147483647, %v3098
        %v3227 = vand.u32 2147483647, %v3099
        %v3228 = vand.u32 2147483647, %v3100
        %v3229 = vand.u32 2147483647, %v3101
        %v3230 = vand.u32 2147483647, %v3102
        %v3231 = vand.u32 2147483647, %v3103
        %v3232 = vand.u32 2147483647, %v3104
        %v3233 = vand.u32 2147483647, %v3105
        %v3234 = vand.u32 2147483647, %v3106
        %v3235 = vand.u32 2147483647, %v3107
        %v3236 = vand.u32 2147483647, %v3108
        %v3237 = vand.u32 2147483647, %v3109
        %v3238 = vand.u32 2147483647, %v3110
        %v3239 = vand.u32 2147483647, %v3111
        %v3240 = vand.u32 2147483647, %v3112
        %v3241 = vand.u32 2147483647, %v3113
        %v3242 = vand.u32 2147483647, %v3114
        %v3243 = vand.u32 2147483647, %v3115
        %v3244 = vand.u32 2147483647, %v3116
        %v3245 = vand.u32 2147483647, %v3117
        %v3246 = vand.u32 2147483647, %v3118
        %v3247 = vand.u32 2147483647, %v3119
        %v3248 = vand.u32 2147483647, %v3120
        %v3249 = vand.u32 2147483647, %v3121
        %v3250 = vand.u32 2147483647, %v3122
        %v3251 = vand.u32 2147483647, %v3123
        %v3252 = vand.u32 2147483647, %v3124
        %v3253 = vand.u32 2147483647, %v3125
        %v3254 = vand.u32 2147483647, %v3126
        %v3255 = vand.u32 2147483647, %v3127
        %v3256 = vand.u32 2147483647, %v3128
        %v3257 = vand.u32 2147483647, %v3129
        %v3258 = vand.u32 2147483647, %v3130
        %v3259 = vand.u32 2147483647, %v3131
        %v3260 = vand.u32 2147483647, %v3132
        %v3261 = vand.u32 2147483647, %v3133
        %v3262 = vand.u32 2147483647, %v3134
        %v3263 = vand.u32 2147483647, %v3135
        %v3264 = vand.u32 2147483647, %v3136
        %v3265 = vand.u32 2147483647, %v3137
        %v3266 = vand.u32 2147483647, %v3138
        %v3267 = vand.u32 2147483647, %v3139
        %v3268 = vand.u32 2147483647, %v3140
        %v3269 = vsub.f32 1.0, %v3141
        %v3270 = vsub.f32 1.0, %v3142
        %v3271 = vsub.f32 1.0, %v3143
        %v3272 = vsub.f32 1.0, %v3144
        %v3273 = vsub.f32 1.0, %v3145
        %v3274 = vsub.f32 1.0, %v3146
        %v3275 = vsub.f32 1.0, %v3147
        %v3276 = vsub.f32 1.0, %v3148
        %v3277 = vsub.f32 1.0, %v3149
        %v3278 = vsub.f32 1.0, %v3150
        %v3279 = vsub.f32 1.0, %v3151
        %v3280 = vsub.f32 1.0, %v3152
        %v3281 = vsub.f32 1.0, %v3153
        %v3282 = vsub.f32 1.0, %v3154
        %v3283 = vsub.f32 1.0, %v3155
        %v3284 = vsub.f32 1.0, %v3156
        %v3285 = vsub.f32 1.0, %v3157
        %v3286 = vsub.f32 1.0, %v3158
        %v3287 = vsub.f32 1.0, %v3159
        %v3288 = vsub.f32 1.0, %v3160
        %v3289 = vsub.f32 1.0, %v3161
        %v3290 = vsub.f32 1.0, %v3162
        %v3291 = vsub.f32 1.0, %v3163
        %v3292 = vsub.f32 1.0, %v3164
        %v3293 = vsub.f32 1.0, %v3165
        %v3294 = vsub.f32 1.0, %v3166
        %v3295 = vsub.f32 1.0, %v3167
        %v3296 = vsub.f32 1.0, %v3168
        %v3297 = vsub.f32 1.0, %v3169
        %v3298 = vsub.f32 1.0, %v3170
        %v3299 = vsub.f32 1.0, %v3171
        %v3300 = vsub.f32 1.0, %v3172
        %v3301 = vsub.f32 1.0, %v3173
        %v3302 = vsub.f32 1.0, %v3174
        %v3303 = vsub.f32 1.0, %v3175
        %v3304 = vsub.f32 1.0, %v3176
        %v3305 = vsub.f32 1.0, %v3177
        %v3306 = vsub.f32 1.0, %v3178
        %v3307 = vsub.f32 1.0, %v3179
        %v3308 = vsub.f32 1.0, %v3180
        %v3309 = vsub.f32 1.0, %v3181
        %v3310 = vsub.f32 1.0, %v3182
        %v3311 = vsub.f32 1.0, %v3183
        %v3312 = vsub.f32 1.0, %v3184
        %v3313 = vsub.f32 1.0, %v3185
        %v3314 = vsub.f32 1.0, %v3186
        %v3315 = vsub.f32 1.0, %v3187
        %v3316 = vsub.f32 1.0, %v3188
        %v3317 = vsub.f32 1.0, %v3189
        %v3318 = vsub.f32 1.0, %v3190
        %v3319 = vsub.f32 1.0, %v3191
        %v3320 = vsub.f32 1.0, %v3192
        %v3321 = vsub.f32 1.0, %v3193
        %v3322 = vsub.f32 1.0, %v3194
        %v3323 = vsub.f32 1.0, %v3195
        %v3324 = vsub.f32 1.0, %v3196
        %v3325 = vsub.f32 1.0, %v3197
        %v3326 = vsub.f32 1.0, %v3198
        %v3327 = vsub.f32 1.0, %v3199
        %v3328 = vsub.f32 1.0, %v3200
        %v3329 = vsub.f32 1.0, %v3201
        %v3330 = vsub.f32 1.0, %v3202
        %v3331 = vsub.f32 1.0, %v3203
        %v3332 = vsub.f32 1.0, %v3204
        %v3333 = vsub.f32 1.0, %v3205
        %v3334 = vsub.f32 1.0, %v3206
        %v3335 = vsub.f32 1.0, %v3207
        %v3336 = vsub.f32 1.0, %v3208
        %v3337 = vsub.f32 1.0, %v3209
        %v3338 = vsub.f32 1.0, %v3210
        %v3339 = vsub.f32 1.0, %v3211
        %v3340 = vsub.f32 1.0, %v3212
        %v3341 = vsub.f32 1.0, %v3213
        %v3342 = vsub.f32 1.0, %v3214
        %v3343 = vsub.f32 1.0, %v3215
        %v3344 = vsub.f32 1.0, %v3216
        %v3345 = vsub.f32 1.0, %v3217
        %v3346 = vsub.f32 1.0, %v3218
        %v3347 = vsub.f32 1.0, %v3219
        %v3348 = vsub.f32 1.0, %v3220
        %v3349 = vsub.f32 1.0, %v3221
        %v3350 = vsub.f32 1.0, %v3222
        %v3351 = vsub.f32 1.0, %v3223
        %v3352 = vsub.f32 1.0, %v3224
        %v3353 = vsub.f32 1.0, %v3225
        %v3354 = vsub.f32 1.0, %v3226
        %v3355 = vsub.f32 1.0, %v3227
        %v3356 = vsub.f32 1.0, %v3228
        %v3357 = vsub.f32 1.0, %v3229
        %v3358 = vsub.f32 1.0, %v3230
        %v3359 = vsub.f32 1.0, %v3231
        %v3360 = vsub.f32 1.0, %v3232
        %v3361 = vsub.f32 1.0, %v3233
        %v3362 = vsub.f32 1.0, %v3234
        %v3363 = vsub.f32 1.0, %v3235
        %v3364 = vsub.f32 1.0, %v3236
        %v3365 = vsub.f32 1.0, %v3237
        %v3366 = vsub.f32 1.0, %v3238
        %v3367 = vsub.f32 1.0, %v3239
        %v3368 = vsub.f32 1.0, %v3240
        %v3369 = vsub.f32 1.0, %v3241
        %v3370 = vsub.f32 1.0, %v3242
        %v3371 = vsub.f32 1.0, %v3243
        %v3372 = vsub.f32 1.0, %v3244
        %v3373 = vsub.f32 1.0, %v3245
        %v3374 = vsub.f32 1.0, %v3246
        %v3375 = vsub.f32 1.0, %v3247
        %v3376 = vsub.f32 1.0, %v3248
        %v3377 = vsub.f32 1.0, %v3249
        %v3378 = vsub.f32 1.0, %v3250
        %v3379 = vsub.f32 1.0, %v3251
        %v3380 = vsub.f32 1.0, %v3252
        %v3381 = vsub.f32 1.0, %v3253
        %v3382 = vsub.f32 1.0, %v3254
        %v3383 = vsub.f32 1.0, %v3255
        %v3384 = vsub.f32 1.0, %v3256
        %v3385 = vsub.f32 1.0, %v3257
        %v3386 = vsub.f32 1.0, %v3258
        %v3387 = vsub.f32 1.0, %v3259
        %v3388 = vsub.f32 1.0, %v3260
        %v3389 = vsub.f32 1.0, %v3261
        %v3390 = vsub.f32 1.0, %v3262
        %v3391 = vsub.f32 1.0, %v3263
        %v3392 = vsub.f32 1.0, %v3264
        %v3393 = vsub.f32 1.0, %v3265
        %v3394 = vsub.f32 1.0, %v3266
        %v3395 = vsub.f32 1.0, %v3267
        %v3396 = vsub.f32 1.0, %v3268
        %v3397 = vmax.f32 %v3269, 0.0
        %v3398 = vmax.f32 %v3270, 0.0
        %v3399 = vmax.f32 %v3271, 0.0
        %v3400 = vmax.f32 %v3272, 0.0
        %v3401 = vmax.f32 %v3273, 0.0
        %v3402 = vmax.f32 %v3274, 0.0
        %v3403 = vmax.f32 %v3275, 0.0
        %v3404 = vmax.f32 %v3276, 0.0
        %v3405 = vmax.f32 %v3277, 0.0
        %v3406 = vmax.f32 %v3278, 0.0
        %v3407 = vmax.f32 %v3279, 0.0
        %v3408 = vmax.f32 %v3280, 0.0
        %v3409 = vmax.f32 %v3281, 0.0
        %v3410 = vmax.f32 %v3282, 0.0
        %v3411 = vmax.f32 %v3283, 0.0
        %v3412 = vmax.f32 %v3284, 0.0
        %v3413 = vmax.f32 %v3285, 0.0
        %v3414 = vmax.f32 %v3286, 0.0
        %v3415 = vmax.f32 %v3287, 0.0
        %v3416 = vmax.f32 %v3288, 0.0
        %v3417 = vmax.f32 %v3289, 0.0
        %v3418 = vmax.f32 %v3290, 0.0
        %v3419 = vmax.f32 %v3291, 0.0
        %v3420 = vmax.f32 %v3292, 0.0
        %v3421 = vmax.f32 %v3293, 0.0
        %v3422 = vmax.f32 %v3294, 0.0
        %v3423 = vmax.f32 %v3295, 0.0
        %v3424 = vmax.f32 %v3296, 0.0
        %v3425 = vmax.f32 %v3297, 0.0
        %v3426 = vmax.f32 %v3298, 0.0
        %v3427 = vmax.f32 %v3299, 0.0
        %v3428 = vmax.f32 %v3300, 0.0
        %v3429 = vmax.f32 %v3301, 0.0
        %v3430 = vmax.f32 %v3302, 0.0
        %v3431 = vmax.f32 %v3303, 0.0
        %v3432 = vmax.f32 %v3304, 0.0
        %v3433 = vmax.f32 %v3305, 0.0
        %v3434 = vmax.f32 %v3306, 0.0
        %v3435 = vmax.f32 %v3307, 0.0
        %v3436 = vmax.f32 %v3308, 0.0
        %v3437 = vmax.f32 %v3309, 0.0
        %v3438 = vmax.f32 %v3310, 0.0
        %v3439 = vmax.f32 %v3311, 0.0
        %v3440 = vmax.f32 %v3312, 0.0
        %v3441 = vmax.f32 %v3313, 0.0
        %v3442 = vmax.f32 %v3314, 0.0
        %v3443 = vmax.f32 %v3315, 0.0
        %v3444 = vmax.f32 %v3316, 0.0
        %v3445 = vmax.f32 %v3317, 0.0
        %v3446 = vmax.f32 %v3318, 0.0
        %v3447 = vmax.f32 %v3319, 0.0
        %v3448 = vmax.f32 %v3320, 0.0
        %v3449 = vmax.f32 %v3321, 0.0
        %v3450 = vmax.f32 %v3322, 0.0
        %v3451 = vmax.f32 %v3323, 0.0
        %v3452 = vmax.f32 %v3324, 0.0
        %v3453 = vmax.f32 %v3325, 0.0
        %v3454 = vmax.f32 %v3326, 0.0
        %v3455 = vmax.f32 %v3327, 0.0
        %v3456 = vmax.f32 %v3328, 0.0
        %v3457 = vmax.f32 %v3329, 0.0
        %v3458 = vmax.f32 %v3330, 0.0
        %v3459 = vmax.f32 %v3331, 0.0
        %v3460 = vmax.f32 %v3332, 0.0
        %v3461 = vmax.f32 %v3333, 0.0
        %v3462 = vmax.f32 %v3334, 0.0
        %v3463 = vmax.f32 %v3335, 0.0
        %v3464 = vmax.f32 %v3336, 0.0
        %v3465 = vmax.f32 %v3337, 0.0
        %v3466 = vmax.f32 %v3338, 0.0
        %v3467 = vmax.f32 %v3339, 0.0
        %v3468 = vmax.f32 %v3340, 0.0
        %v3469 = vmax.f32 %v3341, 0.0
        %v3470 = vmax.f32 %v3342, 0.0
        %v3471 = vmax.f32 %v3343, 0.0
        %v3472 = vmax.f32 %v3344, 0.0
        %v3473 = vmax.f32 %v3345, 0.0
        %v3474 = vmax.f32 %v3346, 0.0
        %v3475 = vmax.f32 %v3347, 0.0
        %v3476 = vmax.f32 %v3348, 0.0
        %v3477 = vmax.f32 %v3349, 0.0
        %v3478 = vmax.f32 %v3350, 0.0
        %v3479 = vmax.f32 %v3351, 0.0
        %v3480 = vmax.f32 %v3352, 0.0
        %v3481 = vmax.f32 %v3353, 0.0
        %v3482 = vmax.f32 %v3354, 0.0
        %v3483 = vmax.f32 %v3355, 0.0
        %v3484 = vmax.f32 %v3356, 0.0
        %v3485 = vmax.f32 %v3357, 0.0
        %v3486 = vmax.f32 %v3358, 0.0
        %v3487 = vmax.f32 %v3359, 0.0
        %v3488 = vmax.f32 %v3360, 0.0
        %v3489 = vmax.f32 %v3361, 0.0
        %v3490 = vmax.f32 %v3362, 0.0
        %v3491 = vmax.f32 %v3363, 0.0
        %v3492 = vmax.f32 %v3364, 0.0
        %v3493 = vmax.f32 %v3365, 0.0
        %v3494 = vmax.f32 %v3366, 0.0
        %v3495 = vmax.f32 %v3367, 0.0
        %v3496 = vmax.f32 %v3368, 0.0
        %v3497 = vmax.f32 %v3369, 0.0
        %v3498 = vmax.f32 %v3370, 0.0
        %v3499 = vmax.f32 %v3371, 0.0
        %v3500 = vmax.f32 %v3372, 0.0
        %v3501 = vmax.f32 %v3373, 0.0
        %v3502 = vmax.f32 %v3374, 0.0
        %v3503 = vmax.f32 %v3375, 0.0
        %v3504 = vmax.f32 %v3376, 0.0
        %v3505 = vmax.f32 %v3377, 0.0
        %v3506 = vmax.f32 %v3378, 0.0
        %v3507 = vmax.f32 %v3379, 0.0
        %v3508 = vmax.f32 %v3380, 0.0
        %v3509 = vmax.f32 %v3381, 0.0
        %v3510 = vmax.f32 %v3382, 0.0
        %v3511 = vmax.f32 %v3383, 0.0
        %v3512 = vmax.f32 %v3384, 0.0
        %v3513 = vmax.f32 %v3385, 0.0
        %v3514 = vmax.f32 %v3386, 0.0
        %v3515 = vmax.f32 %v3387, 0.0
        %v3516 = vmax.f32 %v3388, 0.0
        %v3517 = vmax.f32 %v3389, 0.0
        %v3518 = vmax.f32 %v3390, 0.0
        %v3519 = vmax.f32 %v3391, 0.0
        %v3520 = vmax.f32 %v3392, 0.0
        %v3521 = vmax.f32 %v3393, 0.0
        %v3522 = vmax.f32 %v3394, 0.0
        %v3523 = vmax.f32 %v3395, 0.0
        %v3524 = vmax.f32 %v3396, 0.0
        %v3525 = vmul.f32 %v2629, %v3397
        %v3526 = vmul.f32 %v2630, %v3398
        %v3527 = vmul.f32 %v2631, %v3399
        %v3528 = vmul.f32 %v2632, %v3400
        %v3529 = vmul.f32 %v2633, %v3401
        %v3530 = vmul.f32 %v2634, %v3402
        %v3531 = vmul.f32 %v2635, %v3403
        %v3532 = vmul.f32 %v2636, %v3404
        %v3533 = vmul.f32 %v2637, %v3405
        %v3534 = vmul.f32 %v2638, %v3406
        %v3535 = vmul.f32 %v2639, %v3407
        %v3536 = vmul.f32 %v2640, %v3408
        %v3537 = vmul.f32 %v2641, %v3409
        %v3538 = vmul.f32 %v2642, %v3410
        %v3539 = vmul.f32 %v2643, %v3411
        %v3540 = vmul.f32 %v2644, %v3412
        %v3541 = vmul.f32 %v2645, %v3413
        %v3542 = vmul.f32 %v2646, %v3414
        %v3543 = vmul.f32 %v2647, %v3415
        %v3544 = vmul.f32 %v2648, %v3416
        %v3545 = vmul.f32 %v2649, %v3417
        %v3546 = vmul.f32 %v2650, %v3418
        %v3547 = vmul.f32 %v2651, %v3419
        %v3548 = vmul.f32 %v2652, %v3420
        %v3549 = vmul.f32 %v2653, %v3421
        %v3550 = vmul.f32 %v2654, %v3422
        %v3551 = vmul.f32 %v2655, %v3423
        %v3552 = vmul.f32 %v2656, %v3424
        %v3553 = vmul.f32 %v2657, %v3425
        %v3554 = vmul.f32 %v2658, %v3426
        %v3555 = vmul.f32 %v2659, %v3427
        %v3556 = vmul.f32 %v2660, %v3428
        %v3557 = vmul.f32 %v2661, %v3429
        %v3558 = vmul.f32 %v2662, %v3430
        %v3559 = vmul.f32 %v2663, %v3431
        %v3560 = vmul.f32 %v2664, %v3432
        %v3561 = vmul.f32 %v2665, %v3433
        %v3562 = vmul.f32 %v2666, %v3434
        %v3563 = vmul.f32 %v2667, %v3435
        %v3564 = vmul.f32 %v2668, %v3436
        %v3565 = vmul.f32 %v2669, %v3437
        %v3566 = vmul.f32 %v2670, %v3438
        %v3567 = vmul.f32 %v2671, %v3439
        %v3568 = vmul.f32 %v2672, %v3440
        %v3569 = vmul.f32 %v2673, %v3441
        %v3570 = vmul.f32 %v2674, %v3442
        %v3571 = vmul.f32 %v2675, %v3443
        %v3572 = vmul.f32 %v2676, %v3444
        %v3573 = vmul.f32 %v2677, %v3445
        %v3574 = vmul.f32 %v2678, %v3446
        %v3575 = vmul.f32 %v2679, %v3447
        %v3576 = vmul.f32 %v2680, %v3448
        %v3577 = vmul.f32 %v2681, %v3449
        %v3578 = vmul.f32 %v2682, %v3450
        %v3579 = vmul.f32 %v2683, %v3451
        %v3580 = vmul.f32 %v2684, %v3452
        %v3581 = vmul.f32 %v2685, %v3453
        %v3582 = vmul.f32 %v2686, %v3454
        %v3583 = vmul.f32 %v2687, %v3455
        %v3584 = vmul.f32 %v2688, %v3456
        %v3585 = vmul.f32 %v2689, %v3457
        %v3586 = vmul.f32 %v2690, %v3458
        %v3587 = vmul.f32 %v2691, %v3459
        %v3588 = vmul.f32 %v2692, %v3460
        %v3589 = vmul.f32 %v2693, %v3461
        %v3590 = vmul.f32 %v2694, %v3462
        %v3591 = vmul.f32 %v2695, %v3463
        %v3592 = vmul.f32 %v2696, %v3464
        %v3593 = vmul.f32 %v2697, %v3465
        %v3594 = vmul.f32 %v2698, %v3466
        %v3595 = vmul.f32 %v2699, %v3467
        %v3596 = vmul.f32 %v2700, %v3468
        %v3597 = vmul.f32 %v2701, %v3469
        %v3598 = vmul.f32 %v2702, %v3470
        %v3599 = vmul.f32 %v2703, %v3471
        %v3600 = vmul.f32 %v2704, %v3472
        %v3601 = vmul.f32 %v2705, %v3473
        %v3602 = vmul.f32 %v2706, %v3474
        %v3603 = vmul.f32 %v2707, %v3475
        %v3604 = vmul.f32 %v2708, %v3476
        %v3605 = vmul.f32 %v2709, %v3477
        %v3606 = vmul.f32 %v2710, %v3478
        %v3607 = vmul.f32 %v2711, %v3479
        %v3608 = vmul.f32 %v2712, %v3480
        %v3609 = vmul.f32 %v2713, %v3481
        %v3610 = vmul.f32 %v2714, %v3482
        %v3611 = vmul.f32 %v2715, %v3483
        %v3612 = vmul.f32 %v2716, %v3484
        %v3613 = vmul.f32 %v2717, %v3485
        %v3614 = vmul.f32 %v2718, %v3486
        %v3615 = vmul.f32 %v2719, %v3487
        %v3616 = vmul.f32 %v2720, %v3488
        %v3617 = vmul.f32 %v2721, %v3489
        %v3618 = vmul.f32 %v2722, %v3490
        %v3619 = vmul.f32 %v2723, %v3491
        %v3620 = vmul.f32 %v2724, %v3492
        %v3621 = vmul.f32 %v2725, %v3493
        %v3622 = vmul.f32 %v2726, %v3494
        %v3623 = vmul.f32 %v2727, %v3495
        %v3624 = vmul.f32 %v2728, %v3496
        %v3625 = vmul.f32 %v2729, %v3497
        %v3626 = vmul.f32 %v2730, %v3498
        %v3627 = vmul.f32 %v2731, %v3499
        %v3628 = vmul.f32 %v2732, %v3500
        %v3629 = vmul.f32 %v2733, %v3501
        %v3630 = vmul.f32 %v2734, %v3502
        %v3631 = vmul.f32 %v2735, %v3503
        %v3632 = vmul.f32 %v2736, %v3504
        %v3633 = vmul.f32 %v2737, %v3505
        %v3634 = vmul.f32 %v2738, %v3506
        %v3635 = vmul.f32 %v2739, %v3507
        %v3636 = vmul.f32 %v2740, %v3508
        %v3637 = vmul.f32 %v2741, %v3509
        %v3638 = vmul.f32 %v2742, %v3510
        %v3639 = vmul.f32 %v2743, %v3511
        %v3640 = vmul.f32 %v2744, %v3512
        %v3641 = vmul.f32 %v2745, %v3513
        %v3642 = vmul.f32 %v2746, %v3514
        %v3643 = vmul.f32 %v2747, %v3515
        %v3644 = vmul.f32 %v2748, %v3516
        %v3645 = vmul.f32 %v2749, %v3517
        %v3646 = vmul.f32 %v2750, %v3518
        %v3647 = vmul.f32 %v2751, %v3519
        %v3648 = vmul.f32 %v2752, %v3520
        %v3649 = vmul.f32 %v2753, %v3521
        %v3650 = vmul.f32 %v2754, %v3522
        %v3651 = vmul.f32 %v2755, %v3523
        %v3652 = vmul.f32 %v2756, %v3524
        %3653 = vset.pattern.permute.xlu0 5
        %3654 = vperm.xlu0 %3653, %v172
        %v3655 = vpop.permute.xlu0 %3654
        %3657 = vset.pattern.permute.xlu0 5
        %3658 = vperm.xlu0 %3657, %v173
        %v3659 = vpop.permute.xlu0 %3658
        %3661 = vset.pattern.permute.xlu0 5
        %3662 = vperm.xlu0 %3661, %v174
        %v3663 = vpop.permute.xlu0 %3662
        %3665 = vset.pattern.permute.xlu0 5
        %3666 = vperm.xlu0 %3665, %v175
        %v3667 = vpop.permute.xlu0 %3666
        %3669 = vset.pattern.permute.xlu0 5
        %3670 = vperm.xlu0 %3669, %v176
        %v3671 = vpop.permute.xlu0 %3670
        %3673 = vset.pattern.permute.xlu0 5
        %3674 = vperm.xlu0 %3673, %v177
        %v3675 = vpop.permute.xlu0 %3674
        %3677 = vset.pattern.permute.xlu0 5
        %3678 = vperm.xlu0 %3677, %v178
        %v3679 = vpop.permute.xlu0 %3678
        %3681 = vset.pattern.permute.xlu0 5
        %3682 = vperm.xlu0 %3681, %v179
        %v3683 = vpop.permute.xlu0 %3682
        %3685 = vset.pattern.permute.xlu0 5
        %3686 = vperm.xlu0 %3685, %v180
        %v3687 = vpop.permute.xlu0 %3686
        %3689 = vset.pattern.permute.xlu0 5
        %3690 = vperm.xlu0 %3689, %v181
        %v3691 = vpop.permute.xlu0 %3690
        %3693 = vset.pattern.permute.xlu0 5
        %3694 = vperm.xlu0 %3693, %v182
        %v3695 = vpop.permute.xlu0 %3694
        %3697 = vset.pattern.permute.xlu0 5
        %3698 = vperm.xlu0 %3697, %v183
        %v3699 = vpop.permute.xlu0 %3698
        %3701 = vset.pattern.permute.xlu0 5
        %3702 = vperm.xlu0 %3701, %v184
        %v3703 = vpop.permute.xlu0 %3702
        %3705 = vset.pattern.permute.xlu0 5
        %3706 = vperm.xlu0 %3705, %v185
        %v3707 = vpop.permute.xlu0 %3706
        %3709 = vset.pattern.permute.xlu0 5
        %3710 = vperm.xlu0 %3709, %v186
        %v3711 = vpop.permute.xlu0 %3710
        %3713 = vset.pattern.permute.xlu0 5
        %3714 = vperm.xlu0 %3713, %v187
        %v3715 = vpop.permute.xlu0 %3714
        %3717 = vset.pattern.permute.xlu0 5
        %3718 = vperm.xlu0 %3717, %v188
        %v3719 = vpop.permute.xlu0 %3718
        %3721 = vset.pattern.permute.xlu0 5
        %3722 = vperm.xlu0 %3721, %v189
        %v3723 = vpop.permute.xlu0 %3722
        %3725 = vset.pattern.permute.xlu0 5
        %3726 = vperm.xlu0 %3725, %v190
        %v3727 = vpop.permute.xlu0 %3726
        %3729 = vset.pattern.permute.xlu0 5
        %3730 = vperm.xlu0 %3729, %v191
        %v3731 = vpop.permute.xlu0 %3730
        %3733 = vset.pattern.permute.xlu0 5
        %3734 = vperm.xlu0 %3733, %v192
        %v3735 = vpop.permute.xlu0 %3734
        %3737 = vset.pattern.permute.xlu0 5
        %3738 = vperm.xlu0 %3737, %v193
        %v3739 = vpop.permute.xlu0 %3738
        %3741 = vset.pattern.permute.xlu0 5
        %3742 = vperm.xlu0 %3741, %v194
        %v3743 = vpop.permute.xlu0 %3742
        %3745 = vset.pattern.permute.xlu0 5
        %3746 = vperm.xlu0 %3745, %v195
        %v3747 = vpop.permute.xlu0 %3746
        %3749 = vset.pattern.permute.xlu0 5
        %3750 = vperm.xlu0 %3749, %v196
        %v3751 = vpop.permute.xlu0 %3750
        %3753 = vset.pattern.permute.xlu0 5
        %3754 = vperm.xlu0 %3753, %v197
        %v3755 = vpop.permute.xlu0 %3754
        %3757 = vset.pattern.permute.xlu0 5
        %3758 = vperm.xlu0 %3757, %v198
        %v3759 = vpop.permute.xlu0 %3758
        %3761 = vset.pattern.permute.xlu0 5
        %3762 = vperm.xlu0 %3761, %v199
        %v3763 = vpop.permute.xlu0 %3762
        %3765 = vset.pattern.permute.xlu0 5
        %3766 = vperm.xlu0 %3765, %v200
        %v3767 = vpop.permute.xlu0 %3766
        %3769 = vset.pattern.permute.xlu0 5
        %3770 = vperm.xlu0 %3769, %v201
        %v3771 = vpop.permute.xlu0 %3770
        %3773 = vset.pattern.permute.xlu0 5
        %3774 = vperm.xlu0 %3773, %v202
        %v3775 = vpop.permute.xlu0 %3774
        %3777 = vset.pattern.permute.xlu0 5
        %3778 = vperm.xlu0 %3777, %v203
        %v3779 = vpop.permute.xlu0 %3778
        %3781 = vset.pattern.permute.xlu0 5
        %3782 = vperm.xlu0 %3781, %v204
        %v3783 = vpop.permute.xlu0 %3782
        %3785 = vset.pattern.permute.xlu0 5
        %3786 = vperm.xlu0 %3785, %v205
        %v3787 = vpop.permute.xlu0 %3786
        %3789 = vset.pattern.permute.xlu0 5
        %3790 = vperm.xlu0 %3789, %v206
        %v3791 = vpop.permute.xlu0 %3790
        %3793 = vset.pattern.permute.xlu0 5
        %3794 = vperm.xlu0 %3793, %v207
        %v3795 = vpop.permute.xlu0 %3794
        %3797 = vset.pattern.permute.xlu0 5
        %3798 = vperm.xlu0 %3797, %v208
        %v3799 = vpop.permute.xlu0 %3798
        %3801 = vset.pattern.permute.xlu0 5
        %3802 = vperm.xlu0 %3801, %v209
        %v3803 = vpop.permute.xlu0 %3802
        %3805 = vset.pattern.permute.xlu0 5
        %3806 = vperm.xlu0 %3805, %v210
        %v3807 = vpop.permute.xlu0 %3806
        %3809 = vset.pattern.permute.xlu0 5
        %3810 = vperm.xlu0 %3809, %v211
        %v3811 = vpop.permute.xlu0 %3810
        %3813 = vset.pattern.permute.xlu0 5
        %3814 = vperm.xlu0 %3813, %v212
        %v3815 = vpop.permute.xlu0 %3814
        %3817 = vset.pattern.permute.xlu0 5
        %3818 = vperm.xlu0 %3817, %v213
        %v3819 = vpop.permute.xlu0 %3818
        %3821 = vset.pattern.permute.xlu0 5
        %3822 = vperm.xlu0 %3821, %v214
        %v3823 = vpop.permute.xlu0 %3822
        %3825 = vset.pattern.permute.xlu0 5
        %3826 = vperm.xlu0 %3825, %v215
        %v3827 = vpop.permute.xlu0 %3826
        %3829 = vset.pattern.permute.xlu0 5
        %3830 = vperm.xlu0 %3829, %v216
        %v3831 = vpop.permute.xlu0 %3830
        %3833 = vset.pattern.permute.xlu0 5
        %3834 = vperm.xlu0 %3833, %v217
        %v3835 = vpop.permute.xlu0 %3834
        %3837 = vset.pattern.permute.xlu0 5
        %3838 = vperm.xlu0 %3837, %v218
        %v3839 = vpop.permute.xlu0 %3838
        %3841 = vset.pattern.permute.xlu0 5
        %3842 = vperm.xlu0 %3841, %v219
        %v3843 = vpop.permute.xlu0 %3842
        %3845 = vset.pattern.permute.xlu0 5
        %3846 = vperm.xlu0 %3845, %v220
        %v3847 = vpop.permute.xlu0 %3846
        %3849 = vset.pattern.permute.xlu0 5
        %3850 = vperm.xlu0 %3849, %v221
        %v3851 = vpop.permute.xlu0 %3850
        %3853 = vset.pattern.permute.xlu0 5
        %3854 = vperm.xlu0 %3853, %v222
        %v3855 = vpop.permute.xlu0 %3854
        %3857 = vset.pattern.permute.xlu0 5
        %3858 = vperm.xlu0 %3857, %v223
        %v3859 = vpop.permute.xlu0 %3858
        %3861 = vset.pattern.permute.xlu0 5
        %3862 = vperm.xlu0 %3861, %v224
        %v3863 = vpop.permute.xlu0 %3862
        %3865 = vset.pattern.permute.xlu0 5
        %3866 = vperm.xlu0 %3865, %v225
        %v3867 = vpop.permute.xlu0 %3866
        %3869 = vset.pattern.permute.xlu0 5
        %3870 = vperm.xlu0 %3869, %v226
        %v3871 = vpop.permute.xlu0 %3870
        %3873 = vset.pattern.permute.xlu0 5
        %3874 = vperm.xlu0 %3873, %v227
        %v3875 = vpop.permute.xlu0 %3874
        %3877 = vset.pattern.permute.xlu0 5
        %3878 = vperm.xlu0 %3877, %v228
        %v3879 = vpop.permute.xlu0 %3878
        %3881 = vset.pattern.permute.xlu0 5
        %3882 = vperm.xlu0 %3881, %v229
        %v3883 = vpop.permute.xlu0 %3882
        %3885 = vset.pattern.permute.xlu0 5
        %3886 = vperm.xlu0 %3885, %v230
        %v3887 = vpop.permute.xlu0 %3886
        %3889 = vset.pattern.permute.xlu0 5
        %3890 = vperm.xlu0 %3889, %v231
        %v3891 = vpop.permute.xlu0 %3890
        %3893 = vset.pattern.permute.xlu0 5
        %3894 = vperm.xlu0 %3893, %v232
        %v3895 = vpop.permute.xlu0 %3894
        %3897 = vset.pattern.permute.xlu0 5
        %3898 = vperm.xlu0 %3897, %v233
        %v3899 = vpop.permute.xlu0 %3898
        %3901 = vset.pattern.permute.xlu0 5
        %3902 = vperm.xlu0 %3901, %v234
        %v3903 = vpop.permute.xlu0 %3902
        %3905 = vset.pattern.permute.xlu0 5
        %3906 = vperm.xlu0 %3905, %v235
        %v3907 = vpop.permute.xlu0 %3906
        %v3909 = vsub.f32 %v3655, %v563
        %v3910 = vsub.f32 %v3655, %v567
        %v3911 = vsub.f32 %v3659, %v563
        %v3912 = vsub.f32 %v3659, %v567
        %v3913 = vsub.f32 %v3663, %v563
        %v3914 = vsub.f32 %v3663, %v567
        %v3915 = vsub.f32 %v3667, %v563
        %v3916 = vsub.f32 %v3667, %v567
        %v3917 = vsub.f32 %v3671, %v563
        %v3918 = vsub.f32 %v3671, %v567
        %v3919 = vsub.f32 %v3675, %v563
        %v3920 = vsub.f32 %v3675, %v567
        %v3921 = vsub.f32 %v3679, %v563
        %v3922 = vsub.f32 %v3679, %v567
        %v3923 = vsub.f32 %v3683, %v563
        %v3924 = vsub.f32 %v3683, %v567
        %v3925 = vsub.f32 %v3687, %v563
        %v3926 = vsub.f32 %v3687, %v567
        %v3927 = vsub.f32 %v3691, %v563
        %v3928 = vsub.f32 %v3691, %v567
        %v3929 = vsub.f32 %v3695, %v563
        %v3930 = vsub.f32 %v3695, %v567
        %v3931 = vsub.f32 %v3699, %v563
        %v3932 = vsub.f32 %v3699, %v567
        %v3933 = vsub.f32 %v3703, %v563
        %v3934 = vsub.f32 %v3703, %v567
        %v3935 = vsub.f32 %v3707, %v563
        %v3936 = vsub.f32 %v3707, %v567
        %v3937 = vsub.f32 %v3711, %v563
        %v3938 = vsub.f32 %v3711, %v567
        %v3939 = vsub.f32 %v3715, %v563
        %v3940 = vsub.f32 %v3715, %v567
        %v3941 = vsub.f32 %v3719, %v563
        %v3942 = vsub.f32 %v3719, %v567
        %v3943 = vsub.f32 %v3723, %v563
        %v3944 = vsub.f32 %v3723, %v567
        %v3945 = vsub.f32 %v3727, %v563
        %v3946 = vsub.f32 %v3727, %v567
        %v3947 = vsub.f32 %v3731, %v563
        %v3948 = vsub.f32 %v3731, %v567
        %v3949 = vsub.f32 %v3735, %v563
        %v3950 = vsub.f32 %v3735, %v567
        %v3951 = vsub.f32 %v3739, %v563
        %v3952 = vsub.f32 %v3739, %v567
        %v3953 = vsub.f32 %v3743, %v563
        %v3954 = vsub.f32 %v3743, %v567
        %v3955 = vsub.f32 %v3747, %v563
        %v3956 = vsub.f32 %v3747, %v567
        %v3957 = vsub.f32 %v3751, %v563
        %v3958 = vsub.f32 %v3751, %v567
        %v3959 = vsub.f32 %v3755, %v563
        %v3960 = vsub.f32 %v3755, %v567
        %v3961 = vsub.f32 %v3759, %v563
        %v3962 = vsub.f32 %v3759, %v567
        %v3963 = vsub.f32 %v3763, %v563
        %v3964 = vsub.f32 %v3763, %v567
        %v3965 = vsub.f32 %v3767, %v563
        %v3966 = vsub.f32 %v3767, %v567
        %v3967 = vsub.f32 %v3771, %v563
        %v3968 = vsub.f32 %v3771, %v567
        %v3969 = vsub.f32 %v3775, %v563
        %v3970 = vsub.f32 %v3775, %v567
        %v3971 = vsub.f32 %v3779, %v563
        %v3972 = vsub.f32 %v3779, %v567
        %v3973 = vsub.f32 %v3783, %v563
        %v3974 = vsub.f32 %v3783, %v567
        %v3975 = vsub.f32 %v3787, %v563
        %v3976 = vsub.f32 %v3787, %v567
        %v3977 = vsub.f32 %v3791, %v563
        %v3978 = vsub.f32 %v3791, %v567
        %v3979 = vsub.f32 %v3795, %v563
        %v3980 = vsub.f32 %v3795, %v567
        %v3981 = vsub.f32 %v3799, %v563
        %v3982 = vsub.f32 %v3799, %v567
        %v3983 = vsub.f32 %v3803, %v563
        %v3984 = vsub.f32 %v3803, %v567
        %v3985 = vsub.f32 %v3807, %v563
        %v3986 = vsub.f32 %v3807, %v567
        %v3987 = vsub.f32 %v3811, %v563
        %v3988 = vsub.f32 %v3811, %v567
        %v3989 = vsub.f32 %v3815, %v563
        %v3990 = vsub.f32 %v3815, %v567
        %v3991 = vsub.f32 %v3819, %v563
        %v3992 = vsub.f32 %v3819, %v567
        %v3993 = vsub.f32 %v3823, %v563
        %v3994 = vsub.f32 %v3823, %v567
        %v3995 = vsub.f32 %v3827, %v563
        %v3996 = vsub.f32 %v3827, %v567
        %v3997 = vsub.f32 %v3831, %v563
        %v3998 = vsub.f32 %v3831, %v567
        %v3999 = vsub.f32 %v3835, %v563
        %v4000 = vsub.f32 %v3835, %v567
        %v4001 = vsub.f32 %v3839, %v563
        %v4002 = vsub.f32 %v3839, %v567
        %v4003 = vsub.f32 %v3843, %v563
        %v4004 = vsub.f32 %v3843, %v567
        %v4005 = vsub.f32 %v3847, %v563
        %v4006 = vsub.f32 %v3847, %v567
        %v4007 = vsub.f32 %v3851, %v563
        %v4008 = vsub.f32 %v3851, %v567
        %v4009 = vsub.f32 %v3855, %v563
        %v4010 = vsub.f32 %v3855, %v567
        %v4011 = vsub.f32 %v3859, %v563
        %v4012 = vsub.f32 %v3859, %v567
        %v4013 = vsub.f32 %v3863, %v563
        %v4014 = vsub.f32 %v3863, %v567
        %v4015 = vsub.f32 %v3867, %v563
        %v4016 = vsub.f32 %v3867, %v567
        %v4017 = vsub.f32 %v3871, %v563
        %v4018 = vsub.f32 %v3871, %v567
        %v4019 = vsub.f32 %v3875, %v563
        %v4020 = vsub.f32 %v3875, %v567
        %v4021 = vsub.f32 %v3879, %v563
        %v4022 = vsub.f32 %v3879, %v567
        %v4023 = vsub.f32 %v3883, %v563
        %v4024 = vsub.f32 %v3883, %v567
        %v4025 = vsub.f32 %v3887, %v563
        %v4026 = vsub.f32 %v3887, %v567
        %v4027 = vsub.f32 %v3891, %v563
        %v4028 = vsub.f32 %v3891, %v567
        %v4029 = vsub.f32 %v3895, %v563
        %v4030 = vsub.f32 %v3895, %v567
        %v4031 = vsub.f32 %v3899, %v563
        %v4032 = vsub.f32 %v3899, %v567
        %v4033 = vsub.f32 %v3903, %v563
        %v4034 = vsub.f32 %v3903, %v567
        %v4035 = vsub.f32 %v3907, %v563
        %v4036 = vsub.f32 %v3907, %v567
        %v4037 = vand.u32 2147483647, %v3909
        %v4038 = vand.u32 2147483647, %v3910
        %v4039 = vand.u32 2147483647, %v3911
        %v4040 = vand.u32 2147483647, %v3912
        %v4041 = vand.u32 2147483647, %v3913
        %v4042 = vand.u32 2147483647, %v3914
        %v4043 = vand.u32 2147483647, %v3915
        %v4044 = vand.u32 2147483647, %v3916
        %v4045 = vand.u32 2147483647, %v3917
        %v4046 = vand.u32 2147483647, %v3918
        %v4047 = vand.u32 2147483647, %v3919
        %v4048 = vand.u32 2147483647, %v3920
        %v4049 = vand.u32 2147483647, %v3921
        %v4050 = vand.u32 2147483647, %v3922
        %v4051 = vand.u32 2147483647, %v3923
        %v4052 = vand.u32 2147483647, %v3924
        %v4053 = vand.u32 2147483647, %v3925
        %v4054 = vand.u32 2147483647, %v3926
        %v4055 = vand.u32 2147483647, %v3927
        %v4056 = vand.u32 2147483647, %v3928
        %v4057 = vand.u32 2147483647, %v3929
        %v4058 = vand.u32 2147483647, %v3930
        %v4059 = vand.u32 2147483647, %v3931
        %v4060 = vand.u32 2147483647, %v3932
        %v4061 = vand.u32 2147483647, %v3933
        %v4062 = vand.u32 2147483647, %v3934
        %v4063 = vand.u32 2147483647, %v3935
        %v4064 = vand.u32 2147483647, %v3936
        %v4065 = vand.u32 2147483647, %v3937
        %v4066 = vand.u32 2147483647, %v3938
        %v4067 = vand.u32 2147483647, %v3939
        %v4068 = vand.u32 2147483647, %v3940
        %v4069 = vand.u32 2147483647, %v3941
        %v4070 = vand.u32 2147483647, %v3942
        %v4071 = vand.u32 2147483647, %v3943
        %v4072 = vand.u32 2147483647, %v3944
        %v4073 = vand.u32 2147483647, %v3945
        %v4074 = vand.u32 2147483647, %v3946
        %v4075 = vand.u32 2147483647, %v3947
        %v4076 = vand.u32 2147483647, %v3948
        %v4077 = vand.u32 2147483647, %v3949
        %v4078 = vand.u32 2147483647, %v3950
        %v4079 = vand.u32 2147483647, %v3951
        %v4080 = vand.u32 2147483647, %v3952
        %v4081 = vand.u32 2147483647, %v3953
        %v4082 = vand.u32 2147483647, %v3954
        %v4083 = vand.u32 2147483647, %v3955
        %v4084 = vand.u32 2147483647, %v3956
        %v4085 = vand.u32 2147483647, %v3957
        %v4086 = vand.u32 2147483647, %v3958
        %v4087 = vand.u32 2147483647, %v3959
        %v4088 = vand.u32 2147483647, %v3960
        %v4089 = vand.u32 2147483647, %v3961
        %v4090 = vand.u32 2147483647, %v3962
        %v4091 = vand.u32 2147483647, %v3963
        %v4092 = vand.u32 2147483647, %v3964
        %v4093 = vand.u32 2147483647, %v3965
        %v4094 = vand.u32 2147483647, %v3966
        %v4095 = vand.u32 2147483647, %v3967
        %v4096 = vand.u32 2147483647, %v3968
        %v4097 = vand.u32 2147483647, %v3969
        %v4098 = vand.u32 2147483647, %v3970
        %v4099 = vand.u32 2147483647, %v3971
        %v4100 = vand.u32 2147483647, %v3972
        %v4101 = vand.u32 2147483647, %v3973
        %v4102 = vand.u32 2147483647, %v3974
        %v4103 = vand.u32 2147483647, %v3975
        %v4104 = vand.u32 2147483647, %v3976
        %v4105 = vand.u32 2147483647, %v3977
        %v4106 = vand.u32 2147483647, %v3978
        %v4107 = vand.u32 2147483647, %v3979
        %v4108 = vand.u32 2147483647, %v3980
        %v4109 = vand.u32 2147483647, %v3981
        %v4110 = vand.u32 2147483647, %v3982
        %v4111 = vand.u32 2147483647, %v3983
        %v4112 = vand.u32 2147483647, %v3984
        %v4113 = vand.u32 2147483647, %v3985
        %v4114 = vand.u32 2147483647, %v3986
        %v4115 = vand.u32 2147483647, %v3987
        %v4116 = vand.u32 2147483647, %v3988
        %v4117 = vand.u32 2147483647, %v3989
        %v4118 = vand.u32 2147483647, %v3990
        %v4119 = vand.u32 2147483647, %v3991
        %v4120 = vand.u32 2147483647, %v3992
        %v4121 = vand.u32 2147483647, %v3993
        %v4122 = vand.u32 2147483647, %v3994
        %v4123 = vand.u32 2147483647, %v3995
        %v4124 = vand.u32 2147483647, %v3996
        %v4125 = vand.u32 2147483647, %v3997
        %v4126 = vand.u32 2147483647, %v3998
        %v4127 = vand.u32 2147483647, %v3999
        %v4128 = vand.u32 2147483647, %v4000
        %v4129 = vand.u32 2147483647, %v4001
        %v4130 = vand.u32 2147483647, %v4002
        %v4131 = vand.u32 2147483647, %v4003
        %v4132 = vand.u32 2147483647, %v4004
        %v4133 = vand.u32 2147483647, %v4005
        %v4134 = vand.u32 2147483647, %v4006
        %v4135 = vand.u32 2147483647, %v4007
        %v4136 = vand.u32 2147483647, %v4008
        %v4137 = vand.u32 2147483647, %v4009
        %v4138 = vand.u32 2147483647, %v4010
        %v4139 = vand.u32 2147483647, %v4011
        %v4140 = vand.u32 2147483647, %v4012
        %v4141 = vand.u32 2147483647, %v4013
        %v4142 = vand.u32 2147483647, %v4014
        %v4143 = vand.u32 2147483647, %v4015
        %v4144 = vand.u32 2147483647, %v4016
        %v4145 = vand.u32 2147483647, %v4017
        %v4146 = vand.u32 2147483647, %v4018
        %v4147 = vand.u32 2147483647, %v4019
        %v4148 = vand.u32 2147483647, %v4020
        %v4149 = vand.u32 2147483647, %v4021
        %v4150 = vand.u32 2147483647, %v4022
        %v4151 = vand.u32 2147483647, %v4023
        %v4152 = vand.u32 2147483647, %v4024
        %v4153 = vand.u32 2147483647, %v4025
        %v4154 = vand.u32 2147483647, %v4026
        %v4155 = vand.u32 2147483647, %v4027
        %v4156 = vand.u32 2147483647, %v4028
        %v4157 = vand.u32 2147483647, %v4029
        %v4158 = vand.u32 2147483647, %v4030
        %v4159 = vand.u32 2147483647, %v4031
        %v4160 = vand.u32 2147483647, %v4032
        %v4161 = vand.u32 2147483647, %v4033
        %v4162 = vand.u32 2147483647, %v4034
        %v4163 = vand.u32 2147483647, %v4035
        %v4164 = vand.u32 2147483647, %v4036
        %v4165 = vsub.f32 1.0, %v4037
        %v4166 = vsub.f32 1.0, %v4038
        %v4167 = vsub.f32 1.0, %v4039
        %v4168 = vsub.f32 1.0, %v4040
        %v4169 = vsub.f32 1.0, %v4041
        %v4170 = vsub.f32 1.0, %v4042
        %v4171 = vsub.f32 1.0, %v4043
        %v4172 = vsub.f32 1.0, %v4044
        %v4173 = vsub.f32 1.0, %v4045
        %v4174 = vsub.f32 1.0, %v4046
        %v4175 = vsub.f32 1.0, %v4047
        %v4176 = vsub.f32 1.0, %v4048
        %v4177 = vsub.f32 1.0, %v4049
        %v4178 = vsub.f32 1.0, %v4050
        %v4179 = vsub.f32 1.0, %v4051
        %v4180 = vsub.f32 1.0, %v4052
        %v4181 = vsub.f32 1.0, %v4053
        %v4182 = vsub.f32 1.0, %v4054
        %v4183 = vsub.f32 1.0, %v4055
        %v4184 = vsub.f32 1.0, %v4056
        %v4185 = vsub.f32 1.0, %v4057
        %v4186 = vsub.f32 1.0, %v4058
        %v4187 = vsub.f32 1.0, %v4059
        %v4188 = vsub.f32 1.0, %v4060
        %v4189 = vsub.f32 1.0, %v4061
        %v4190 = vsub.f32 1.0, %v4062
        %v4191 = vsub.f32 1.0, %v4063
        %v4192 = vsub.f32 1.0, %v4064
        %v4193 = vsub.f32 1.0, %v4065
        %v4194 = vsub.f32 1.0, %v4066
        %v4195 = vsub.f32 1.0, %v4067
        %v4196 = vsub.f32 1.0, %v4068
        %v4197 = vsub.f32 1.0, %v4069
        %v4198 = vsub.f32 1.0, %v4070
        %v4199 = vsub.f32 1.0, %v4071
        %v4200 = vsub.f32 1.0, %v4072
        %v4201 = vsub.f32 1.0, %v4073
        %v4202 = vsub.f32 1.0, %v4074
        %v4203 = vsub.f32 1.0, %v4075
        %v4204 = vsub.f32 1.0, %v4076
        %v4205 = vsub.f32 1.0, %v4077
        %v4206 = vsub.f32 1.0, %v4078
        %v4207 = vsub.f32 1.0, %v4079
        %v4208 = vsub.f32 1.0, %v4080
        %v4209 = vsub.f32 1.0, %v4081
        %v4210 = vsub.f32 1.0, %v4082
        %v4211 = vsub.f32 1.0, %v4083
        %v4212 = vsub.f32 1.0, %v4084
        %v4213 = vsub.f32 1.0, %v4085
        %v4214 = vsub.f32 1.0, %v4086
        %v4215 = vsub.f32 1.0, %v4087
        %v4216 = vsub.f32 1.0, %v4088
        %v4217 = vsub.f32 1.0, %v4089
        %v4218 = vsub.f32 1.0, %v4090
        %v4219 = vsub.f32 1.0, %v4091
        %v4220 = vsub.f32 1.0, %v4092
        %v4221 = vsub.f32 1.0, %v4093
        %v4222 = vsub.f32 1.0, %v4094
        %v4223 = vsub.f32 1.0, %v4095
        %v4224 = vsub.f32 1.0, %v4096
        %v4225 = vsub.f32 1.0, %v4097
        %v4226 = vsub.f32 1.0, %v4098
        %v4227 = vsub.f32 1.0, %v4099
        %v4228 = vsub.f32 1.0, %v4100
        %v4229 = vsub.f32 1.0, %v4101
        %v4230 = vsub.f32 1.0, %v4102
        %v4231 = vsub.f32 1.0, %v4103
        %v4232 = vsub.f32 1.0, %v4104
        %v4233 = vsub.f32 1.0, %v4105
        %v4234 = vsub.f32 1.0, %v4106
        %v4235 = vsub.f32 1.0, %v4107
        %v4236 = vsub.f32 1.0, %v4108
        %v4237 = vsub.f32 1.0, %v4109
        %v4238 = vsub.f32 1.0, %v4110
        %v4239 = vsub.f32 1.0, %v4111
        %v4240 = vsub.f32 1.0, %v4112
        %v4241 = vsub.f32 1.0, %v4113
        %v4242 = vsub.f32 1.0, %v4114
        %v4243 = vsub.f32 1.0, %v4115
        %v4244 = vsub.f32 1.0, %v4116
        %v4245 = vsub.f32 1.0, %v4117
        %v4246 = vsub.f32 1.0, %v4118
        %v4247 = vsub.f32 1.0, %v4119
        %v4248 = vsub.f32 1.0, %v4120
        %v4249 = vsub.f32 1.0, %v4121
        %v4250 = vsub.f32 1.0, %v4122
        %v4251 = vsub.f32 1.0, %v4123
        %v4252 = vsub.f32 1.0, %v4124
        %v4253 = vsub.f32 1.0, %v4125
        %v4254 = vsub.f32 1.0, %v4126
        %v4255 = vsub.f32 1.0, %v4127
        %v4256 = vsub.f32 1.0, %v4128
        %v4257 = vsub.f32 1.0, %v4129
        %v4258 = vsub.f32 1.0, %v4130
        %v4259 = vsub.f32 1.0, %v4131
        %v4260 = vsub.f32 1.0, %v4132
        %v4261 = vsub.f32 1.0, %v4133
        %v4262 = vsub.f32 1.0, %v4134
        %v4263 = vsub.f32 1.0, %v4135
        %v4264 = vsub.f32 1.0, %v4136
        %v4265 = vsub.f32 1.0, %v4137
        %v4266 = vsub.f32 1.0, %v4138
        %v4267 = vsub.f32 1.0, %v4139
        %v4268 = vsub.f32 1.0, %v4140
        %v4269 = vsub.f32 1.0, %v4141
        %v4270 = vsub.f32 1.0, %v4142
        %v4271 = vsub.f32 1.0, %v4143
        %v4272 = vsub.f32 1.0, %v4144
        %v4273 = vsub.f32 1.0, %v4145
        %v4274 = vsub.f32 1.0, %v4146
        %v4275 = vsub.f32 1.0, %v4147
        %v4276 = vsub.f32 1.0, %v4148
        %v4277 = vsub.f32 1.0, %v4149
        %v4278 = vsub.f32 1.0, %v4150
        %v4279 = vsub.f32 1.0, %v4151
        %v4280 = vsub.f32 1.0, %v4152
        %v4281 = vsub.f32 1.0, %v4153
        %v4282 = vsub.f32 1.0, %v4154
        %v4283 = vsub.f32 1.0, %v4155
        %v4284 = vsub.f32 1.0, %v4156
        %v4285 = vsub.f32 1.0, %v4157
        %v4286 = vsub.f32 1.0, %v4158
        %v4287 = vsub.f32 1.0, %v4159
        %v4288 = vsub.f32 1.0, %v4160
        %v4289 = vsub.f32 1.0, %v4161
        %v4290 = vsub.f32 1.0, %v4162
        %v4291 = vsub.f32 1.0, %v4163
        %v4292 = vsub.f32 1.0, %v4164
        %v4293 = vmax.f32 %v4165, 0.0
        %v4294 = vmax.f32 %v4166, 0.0
        %v4295 = vmax.f32 %v4167, 0.0
        %v4296 = vmax.f32 %v4168, 0.0
        %v4297 = vmax.f32 %v4169, 0.0
        %v4298 = vmax.f32 %v4170, 0.0
        %v4299 = vmax.f32 %v4171, 0.0
        %v4300 = vmax.f32 %v4172, 0.0
        %v4301 = vmax.f32 %v4173, 0.0
        %v4302 = vmax.f32 %v4174, 0.0
        %v4303 = vmax.f32 %v4175, 0.0
        %v4304 = vmax.f32 %v4176, 0.0
        %v4305 = vmax.f32 %v4177, 0.0
        %v4306 = vmax.f32 %v4178, 0.0
        %v4307 = vmax.f32 %v4179, 0.0
        %v4308 = vmax.f32 %v4180, 0.0
        %v4309 = vmax.f32 %v4181, 0.0
        %v4310 = vmax.f32 %v4182, 0.0
        %v4311 = vmax.f32 %v4183, 0.0
        %v4312 = vmax.f32 %v4184, 0.0
        %v4313 = vmax.f32 %v4185, 0.0
        %v4314 = vmax.f32 %v4186, 0.0
        %v4315 = vmax.f32 %v4187, 0.0
        %v4316 = vmax.f32 %v4188, 0.0
        %v4317 = vmax.f32 %v4189, 0.0
        %v4318 = vmax.f32 %v4190, 0.0
        %v4319 = vmax.f32 %v4191, 0.0
        %v4320 = vmax.f32 %v4192, 0.0
        %v4321 = vmax.f32 %v4193, 0.0
        %v4322 = vmax.f32 %v4194, 0.0
        %v4323 = vmax.f32 %v4195, 0.0
        %v4324 = vmax.f32 %v4196, 0.0
        %v4325 = vmax.f32 %v4197, 0.0
        %v4326 = vmax.f32 %v4198, 0.0
        %v4327 = vmax.f32 %v4199, 0.0
        %v4328 = vmax.f32 %v4200, 0.0
        %v4329 = vmax.f32 %v4201, 0.0
        %v4330 = vmax.f32 %v4202, 0.0
        %v4331 = vmax.f32 %v4203, 0.0
        %v4332 = vmax.f32 %v4204, 0.0
        %v4333 = vmax.f32 %v4205, 0.0
        %v4334 = vmax.f32 %v4206, 0.0
        %v4335 = vmax.f32 %v4207, 0.0
        %v4336 = vmax.f32 %v4208, 0.0
        %v4337 = vmax.f32 %v4209, 0.0
        %v4338 = vmax.f32 %v4210, 0.0
        %v4339 = vmax.f32 %v4211, 0.0
        %v4340 = vmax.f32 %v4212, 0.0
        %v4341 = vmax.f32 %v4213, 0.0
        %v4342 = vmax.f32 %v4214, 0.0
        %v4343 = vmax.f32 %v4215, 0.0
        %v4344 = vmax.f32 %v4216, 0.0
        %v4345 = vmax.f32 %v4217, 0.0
        %v4346 = vmax.f32 %v4218, 0.0
        %v4347 = vmax.f32 %v4219, 0.0
        %v4348 = vmax.f32 %v4220, 0.0
        %v4349 = vmax.f32 %v4221, 0.0
        %v4350 = vmax.f32 %v4222, 0.0
        %v4351 = vmax.f32 %v4223, 0.0
        %v4352 = vmax.f32 %v4224, 0.0
        %v4353 = vmax.f32 %v4225, 0.0
        %v4354 = vmax.f32 %v4226, 0.0
        %v4355 = vmax.f32 %v4227, 0.0
        %v4356 = vmax.f32 %v4228, 0.0
        %v4357 = vmax.f32 %v4229, 0.0
        %v4358 = vmax.f32 %v4230, 0.0
        %v4359 = vmax.f32 %v4231, 0.0
        %v4360 = vmax.f32 %v4232, 0.0
        %v4361 = vmax.f32 %v4233, 0.0
        %v4362 = vmax.f32 %v4234, 0.0
        %v4363 = vmax.f32 %v4235, 0.0
        %v4364 = vmax.f32 %v4236, 0.0
        %v4365 = vmax.f32 %v4237, 0.0
        %v4366 = vmax.f32 %v4238, 0.0
        %v4367 = vmax.f32 %v4239, 0.0
        %v4368 = vmax.f32 %v4240, 0.0
        %v4369 = vmax.f32 %v4241, 0.0
        %v4370 = vmax.f32 %v4242, 0.0
        %v4371 = vmax.f32 %v4243, 0.0
        %v4372 = vmax.f32 %v4244, 0.0
        %v4373 = vmax.f32 %v4245, 0.0
        %v4374 = vmax.f32 %v4246, 0.0
        %v4375 = vmax.f32 %v4247, 0.0
        %v4376 = vmax.f32 %v4248, 0.0
        %v4377 = vmax.f32 %v4249, 0.0
        %v4378 = vmax.f32 %v4250, 0.0
        %v4379 = vmax.f32 %v4251, 0.0
        %v4380 = vmax.f32 %v4252, 0.0
        %v4381 = vmax.f32 %v4253, 0.0
        %v4382 = vmax.f32 %v4254, 0.0
        %v4383 = vmax.f32 %v4255, 0.0
        %v4384 = vmax.f32 %v4256, 0.0
        %v4385 = vmax.f32 %v4257, 0.0
        %v4386 = vmax.f32 %v4258, 0.0
        %v4387 = vmax.f32 %v4259, 0.0
        %v4388 = vmax.f32 %v4260, 0.0
        %v4389 = vmax.f32 %v4261, 0.0
        %v4390 = vmax.f32 %v4262, 0.0
        %v4391 = vmax.f32 %v4263, 0.0
        %v4392 = vmax.f32 %v4264, 0.0
        %v4393 = vmax.f32 %v4265, 0.0
        %v4394 = vmax.f32 %v4266, 0.0
        %v4395 = vmax.f32 %v4267, 0.0
        %v4396 = vmax.f32 %v4268, 0.0
        %v4397 = vmax.f32 %v4269, 0.0
        %v4398 = vmax.f32 %v4270, 0.0
        %v4399 = vmax.f32 %v4271, 0.0
        %v4400 = vmax.f32 %v4272, 0.0
        %v4401 = vmax.f32 %v4273, 0.0
        %v4402 = vmax.f32 %v4274, 0.0
        %v4403 = vmax.f32 %v4275, 0.0
        %v4404 = vmax.f32 %v4276, 0.0
        %v4405 = vmax.f32 %v4277, 0.0
        %v4406 = vmax.f32 %v4278, 0.0
        %v4407 = vmax.f32 %v4279, 0.0
        %v4408 = vmax.f32 %v4280, 0.0
        %v4409 = vmax.f32 %v4281, 0.0
        %v4410 = vmax.f32 %v4282, 0.0
        %v4411 = vmax.f32 %v4283, 0.0
        %v4412 = vmax.f32 %v4284, 0.0
        %v4413 = vmax.f32 %v4285, 0.0
        %v4414 = vmax.f32 %v4286, 0.0
        %v4415 = vmax.f32 %v4287, 0.0
        %v4416 = vmax.f32 %v4288, 0.0
        %v4417 = vmax.f32 %v4289, 0.0
        %v4418 = vmax.f32 %v4290, 0.0
        %v4419 = vmax.f32 %v4291, 0.0
        %v4420 = vmax.f32 %v4292, 0.0
        %4421 = vset.pattern.permute.xlu0 4
        %4422 = vperm.xlu0 %4421, %v172
        %v4423 = vpop.permute.xlu0 %4422
        %4425 = vset.pattern.permute.xlu0 4
        %4426 = vperm.xlu0 %4425, %v173
        %v4427 = vpop.permute.xlu0 %4426
        %4429 = vset.pattern.permute.xlu0 4
        %4430 = vperm.xlu0 %4429, %v174
        %v4431 = vpop.permute.xlu0 %4430
        %4433 = vset.pattern.permute.xlu0 4
        %4434 = vperm.xlu0 %4433, %v175
        %v4435 = vpop.permute.xlu0 %4434
        %4437 = vset.pattern.permute.xlu0 4
        %4438 = vperm.xlu0 %4437, %v176
        %v4439 = vpop.permute.xlu0 %4438
        %4441 = vset.pattern.permute.xlu0 4
        %4442 = vperm.xlu0 %4441, %v177
        %v4443 = vpop.permute.xlu0 %4442
        %4445 = vset.pattern.permute.xlu0 4
        %4446 = vperm.xlu0 %4445, %v178
        %v4447 = vpop.permute.xlu0 %4446
        %4449 = vset.pattern.permute.xlu0 4
        %4450 = vperm.xlu0 %4449, %v179
        %v4451 = vpop.permute.xlu0 %4450
        %4453 = vset.pattern.permute.xlu0 4
        %4454 = vperm.xlu0 %4453, %v180
        %v4455 = vpop.permute.xlu0 %4454
        %4457 = vset.pattern.permute.xlu0 4
        %4458 = vperm.xlu0 %4457, %v181
        %v4459 = vpop.permute.xlu0 %4458
        %4461 = vset.pattern.permute.xlu0 4
        %4462 = vperm.xlu0 %4461, %v182
        %v4463 = vpop.permute.xlu0 %4462
        %4465 = vset.pattern.permute.xlu0 4
        %4466 = vperm.xlu0 %4465, %v183
        %v4467 = vpop.permute.xlu0 %4466
        %4469 = vset.pattern.permute.xlu0 4
        %4470 = vperm.xlu0 %4469, %v184
        %v4471 = vpop.permute.xlu0 %4470
        %4473 = vset.pattern.permute.xlu0 4
        %4474 = vperm.xlu0 %4473, %v185
        %v4475 = vpop.permute.xlu0 %4474
        %4477 = vset.pattern.permute.xlu0 4
        %4478 = vperm.xlu0 %4477, %v186
        %v4479 = vpop.permute.xlu0 %4478
        %4481 = vset.pattern.permute.xlu0 4
        %4482 = vperm.xlu0 %4481, %v187
        %v4483 = vpop.permute.xlu0 %4482
        %4485 = vset.pattern.permute.xlu0 4
        %4486 = vperm.xlu0 %4485, %v188
        %v4487 = vpop.permute.xlu0 %4486
        %4489 = vset.pattern.permute.xlu0 4
        %4490 = vperm.xlu0 %4489, %v189
        %v4491 = vpop.permute.xlu0 %4490
        %4493 = vset.pattern.permute.xlu0 4
        %4494 = vperm.xlu0 %4493, %v190
        %v4495 = vpop.permute.xlu0 %4494
        %4497 = vset.pattern.permute.xlu0 4
        %4498 = vperm.xlu0 %4497, %v191
        %v4499 = vpop.permute.xlu0 %4498
        %4501 = vset.pattern.permute.xlu0 4
        %4502 = vperm.xlu0 %4501, %v192
        %v4503 = vpop.permute.xlu0 %4502
        %4505 = vset.pattern.permute.xlu0 4
        %4506 = vperm.xlu0 %4505, %v193
        %v4507 = vpop.permute.xlu0 %4506
        %4509 = vset.pattern.permute.xlu0 4
        %4510 = vperm.xlu0 %4509, %v194
        %v4511 = vpop.permute.xlu0 %4510
        %4513 = vset.pattern.permute.xlu0 4
        %4514 = vperm.xlu0 %4513, %v195
        %v4515 = vpop.permute.xlu0 %4514
        %4517 = vset.pattern.permute.xlu0 4
        %4518 = vperm.xlu0 %4517, %v196
        %v4519 = vpop.permute.xlu0 %4518
        %4521 = vset.pattern.permute.xlu0 4
        %4522 = vperm.xlu0 %4521, %v197
        %v4523 = vpop.permute.xlu0 %4522
        %4525 = vset.pattern.permute.xlu0 4
        %4526 = vperm.xlu0 %4525, %v198
        %v4527 = vpop.permute.xlu0 %4526
        %4529 = vset.pattern.permute.xlu0 4
        %4530 = vperm.xlu0 %4529, %v199
        %v4531 = vpop.permute.xlu0 %4530
        %4533 = vset.pattern.permute.xlu0 4
        %4534 = vperm.xlu0 %4533, %v200
        %v4535 = vpop.permute.xlu0 %4534
        %4537 = vset.pattern.permute.xlu0 4
        %4538 = vperm.xlu0 %4537, %v201
        %v4539 = vpop.permute.xlu0 %4538
        %4541 = vset.pattern.permute.xlu0 4
        %4542 = vperm.xlu0 %4541, %v202
        %v4543 = vpop.permute.xlu0 %4542
        %4545 = vset.pattern.permute.xlu0 4
        %4546 = vperm.xlu0 %4545, %v203
        %v4547 = vpop.permute.xlu0 %4546
        %4549 = vset.pattern.permute.xlu0 4
        %4550 = vperm.xlu0 %4549, %v204
        %v4551 = vpop.permute.xlu0 %4550
        %4553 = vset.pattern.permute.xlu0 4
        %4554 = vperm.xlu0 %4553, %v205
        %v4555 = vpop.permute.xlu0 %4554
        %4557 = vset.pattern.permute.xlu0 4
        %4558 = vperm.xlu0 %4557, %v206
        %v4559 = vpop.permute.xlu0 %4558
        %4561 = vset.pattern.permute.xlu0 4
        %4562 = vperm.xlu0 %4561, %v207
        %v4563 = vpop.permute.xlu0 %4562
        %4565 = vset.pattern.permute.xlu0 4
        %4566 = vperm.xlu0 %4565, %v208
        %v4567 = vpop.permute.xlu0 %4566
        %4569 = vset.pattern.permute.xlu0 4
        %4570 = vperm.xlu0 %4569, %v209
        %v4571 = vpop.permute.xlu0 %4570
        %4573 = vset.pattern.permute.xlu0 4
        %4574 = vperm.xlu0 %4573, %v210
        %v4575 = vpop.permute.xlu0 %4574
        %4577 = vset.pattern.permute.xlu0 4
        %4578 = vperm.xlu0 %4577, %v211
        %v4579 = vpop.permute.xlu0 %4578
        %4581 = vset.pattern.permute.xlu0 4
        %4582 = vperm.xlu0 %4581, %v212
        %v4583 = vpop.permute.xlu0 %4582
        %4585 = vset.pattern.permute.xlu0 4
        %4586 = vperm.xlu0 %4585, %v213
        %v4587 = vpop.permute.xlu0 %4586
        %4589 = vset.pattern.permute.xlu0 4
        %4590 = vperm.xlu0 %4589, %v214
        %v4591 = vpop.permute.xlu0 %4590
        %4593 = vset.pattern.permute.xlu0 4
        %4594 = vperm.xlu0 %4593, %v215
        %v4595 = vpop.permute.xlu0 %4594
        %4597 = vset.pattern.permute.xlu0 4
        %4598 = vperm.xlu0 %4597, %v216
        %v4599 = vpop.permute.xlu0 %4598
        %4601 = vset.pattern.permute.xlu0 4
        %4602 = vperm.xlu0 %4601, %v217
        %v4603 = vpop.permute.xlu0 %4602
        %4605 = vset.pattern.permute.xlu0 4
        %4606 = vperm.xlu0 %4605, %v218
        %v4607 = vpop.permute.xlu0 %4606
        %4609 = vset.pattern.permute.xlu0 4
        %4610 = vperm.xlu0 %4609, %v219
        %v4611 = vpop.permute.xlu0 %4610
        %4613 = vset.pattern.permute.xlu0 4
        %4614 = vperm.xlu0 %4613, %v220
        %v4615 = vpop.permute.xlu0 %4614
        %4617 = vset.pattern.permute.xlu0 4
        %4618 = vperm.xlu0 %4617, %v221
        %v4619 = vpop.permute.xlu0 %4618
        %4621 = vset.pattern.permute.xlu0 4
        %4622 = vperm.xlu0 %4621, %v222
        %v4623 = vpop.permute.xlu0 %4622
        %4625 = vset.pattern.permute.xlu0 4
        %4626 = vperm.xlu0 %4625, %v223
        %v4627 = vpop.permute.xlu0 %4626
        %4629 = vset.pattern.permute.xlu0 4
        %4630 = vperm.xlu0 %4629, %v224
        %v4631 = vpop.permute.xlu0 %4630
        %4633 = vset.pattern.permute.xlu0 4
        %4634 = vperm.xlu0 %4633, %v225
        %v4635 = vpop.permute.xlu0 %4634
        %4637 = vset.pattern.permute.xlu0 4
        %4638 = vperm.xlu0 %4637, %v226
        %v4639 = vpop.permute.xlu0 %4638
        %4641 = vset.pattern.permute.xlu0 4
        %4642 = vperm.xlu0 %4641, %v227
        %v4643 = vpop.permute.xlu0 %4642
        %4645 = vset.pattern.permute.xlu0 4
        %4646 = vperm.xlu0 %4645, %v228
        %v4647 = vpop.permute.xlu0 %4646
        %4649 = vset.pattern.permute.xlu0 4
        %4650 = vperm.xlu0 %4649, %v229
        %v4651 = vpop.permute.xlu0 %4650
        %4653 = vset.pattern.permute.xlu0 4
        %4654 = vperm.xlu0 %4653, %v230
        %v4655 = vpop.permute.xlu0 %4654
        %4657 = vset.pattern.permute.xlu0 4
        %4658 = vperm.xlu0 %4657, %v231
        %v4659 = vpop.permute.xlu0 %4658
        %4661 = vset.pattern.permute.xlu0 4
        %4662 = vperm.xlu0 %4661, %v232
        %v4663 = vpop.permute.xlu0 %4662
        %4665 = vset.pattern.permute.xlu0 4
        %4666 = vperm.xlu0 %4665, %v233
        %v4667 = vpop.permute.xlu0 %4666
        %4669 = vset.pattern.permute.xlu0 4
        %4670 = vperm.xlu0 %4669, %v234
        %v4671 = vpop.permute.xlu0 %4670
        %4673 = vset.pattern.permute.xlu0 4
        %4674 = vperm.xlu0 %4673, %v235
        %v4675 = vpop.permute.xlu0 %4674
        %v4677 = vsub.f32 %v4423, %v1342
        %v4678 = vsub.f32 %v4423, %v1346
        %v4679 = vsub.f32 %v4427, %v1342
        %v4680 = vsub.f32 %v4427, %v1346
        %v4681 = vsub.f32 %v4431, %v1342
        %v4682 = vsub.f32 %v4431, %v1346
        %v4683 = vsub.f32 %v4435, %v1342
        %v4684 = vsub.f32 %v4435, %v1346
        %v4685 = vsub.f32 %v4439, %v1342
        %v4686 = vsub.f32 %v4439, %v1346
        %v4687 = vsub.f32 %v4443, %v1342
        %v4688 = vsub.f32 %v4443, %v1346
        %v4689 = vsub.f32 %v4447, %v1342
        %v4690 = vsub.f32 %v4447, %v1346
        %v4691 = vsub.f32 %v4451, %v1342
        %v4692 = vsub.f32 %v4451, %v1346
        %v4693 = vsub.f32 %v4455, %v1342
        %v4694 = vsub.f32 %v4455, %v1346
        %v4695 = vsub.f32 %v4459, %v1342
        %v4696 = vsub.f32 %v4459, %v1346
        %v4697 = vsub.f32 %v4463, %v1342
        %v4698 = vsub.f32 %v4463, %v1346
        %v4699 = vsub.f32 %v4467, %v1342
        %v4700 = vsub.f32 %v4467, %v1346
        %v4701 = vsub.f32 %v4471, %v1342
        %v4702 = vsub.f32 %v4471, %v1346
        %v4703 = vsub.f32 %v4475, %v1342
        %v4704 = vsub.f32 %v4475, %v1346
        %v4705 = vsub.f32 %v4479, %v1342
        %v4706 = vsub.f32 %v4479, %v1346
        %v4707 = vsub.f32 %v4483, %v1342
        %v4708 = vsub.f32 %v4483, %v1346
        %v4709 = vsub.f32 %v4487, %v1342
        %v4710 = vsub.f32 %v4487, %v1346
        %v4711 = vsub.f32 %v4491, %v1342
        %v4712 = vsub.f32 %v4491, %v1346
        %v4713 = vsub.f32 %v4495, %v1342
        %v4714 = vsub.f32 %v4495, %v1346
        %v4715 = vsub.f32 %v4499, %v1342
        %v4716 = vsub.f32 %v4499, %v1346
        %v4717 = vsub.f32 %v4503, %v1342
        %v4718 = vsub.f32 %v4503, %v1346
        %v4719 = vsub.f32 %v4507, %v1342
        %v4720 = vsub.f32 %v4507, %v1346
        %v4721 = vsub.f32 %v4511, %v1342
        %v4722 = vsub.f32 %v4511, %v1346
        %v4723 = vsub.f32 %v4515, %v1342
        %v4724 = vsub.f32 %v4515, %v1346
        %v4725 = vsub.f32 %v4519, %v1342
        %v4726 = vsub.f32 %v4519, %v1346
        %v4727 = vsub.f32 %v4523, %v1342
        %v4728 = vsub.f32 %v4523, %v1346
        %v4729 = vsub.f32 %v4527, %v1342
        %v4730 = vsub.f32 %v4527, %v1346
        %v4731 = vsub.f32 %v4531, %v1342
        %v4732 = vsub.f32 %v4531, %v1346
        %v4733 = vsub.f32 %v4535, %v1342
        %v4734 = vsub.f32 %v4535, %v1346
        %v4735 = vsub.f32 %v4539, %v1342
        %v4736 = vsub.f32 %v4539, %v1346
        %v4737 = vsub.f32 %v4543, %v1342
        %v4738 = vsub.f32 %v4543, %v1346
        %v4739 = vsub.f32 %v4547, %v1342
        %v4740 = vsub.f32 %v4547, %v1346
        %v4741 = vsub.f32 %v4551, %v1342
        %v4742 = vsub.f32 %v4551, %v1346
        %v4743 = vsub.f32 %v4555, %v1342
        %v4744 = vsub.f32 %v4555, %v1346
        %v4745 = vsub.f32 %v4559, %v1342
        %v4746 = vsub.f32 %v4559, %v1346
        %v4747 = vsub.f32 %v4563, %v1342
        %v4748 = vsub.f32 %v4563, %v1346
        %v4749 = vsub.f32 %v4567, %v1342
        %v4750 = vsub.f32 %v4567, %v1346
        %v4751 = vsub.f32 %v4571, %v1342
        %v4752 = vsub.f32 %v4571, %v1346
        %v4753 = vsub.f32 %v4575, %v1342
        %v4754 = vsub.f32 %v4575, %v1346
        %v4755 = vsub.f32 %v4579, %v1342
        %v4756 = vsub.f32 %v4579, %v1346
        %v4757 = vsub.f32 %v4583, %v1342
        %v4758 = vsub.f32 %v4583, %v1346
        %v4759 = vsub.f32 %v4587, %v1342
        %v4760 = vsub.f32 %v4587, %v1346
        %v4761 = vsub.f32 %v4591, %v1342
        %v4762 = vsub.f32 %v4591, %v1346
        %v4763 = vsub.f32 %v4595, %v1342
        %v4764 = vsub.f32 %v4595, %v1346
        %v4765 = vsub.f32 %v4599, %v1342
        %v4766 = vsub.f32 %v4599, %v1346
        %v4767 = vsub.f32 %v4603, %v1342
        %v4768 = vsub.f32 %v4603, %v1346
        %v4769 = vsub.f32 %v4607, %v1342
        %v4770 = vsub.f32 %v4607, %v1346
        %v4771 = vsub.f32 %v4611, %v1342
        %v4772 = vsub.f32 %v4611, %v1346
        %v4773 = vsub.f32 %v4615, %v1342
        %v4774 = vsub.f32 %v4615, %v1346
        %v4775 = vsub.f32 %v4619, %v1342
        %v4776 = vsub.f32 %v4619, %v1346
        %v4777 = vsub.f32 %v4623, %v1342
        %v4778 = vsub.f32 %v4623, %v1346
        %v4779 = vsub.f32 %v4627, %v1342
        %v4780 = vsub.f32 %v4627, %v1346
        %v4781 = vsub.f32 %v4631, %v1342
        %v4782 = vsub.f32 %v4631, %v1346
        %v4783 = vsub.f32 %v4635, %v1342
        %v4784 = vsub.f32 %v4635, %v1346
        %v4785 = vsub.f32 %v4639, %v1342
        %v4786 = vsub.f32 %v4639, %v1346
        %v4787 = vsub.f32 %v4643, %v1342
        %v4788 = vsub.f32 %v4643, %v1346
        %v4789 = vsub.f32 %v4647, %v1342
        %v4790 = vsub.f32 %v4647, %v1346
        %v4791 = vsub.f32 %v4651, %v1342
        %v4792 = vsub.f32 %v4651, %v1346
        %v4793 = vsub.f32 %v4655, %v1342
        %v4794 = vsub.f32 %v4655, %v1346
        %v4795 = vsub.f32 %v4659, %v1342
        %v4796 = vsub.f32 %v4659, %v1346
        %v4797 = vsub.f32 %v4663, %v1342
        %v4798 = vsub.f32 %v4663, %v1346
        %v4799 = vsub.f32 %v4667, %v1342
        %v4800 = vsub.f32 %v4667, %v1346
        %v4801 = vsub.f32 %v4671, %v1342
        %v4802 = vsub.f32 %v4671, %v1346
        %v4803 = vsub.f32 %v4675, %v1342
        %v4804 = vsub.f32 %v4675, %v1346
        %v4805 = vand.u32 2147483647, %v4677
        %v4806 = vand.u32 2147483647, %v4678
        %v4807 = vand.u32 2147483647, %v4679
        %v4808 = vand.u32 2147483647, %v4680
        %v4809 = vand.u32 2147483647, %v4681
        %v4810 = vand.u32 2147483647, %v4682
        %v4811 = vand.u32 2147483647, %v4683
        %v4812 = vand.u32 2147483647, %v4684
        %v4813 = vand.u32 2147483647, %v4685
        %v4814 = vand.u32 2147483647, %v4686
        %v4815 = vand.u32 2147483647, %v4687
        %v4816 = vand.u32 2147483647, %v4688
        %v4817 = vand.u32 2147483647, %v4689
        %v4818 = vand.u32 2147483647, %v4690
        %v4819 = vand.u32 2147483647, %v4691
        %v4820 = vand.u32 2147483647, %v4692
        %v4821 = vand.u32 2147483647, %v4693
        %v4822 = vand.u32 2147483647, %v4694
        %v4823 = vand.u32 2147483647, %v4695
        %v4824 = vand.u32 2147483647, %v4696
        %v4825 = vand.u32 2147483647, %v4697
        %v4826 = vand.u32 2147483647, %v4698
        %v4827 = vand.u32 2147483647, %v4699
        %v4828 = vand.u32 2147483647, %v4700
        %v4829 = vand.u32 2147483647, %v4701
        %v4830 = vand.u32 2147483647, %v4702
        %v4831 = vand.u32 2147483647, %v4703
        %v4832 = vand.u32 2147483647, %v4704
        %v4833 = vand.u32 2147483647, %v4705
        %v4834 = vand.u32 2147483647, %v4706
        %v4835 = vand.u32 2147483647, %v4707
        %v4836 = vand.u32 2147483647, %v4708
        %v4837 = vand.u32 2147483647, %v4709
        %v4838 = vand.u32 2147483647, %v4710
        %v4839 = vand.u32 2147483647, %v4711
        %v4840 = vand.u32 2147483647, %v4712
        %v4841 = vand.u32 2147483647, %v4713
        %v4842 = vand.u32 2147483647, %v4714
        %v4843 = vand.u32 2147483647, %v4715
        %v4844 = vand.u32 2147483647, %v4716
        %v4845 = vand.u32 2147483647, %v4717
        %v4846 = vand.u32 2147483647, %v4718
        %v4847 = vand.u32 2147483647, %v4719
        %v4848 = vand.u32 2147483647, %v4720
        %v4849 = vand.u32 2147483647, %v4721
        %v4850 = vand.u32 2147483647, %v4722
        %v4851 = vand.u32 2147483647, %v4723
        %v4852 = vand.u32 2147483647, %v4724
        %v4853 = vand.u32 2147483647, %v4725
        %v4854 = vand.u32 2147483647, %v4726
        %v4855 = vand.u32 2147483647, %v4727
        %v4856 = vand.u32 2147483647, %v4728
        %v4857 = vand.u32 2147483647, %v4729
        %v4858 = vand.u32 2147483647, %v4730
        %v4859 = vand.u32 2147483647, %v4731
        %v4860 = vand.u32 2147483647, %v4732
        %v4861 = vand.u32 2147483647, %v4733
        %v4862 = vand.u32 2147483647, %v4734
        %v4863 = vand.u32 2147483647, %v4735
        %v4864 = vand.u32 2147483647, %v4736
        %v4865 = vand.u32 2147483647, %v4737
        %v4866 = vand.u32 2147483647, %v4738
        %v4867 = vand.u32 2147483647, %v4739
        %v4868 = vand.u32 2147483647, %v4740
        %v4869 = vand.u32 2147483647, %v4741
        %v4870 = vand.u32 2147483647, %v4742
        %v4871 = vand.u32 2147483647, %v4743
        %v4872 = vand.u32 2147483647, %v4744
        %v4873 = vand.u32 2147483647, %v4745
        %v4874 = vand.u32 2147483647, %v4746
        %v4875 = vand.u32 2147483647, %v4747
        %v4876 = vand.u32 2147483647, %v4748
        %v4877 = vand.u32 2147483647, %v4749
        %v4878 = vand.u32 2147483647, %v4750
        %v4879 = vand.u32 2147483647, %v4751
        %v4880 = vand.u32 2147483647, %v4752
        %v4881 = vand.u32 2147483647, %v4753
        %v4882 = vand.u32 2147483647, %v4754
        %v4883 = vand.u32 2147483647, %v4755
        %v4884 = vand.u32 2147483647, %v4756
        %v4885 = vand.u32 2147483647, %v4757
        %v4886 = vand.u32 2147483647, %v4758
        %v4887 = vand.u32 2147483647, %v4759
        %v4888 = vand.u32 2147483647, %v4760
        %v4889 = vand.u32 2147483647, %v4761
        %v4890 = vand.u32 2147483647, %v4762
        %v4891 = vand.u32 2147483647, %v4763
        %v4892 = vand.u32 2147483647, %v4764
        %v4893 = vand.u32 2147483647, %v4765
        %v4894 = vand.u32 2147483647, %v4766
        %v4895 = vand.u32 2147483647, %v4767
        %v4896 = vand.u32 2147483647, %v4768
        %v4897 = vand.u32 2147483647, %v4769
        %v4898 = vand.u32 2147483647, %v4770
        %v4899 = vand.u32 2147483647, %v4771
        %v4900 = vand.u32 2147483647, %v4772
        %v4901 = vand.u32 2147483647, %v4773
        %v4902 = vand.u32 2147483647, %v4774
        %v4903 = vand.u32 2147483647, %v4775
        %v4904 = vand.u32 2147483647, %v4776
        %v4905 = vand.u32 2147483647, %v4777
        %v4906 = vand.u32 2147483647, %v4778
        %v4907 = vand.u32 2147483647, %v4779
        %v4908 = vand.u32 2147483647, %v4780
        %v4909 = vand.u32 2147483647, %v4781
        %v4910 = vand.u32 2147483647, %v4782
        %v4911 = vand.u32 2147483647, %v4783
        %v4912 = vand.u32 2147483647, %v4784
        %v4913 = vand.u32 2147483647, %v4785
        %v4914 = vand.u32 2147483647, %v4786
        %v4915 = vand.u32 2147483647, %v4787
        %v4916 = vand.u32 2147483647, %v4788
        %v4917 = vand.u32 2147483647, %v4789
        %v4918 = vand.u32 2147483647, %v4790
        %v4919 = vand.u32 2147483647, %v4791
        %v4920 = vand.u32 2147483647, %v4792
        %v4921 = vand.u32 2147483647, %v4793
        %v4922 = vand.u32 2147483647, %v4794
        %v4923 = vand.u32 2147483647, %v4795
        %v4924 = vand.u32 2147483647, %v4796
        %v4925 = vand.u32 2147483647, %v4797
        %v4926 = vand.u32 2147483647, %v4798
        %v4927 = vand.u32 2147483647, %v4799
        %v4928 = vand.u32 2147483647, %v4800
        %v4929 = vand.u32 2147483647, %v4801
        %v4930 = vand.u32 2147483647, %v4802
        %v4931 = vand.u32 2147483647, %v4803
        %v4932 = vand.u32 2147483647, %v4804
        %v4933 = vsub.f32 1.0, %v4805
        %v4934 = vsub.f32 1.0, %v4806
        %v4935 = vsub.f32 1.0, %v4807
        %v4936 = vsub.f32 1.0, %v4808
        %v4937 = vsub.f32 1.0, %v4809
        %v4938 = vsub.f32 1.0, %v4810
        %v4939 = vsub.f32 1.0, %v4811
        %v4940 = vsub.f32 1.0, %v4812
        %v4941 = vsub.f32 1.0, %v4813
        %v4942 = vsub.f32 1.0, %v4814
        %v4943 = vsub.f32 1.0, %v4815
        %v4944 = vsub.f32 1.0, %v4816
        %v4945 = vsub.f32 1.0, %v4817
        %v4946 = vsub.f32 1.0, %v4818
        %v4947 = vsub.f32 1.0, %v4819
        %v4948 = vsub.f32 1.0, %v4820
        %v4949 = vsub.f32 1.0, %v4821
        %v4950 = vsub.f32 1.0, %v4822
        %v4951 = vsub.f32 1.0, %v4823
        %v4952 = vsub.f32 1.0, %v4824
        %v4953 = vsub.f32 1.0, %v4825
        %v4954 = vsub.f32 1.0, %v4826
        %v4955 = vsub.f32 1.0, %v4827
        %v4956 = vsub.f32 1.0, %v4828
        %v4957 = vsub.f32 1.0, %v4829
        %v4958 = vsub.f32 1.0, %v4830
        %v4959 = vsub.f32 1.0, %v4831
        %v4960 = vsub.f32 1.0, %v4832
        %v4961 = vsub.f32 1.0, %v4833
        %v4962 = vsub.f32 1.0, %v4834
        %v4963 = vsub.f32 1.0, %v4835
        %v4964 = vsub.f32 1.0, %v4836
        %v4965 = vsub.f32 1.0, %v4837
        %v4966 = vsub.f32 1.0, %v4838
        %v4967 = vsub.f32 1.0, %v4839
        %v4968 = vsub.f32 1.0, %v4840
        %v4969 = vsub.f32 1.0, %v4841
        %v4970 = vsub.f32 1.0, %v4842
        %v4971 = vsub.f32 1.0, %v4843
        %v4972 = vsub.f32 1.0, %v4844
        %v4973 = vsub.f32 1.0, %v4845
        %v4974 = vsub.f32 1.0, %v4846
        %v4975 = vsub.f32 1.0, %v4847
        %v4976 = vsub.f32 1.0, %v4848
        %v4977 = vsub.f32 1.0, %v4849
        %v4978 = vsub.f32 1.0, %v4850
        %v4979 = vsub.f32 1.0, %v4851
        %v4980 = vsub.f32 1.0, %v4852
        %v4981 = vsub.f32 1.0, %v4853
        %v4982 = vsub.f32 1.0, %v4854
        %v4983 = vsub.f32 1.0, %v4855
        %v4984 = vsub.f32 1.0, %v4856
        %v4985 = vsub.f32 1.0, %v4857
        %v4986 = vsub.f32 1.0, %v4858
        %v4987 = vsub.f32 1.0, %v4859
        %v4988 = vsub.f32 1.0, %v4860
        %v4989 = vsub.f32 1.0, %v4861
        %v4990 = vsub.f32 1.0, %v4862
        %v4991 = vsub.f32 1.0, %v4863
        %v4992 = vsub.f32 1.0, %v4864
        %v4993 = vsub.f32 1.0, %v4865
        %v4994 = vsub.f32 1.0, %v4866
        %v4995 = vsub.f32 1.0, %v4867
        %v4996 = vsub.f32 1.0, %v4868
        %v4997 = vsub.f32 1.0, %v4869
        %v4998 = vsub.f32 1.0, %v4870
        %v4999 = vsub.f32 1.0, %v4871
        %v5000 = vsub.f32 1.0, %v4872
        %v5001 = vsub.f32 1.0, %v4873
        %v5002 = vsub.f32 1.0, %v4874
        %v5003 = vsub.f32 1.0, %v4875
        %v5004 = vsub.f32 1.0, %v4876
        %v5005 = vsub.f32 1.0, %v4877
        %v5006 = vsub.f32 1.0, %v4878
        %v5007 = vsub.f32 1.0, %v4879
        %v5008 = vsub.f32 1.0, %v4880
        %v5009 = vsub.f32 1.0, %v4881
        %v5010 = vsub.f32 1.0, %v4882
        %v5011 = vsub.f32 1.0, %v4883
        %v5012 = vsub.f32 1.0, %v4884
        %v5013 = vsub.f32 1.0, %v4885
        %v5014 = vsub.f32 1.0, %v4886
        %v5015 = vsub.f32 1.0, %v4887
        %v5016 = vsub.f32 1.0, %v4888
        %v5017 = vsub.f32 1.0, %v4889
        %v5018 = vsub.f32 1.0, %v4890
        %v5019 = vsub.f32 1.0, %v4891
        %v5020 = vsub.f32 1.0, %v4892
        %v5021 = vsub.f32 1.0, %v4893
        %v5022 = vsub.f32 1.0, %v4894
        %v5023 = vsub.f32 1.0, %v4895
        %v5024 = vsub.f32 1.0, %v4896
        %v5025 = vsub.f32 1.0, %v4897
        %v5026 = vsub.f32 1.0, %v4898
        %v5027 = vsub.f32 1.0, %v4899
        %v5028 = vsub.f32 1.0, %v4900
        %v5029 = vsub.f32 1.0, %v4901
        %v5030 = vsub.f32 1.0, %v4902
        %v5031 = vsub.f32 1.0, %v4903
        %v5032 = vsub.f32 1.0, %v4904
        %v5033 = vsub.f32 1.0, %v4905
        %v5034 = vsub.f32 1.0, %v4906
        %v5035 = vsub.f32 1.0, %v4907
        %v5036 = vsub.f32 1.0, %v4908
        %v5037 = vsub.f32 1.0, %v4909
        %v5038 = vsub.f32 1.0, %v4910
        %v5039 = vsub.f32 1.0, %v4911
        %v5040 = vsub.f32 1.0, %v4912
        %v5041 = vsub.f32 1.0, %v4913
        %v5042 = vsub.f32 1.0, %v4914
        %v5043 = vsub.f32 1.0, %v4915
        %v5044 = vsub.f32 1.0, %v4916
        %v5045 = vsub.f32 1.0, %v4917
        %v5046 = vsub.f32 1.0, %v4918
        %v5047 = vsub.f32 1.0, %v4919
        %v5048 = vsub.f32 1.0, %v4920
        %v5049 = vsub.f32 1.0, %v4921
        %v5050 = vsub.f32 1.0, %v4922
        %v5051 = vsub.f32 1.0, %v4923
        %v5052 = vsub.f32 1.0, %v4924
        %v5053 = vsub.f32 1.0, %v4925
        %v5054 = vsub.f32 1.0, %v4926
        %v5055 = vsub.f32 1.0, %v4927
        %v5056 = vsub.f32 1.0, %v4928
        %v5057 = vsub.f32 1.0, %v4929
        %v5058 = vsub.f32 1.0, %v4930
        %v5059 = vsub.f32 1.0, %v4931
        %v5060 = vsub.f32 1.0, %v4932
        %v5061 = vmax.f32 %v4933, 0.0
        %v5062 = vmax.f32 %v4934, 0.0
        %v5063 = vmax.f32 %v4935, 0.0
        %v5064 = vmax.f32 %v4936, 0.0
        %v5065 = vmax.f32 %v4937, 0.0
        %v5066 = vmax.f32 %v4938, 0.0
        %v5067 = vmax.f32 %v4939, 0.0
        %v5068 = vmax.f32 %v4940, 0.0
        %v5069 = vmax.f32 %v4941, 0.0
        %v5070 = vmax.f32 %v4942, 0.0
        %v5071 = vmax.f32 %v4943, 0.0
        %v5072 = vmax.f32 %v4944, 0.0
        %v5073 = vmax.f32 %v4945, 0.0
        %v5074 = vmax.f32 %v4946, 0.0
        %v5075 = vmax.f32 %v4947, 0.0
        %v5076 = vmax.f32 %v4948, 0.0
        %v5077 = vmax.f32 %v4949, 0.0
        %v5078 = vmax.f32 %v4950, 0.0
        %v5079 = vmax.f32 %v4951, 0.0
        %v5080 = vmax.f32 %v4952, 0.0
        %v5081 = vmax.f32 %v4953, 0.0
        %v5082 = vmax.f32 %v4954, 0.0
        %v5083 = vmax.f32 %v4955, 0.0
        %v5084 = vmax.f32 %v4956, 0.0
        %v5085 = vmax.f32 %v4957, 0.0
        %v5086 = vmax.f32 %v4958, 0.0
        %v5087 = vmax.f32 %v4959, 0.0
        %v5088 = vmax.f32 %v4960, 0.0
        %v5089 = vmax.f32 %v4961, 0.0
        %v5090 = vmax.f32 %v4962, 0.0
        %v5091 = vmax.f32 %v4963, 0.0
        %v5092 = vmax.f32 %v4964, 0.0
        %v5093 = vmax.f32 %v4965, 0.0
        %v5094 = vmax.f32 %v4966, 0.0
        %v5095 = vmax.f32 %v4967, 0.0
        %v5096 = vmax.f32 %v4968, 0.0
        %v5097 = vmax.f32 %v4969, 0.0
        %v5098 = vmax.f32 %v4970, 0.0
        %v5099 = vmax.f32 %v4971, 0.0
        %v5100 = vmax.f32 %v4972, 0.0
        %v5101 = vmax.f32 %v4973, 0.0
        %v5102 = vmax.f32 %v4974, 0.0
        %v5103 = vmax.f32 %v4975, 0.0
        %v5104 = vmax.f32 %v4976, 0.0
        %v5105 = vmax.f32 %v4977, 0.0
        %v5106 = vmax.f32 %v4978, 0.0
        %v5107 = vmax.f32 %v4979, 0.0
        %v5108 = vmax.f32 %v4980, 0.0
        %v5109 = vmax.f32 %v4981, 0.0
        %v5110 = vmax.f32 %v4982, 0.0
        %v5111 = vmax.f32 %v4983, 0.0
        %v5112 = vmax.f32 %v4984, 0.0
        %v5113 = vmax.f32 %v4985, 0.0
        %v5114 = vmax.f32 %v4986, 0.0
        %v5115 = vmax.f32 %v4987, 0.0
        %v5116 = vmax.f32 %v4988, 0.0
        %v5117 = vmax.f32 %v4989, 0.0
        %v5118 = vmax.f32 %v4990, 0.0
        %v5119 = vmax.f32 %v4991, 0.0
        %v5120 = vmax.f32 %v4992, 0.0
        %v5121 = vmax.f32 %v4993, 0.0
        %v5122 = vmax.f32 %v4994, 0.0
        %v5123 = vmax.f32 %v4995, 0.0
        %v5124 = vmax.f32 %v4996, 0.0
        %v5125 = vmax.f32 %v4997, 0.0
        %v5126 = vmax.f32 %v4998, 0.0
        %v5127 = vmax.f32 %v4999, 0.0
        %v5128 = vmax.f32 %v5000, 0.0
        %v5129 = vmax.f32 %v5001, 0.0
        %v5130 = vmax.f32 %v5002, 0.0
        %v5131 = vmax.f32 %v5003, 0.0
        %v5132 = vmax.f32 %v5004, 0.0
        %v5133 = vmax.f32 %v5005, 0.0
        %v5134 = vmax.f32 %v5006, 0.0
        %v5135 = vmax.f32 %v5007, 0.0
        %v5136 = vmax.f32 %v5008, 0.0
        %v5137 = vmax.f32 %v5009, 0.0
        %v5138 = vmax.f32 %v5010, 0.0
        %v5139 = vmax.f32 %v5011, 0.0
        %v5140 = vmax.f32 %v5012, 0.0
        %v5141 = vmax.f32 %v5013, 0.0
        %v5142 = vmax.f32 %v5014, 0.0
        %v5143 = vmax.f32 %v5015, 0.0
        %v5144 = vmax.f32 %v5016, 0.0
        %v5145 = vmax.f32 %v5017, 0.0
        %v5146 = vmax.f32 %v5018, 0.0
        %v5147 = vmax.f32 %v5019, 0.0
        %v5148 = vmax.f32 %v5020, 0.0
        %v5149 = vmax.f32 %v5021, 0.0
        %v5150 = vmax.f32 %v5022, 0.0
        %v5151 = vmax.f32 %v5023, 0.0
        %v5152 = vmax.f32 %v5024, 0.0
        %v5153 = vmax.f32 %v5025, 0.0
        %v5154 = vmax.f32 %v5026, 0.0
        %v5155 = vmax.f32 %v5027, 0.0
        %v5156 = vmax.f32 %v5028, 0.0
        %v5157 = vmax.f32 %v5029, 0.0
        %v5158 = vmax.f32 %v5030, 0.0
        %v5159 = vmax.f32 %v5031, 0.0
        %v5160 = vmax.f32 %v5032, 0.0
        %v5161 = vmax.f32 %v5033, 0.0
        %v5162 = vmax.f32 %v5034, 0.0
        %v5163 = vmax.f32 %v5035, 0.0
        %v5164 = vmax.f32 %v5036, 0.0
        %v5165 = vmax.f32 %v5037, 0.0
        %v5166 = vmax.f32 %v5038, 0.0
        %v5167 = vmax.f32 %v5039, 0.0
        %v5168 = vmax.f32 %v5040, 0.0
        %v5169 = vmax.f32 %v5041, 0.0
        %v5170 = vmax.f32 %v5042, 0.0
        %v5171 = vmax.f32 %v5043, 0.0
        %v5172 = vmax.f32 %v5044, 0.0
        %v5173 = vmax.f32 %v5045, 0.0
        %v5174 = vmax.f32 %v5046, 0.0
        %v5175 = vmax.f32 %v5047, 0.0
        %v5176 = vmax.f32 %v5048, 0.0
        %v5177 = vmax.f32 %v5049, 0.0
        %v5178 = vmax.f32 %v5050, 0.0
        %v5179 = vmax.f32 %v5051, 0.0
        %v5180 = vmax.f32 %v5052, 0.0
        %v5181 = vmax.f32 %v5053, 0.0
        %v5182 = vmax.f32 %v5054, 0.0
        %v5183 = vmax.f32 %v5055, 0.0
        %v5184 = vmax.f32 %v5056, 0.0
        %v5185 = vmax.f32 %v5057, 0.0
        %v5186 = vmax.f32 %v5058, 0.0
        %v5187 = vmax.f32 %v5059, 0.0
        %v5188 = vmax.f32 %v5060, 0.0
        %v5189 = vmul.f32 %v4293, %v5061
        %v5190 = vmul.f32 %v4294, %v5062
        %v5191 = vmul.f32 %v4295, %v5063
        %v5192 = vmul.f32 %v4296, %v5064
        %v5193 = vmul.f32 %v4297, %v5065
        %v5194 = vmul.f32 %v4298, %v5066
        %v5195 = vmul.f32 %v4299, %v5067
        %v5196 = vmul.f32 %v4300, %v5068
        %v5197 = vmul.f32 %v4301, %v5069
        %v5198 = vmul.f32 %v4302, %v5070
        %v5199 = vmul.f32 %v4303, %v5071
        %v5200 = vmul.f32 %v4304, %v5072
        %v5201 = vmul.f32 %v4305, %v5073
        %v5202 = vmul.f32 %v4306, %v5074
        %v5203 = vmul.f32 %v4307, %v5075
        %v5204 = vmul.f32 %v4308, %v5076
        %v5205 = vmul.f32 %v4309, %v5077
        %v5206 = vmul.f32 %v4310, %v5078
        %v5207 = vmul.f32 %v4311, %v5079
        %v5208 = vmul.f32 %v4312, %v5080
        %v5209 = vmul.f32 %v4313, %v5081
        %v5210 = vmul.f32 %v4314, %v5082
        %v5211 = vmul.f32 %v4315, %v5083
        %v5212 = vmul.f32 %v4316, %v5084
        %v5213 = vmul.f32 %v4317, %v5085
        %v5214 = vmul.f32 %v4318, %v5086
        %v5215 = vmul.f32 %v4319, %v5087
        %v5216 = vmul.f32 %v4320, %v5088
        %v5217 = vmul.f32 %v4321, %v5089
        %v5218 = vmul.f32 %v4322, %v5090
        %v5219 = vmul.f32 %v4323, %v5091
        %v5220 = vmul.f32 %v4324, %v5092
        %v5221 = vmul.f32 %v4325, %v5093
        %v5222 = vmul.f32 %v4326, %v5094
        %v5223 = vmul.f32 %v4327, %v5095
        %v5224 = vmul.f32 %v4328, %v5096
        %v5225 = vmul.f32 %v4329, %v5097
        %v5226 = vmul.f32 %v4330, %v5098
        %v5227 = vmul.f32 %v4331, %v5099
        %v5228 = vmul.f32 %v4332, %v5100
        %v5229 = vmul.f32 %v4333, %v5101
        %v5230 = vmul.f32 %v4334, %v5102
        %v5231 = vmul.f32 %v4335, %v5103
        %v5232 = vmul.f32 %v4336, %v5104
        %v5233 = vmul.f32 %v4337, %v5105
        %v5234 = vmul.f32 %v4338, %v5106
        %v5235 = vmul.f32 %v4339, %v5107
        %v5236 = vmul.f32 %v4340, %v5108
        %v5237 = vmul.f32 %v4341, %v5109
        %v5238 = vmul.f32 %v4342, %v5110
        %v5239 = vmul.f32 %v4343, %v5111
        %v5240 = vmul.f32 %v4344, %v5112
        %v5241 = vmul.f32 %v4345, %v5113
        %v5242 = vmul.f32 %v4346, %v5114
        %v5243 = vmul.f32 %v4347, %v5115
        %v5244 = vmul.f32 %v4348, %v5116
        %v5245 = vmul.f32 %v4349, %v5117
        %v5246 = vmul.f32 %v4350, %v5118
        %v5247 = vmul.f32 %v4351, %v5119
        %v5248 = vmul.f32 %v4352, %v5120
        %v5249 = vmul.f32 %v4353, %v5121
        %v5250 = vmul.f32 %v4354, %v5122
        %v5251 = vmul.f32 %v4355, %v5123
        %v5252 = vmul.f32 %v4356, %v5124
        %v5253 = vmul.f32 %v4357, %v5125
        %v5254 = vmul.f32 %v4358, %v5126
        %v5255 = vmul.f32 %v4359, %v5127
        %v5256 = vmul.f32 %v4360, %v5128
        %v5257 = vmul.f32 %v4361, %v5129
        %v5258 = vmul.f32 %v4362, %v5130
        %v5259 = vmul.f32 %v4363, %v5131
        %v5260 = vmul.f32 %v4364, %v5132
        %v5261 = vmul.f32 %v4365, %v5133
        %v5262 = vmul.f32 %v4366, %v5134
        %v5263 = vmul.f32 %v4367, %v5135
        %v5264 = vmul.f32 %v4368, %v5136
        %v5265 = vmul.f32 %v4369, %v5137
        %v5266 = vmul.f32 %v4370, %v5138
        %v5267 = vmul.f32 %v4371, %v5139
        %v5268 = vmul.f32 %v4372, %v5140
        %v5269 = vmul.f32 %v4373, %v5141
        %v5270 = vmul.f32 %v4374, %v5142
        %v5271 = vmul.f32 %v4375, %v5143
        %v5272 = vmul.f32 %v4376, %v5144
        %v5273 = vmul.f32 %v4377, %v5145
        %v5274 = vmul.f32 %v4378, %v5146
        %v5275 = vmul.f32 %v4379, %v5147
        %v5276 = vmul.f32 %v4380, %v5148
        %v5277 = vmul.f32 %v4381, %v5149
        %v5278 = vmul.f32 %v4382, %v5150
        %v5279 = vmul.f32 %v4383, %v5151
        %v5280 = vmul.f32 %v4384, %v5152
        %v5281 = vmul.f32 %v4385, %v5153
        %v5282 = vmul.f32 %v4386, %v5154
        %v5283 = vmul.f32 %v4387, %v5155
        %v5284 = vmul.f32 %v4388, %v5156
        %v5285 = vmul.f32 %v4389, %v5157
        %v5286 = vmul.f32 %v4390, %v5158
        %v5287 = vmul.f32 %v4391, %v5159
        %v5288 = vmul.f32 %v4392, %v5160
        %v5289 = vmul.f32 %v4393, %v5161
        %v5290 = vmul.f32 %v4394, %v5162
        %v5291 = vmul.f32 %v4395, %v5163
        %v5292 = vmul.f32 %v4396, %v5164
        %v5293 = vmul.f32 %v4397, %v5165
        %v5294 = vmul.f32 %v4398, %v5166
        %v5295 = vmul.f32 %v4399, %v5167
        %v5296 = vmul.f32 %v4400, %v5168
        %v5297 = vmul.f32 %v4401, %v5169
        %v5298 = vmul.f32 %v4402, %v5170
        %v5299 = vmul.f32 %v4403, %v5171
        %v5300 = vmul.f32 %v4404, %v5172
        %v5301 = vmul.f32 %v4405, %v5173
        %v5302 = vmul.f32 %v4406, %v5174
        %v5303 = vmul.f32 %v4407, %v5175
        %v5304 = vmul.f32 %v4408, %v5176
        %v5305 = vmul.f32 %v4409, %v5177
        %v5306 = vmul.f32 %v4410, %v5178
        %v5307 = vmul.f32 %v4411, %v5179
        %v5308 = vmul.f32 %v4412, %v5180
        %v5309 = vmul.f32 %v4413, %v5181
        %v5310 = vmul.f32 %v4414, %v5182
        %v5311 = vmul.f32 %v4415, %v5183
        %v5312 = vmul.f32 %v4416, %v5184
        %v5313 = vmul.f32 %v4417, %v5185
        %v5314 = vmul.f32 %v4418, %v5186
        %v5315 = vmul.f32 %v4419, %v5187
        %v5316 = vmul.f32 %v4420, %v5188
        %v5317 = vld [vmem:[%s2] sm:$0xff]
        %v5318 = vld [vmem:[%s2 + $0x8] sm:$0xff]
        %v5319 = vld [vmem:[%s2 + $0x10] sm:$0xff]
        %v5320 = vld [vmem:[%s2 + $0x18] sm:$0xff]
        %v5321 = vld [vmem:[%s2 + $0x20] sm:$0xff]
        %v5322 = vld [vmem:[%s2 + $0x28] sm:$0xff]
        %v5323 = vld [vmem:[%s2 + $0x30] sm:$0xff]
        %v5324 = vld [vmem:[%s2 + $0x38] sm:$0xff]
        %v5325 = vld [vmem:[%s2 + $0x40] sm:$0xff]
        %v5326 = vld [vmem:[%s2 + $0x48] sm:$0xff]
        %v5327 = vld [vmem:[%s2 + $0x50] sm:$0xff]
        %v5328 = vld [vmem:[%s2 + $0x58] sm:$0xff]
        %v5329 = vld [vmem:[%s2 + $0x60] sm:$0xff]
        %v5330 = vld [vmem:[%s2 + $0x68] sm:$0xff]
        %v5331 = vld [vmem:[%s2 + $0x70] sm:$0xff]
        %v5332 = vld [vmem:[%s2 + $0x78] sm:$0xff]
        %v5333 = vld [vmem:[%s2 + $0x80] sm:$0xff]
        %v5334 = vld [vmem:[%s2 + $0x88] sm:$0xff]
        %v5335 = vld [vmem:[%s2 + $0x90] sm:$0xff]
        %v5336 = vld [vmem:[%s2 + $0x98] sm:$0xff]
        %v5337 = vld [vmem:[%s2 + $0xa0] sm:$0xff]
        %v5338 = vld [vmem:[%s2 + $0xa8] sm:$0xff]
        %v5339 = vld [vmem:[%s2 + $0xb0] sm:$0xff]
        %v5340 = vld [vmem:[%s2 + $0xb8] sm:$0xff]
        %v5341 = vld [vmem:[%s2 + $0xc0] sm:$0xff]
        %v5342 = vld [vmem:[%s2 + $0xc8] sm:$0xff]
        %v5343 = vld [vmem:[%s2 + $0xd0] sm:$0xff]
        %v5344 = vld [vmem:[%s2 + $0xd8] sm:$0xff]
        %v5345 = vld [vmem:[%s2 + $0xe0] sm:$0xff]
        %v5346 = vld [vmem:[%s2 + $0xe8] sm:$0xff]
        %v5347 = vld [vmem:[%s2 + $0xf0] sm:$0xff]
        %v5348 = vld [vmem:[%s2 + $0xf8] sm:$0xff]
        %v5349 = vld [vmem:[%s2 + $0x100] sm:$0xff]
        %v5350 = vld [vmem:[%s2 + $0x108] sm:$0xff]
        %v5351 = vld [vmem:[%s2 + $0x110] sm:$0xff]
        %v5352 = vld [vmem:[%s2 + $0x118] sm:$0xff]
        %v5353 = vld [vmem:[%s2 + $0x120] sm:$0xff]
        %v5354 = vld [vmem:[%s2 + $0x128] sm:$0xff]
        %v5355 = vld [vmem:[%s2 + $0x130] sm:$0xff]
        %v5356 = vld [vmem:[%s2 + $0x138] sm:$0xff]
        %v5357 = vld [vmem:[%s2 + $0x140] sm:$0xff]
        %v5358 = vld [vmem:[%s2 + $0x148] sm:$0xff]
        %v5359 = vld [vmem:[%s2 + $0x150] sm:$0xff]
        %v5360 = vld [vmem:[%s2 + $0x158] sm:$0xff]
        %v5361 = vld [vmem:[%s2 + $0x160] sm:$0xff]
        %v5362 = vld [vmem:[%s2 + $0x168] sm:$0xff]
        %v5363 = vld [vmem:[%s2 + $0x170] sm:$0xff]
        %v5364 = vld [vmem:[%s2 + $0x178] sm:$0xff]
        %v5365 = vld [vmem:[%s2 + $0x180] sm:$0xff]
        %v5366 = vld [vmem:[%s2 + $0x188] sm:$0xff]
        %v5367 = vld [vmem:[%s2 + $0x190] sm:$0xff]
        %v5368 = vld [vmem:[%s2 + $0x198] sm:$0xff]
        %v5369 = vld [vmem:[%s2 + $0x1a0] sm:$0xff]
        %v5370 = vld [vmem:[%s2 + $0x1a8] sm:$0xff]
        %v5371 = vld [vmem:[%s2 + $0x1b0] sm:$0xff]
        %v5372 = vld [vmem:[%s2 + $0x1b8] sm:$0xff]
        %v5373 = vld [vmem:[%s2 + $0x1c0] sm:$0xff]
        %v5374 = vld [vmem:[%s2 + $0x1c8] sm:$0xff]
        %v5375 = vld [vmem:[%s2 + $0x1d0] sm:$0xff]
        %v5376 = vld [vmem:[%s2 + $0x1d8] sm:$0xff]
        %v5377 = vld [vmem:[%s2 + $0x1e0] sm:$0xff]
        %v5378 = vld [vmem:[%s2 + $0x1e8] sm:$0xff]
        %v5379 = vld [vmem:[%s2 + $0x1f0] sm:$0xff]
        %v5380 = vld [vmem:[%s2 + $0x1f8] sm:$0xff]
        %v5381 = vld [vmem:[%s2 + $0x200] sm:$0xff]
        %v5382 = vld [vmem:[%s2 + $0x208] sm:$0xff]
        %v5383 = vld [vmem:[%s2 + $0x210] sm:$0xff]
        %v5384 = vld [vmem:[%s2 + $0x218] sm:$0xff]
        %v5385 = vld [vmem:[%s2 + $0x220] sm:$0xff]
        %v5386 = vld [vmem:[%s2 + $0x228] sm:$0xff]
        %v5387 = vld [vmem:[%s2 + $0x230] sm:$0xff]
        %v5388 = vld [vmem:[%s2 + $0x238] sm:$0xff]
        %v5389 = vld [vmem:[%s2 + $0x240] sm:$0xff]
        %v5390 = vld [vmem:[%s2 + $0x248] sm:$0xff]
        %v5391 = vld [vmem:[%s2 + $0x250] sm:$0xff]
        %v5392 = vld [vmem:[%s2 + $0x258] sm:$0xff]
        %v5393 = vld [vmem:[%s2 + $0x260] sm:$0xff]
        %v5394 = vld [vmem:[%s2 + $0x268] sm:$0xff]
        %v5395 = vld [vmem:[%s2 + $0x270] sm:$0xff]
        %v5396 = vld [vmem:[%s2 + $0x278] sm:$0xff]
        %v5397 = vld [vmem:[%s2 + $0x280] sm:$0xff]
        %v5398 = vld [vmem:[%s2 + $0x288] sm:$0xff]
        %v5399 = vld [vmem:[%s2 + $0x290] sm:$0xff]
        %v5400 = vld [vmem:[%s2 + $0x298] sm:$0xff]
        %v5401 = vld [vmem:[%s2 + $0x2a0] sm:$0xff]
        %v5402 = vld [vmem:[%s2 + $0x2a8] sm:$0xff]
        %v5403 = vld [vmem:[%s2 + $0x2b0] sm:$0xff]
        %v5404 = vld [vmem:[%s2 + $0x2b8] sm:$0xff]
        %v5405 = vld [vmem:[%s2 + $0x2c0] sm:$0xff]
        %v5406 = vld [vmem:[%s2 + $0x2c8] sm:$0xff]
        %v5407 = vld [vmem:[%s2 + $0x2d0] sm:$0xff]
        %v5408 = vld [vmem:[%s2 + $0x2d8] sm:$0xff]
        %v5409 = vld [vmem:[%s2 + $0x2e0] sm:$0xff]
        %v5410 = vld [vmem:[%s2 + $0x2e8] sm:$0xff]
        %v5411 = vld [vmem:[%s2 + $0x2f0] sm:$0xff]
        %v5412 = vld [vmem:[%s2 + $0x2f8] sm:$0xff]
        %5413 = vmatprep.subr.mxu0 0.0
        %5414 = vmatpush1.msra.mxu0 %v5332
        %5415 = vmatprep.subr.mxu0 0.0
        %5416 = vmatpush1.msra.mxu0 %v5331
        %5417 = vmatprep.subr.mxu0 0.0
        %5418 = vmatpush1.msra.mxu0 %v5330
        %5419 = vmatprep.subr.mxu0 0.0
        %5420 = vmatpush1.msra.mxu0 %v5329
        %5421 = vmatprep.subr.mxu0 0.0
        %5422 = vmatpush1.msra.mxu0 %v5328
        %5423 = vmatprep.subr.mxu0 0.0
        %5424 = vmatpush1.msra.mxu0 %v5327
        %5425 = vmatprep.subr.mxu0 0.0
        %5426 = vmatpush1.msra.mxu0 %v5326
        %5427 = vmatprep.subr.mxu0 0.0
        %5428 = vmatpush1.msra.mxu0 %v5325
        %5429 = vmatprep.subr.mxu0 0.0
        %5430 = vmatpush1.msra.mxu0 %v5324
        %5431 = vmatprep.subr.mxu0 0.0
        %5432 = vmatpush1.msra.mxu0 %v5323
        %5433 = vmatprep.subr.mxu0 0.0
        %5434 = vmatpush1.msra.mxu0 %v5322
        %5435 = vmatprep.subr.mxu0 0.0
        %5436 = vmatpush1.msra.mxu0 %v5321
        %5437 = vmatprep.subr.mxu0 0.0
        %5438 = vmatpush1.msra.mxu0 %v5320
        %5439 = vmatprep.subr.mxu0 0.0
        %5440 = vmatpush1.msra.mxu0 %v5319
        %5441 = vmatprep.subr.mxu0 0.0
        %5442 = vmatpush1.msra.mxu0 %v5318
        %5443 = vmatprep.subr.mxu0 0.0
        %5444 = vmatpush1.msra.mxu0 %v5317
        %5445 = vmatprep.subr.mxu0 0.0
        %5446 = vmatpush2.msra.mxu0 %v5348
        %5447 = vmatprep.subr.mxu0 0.0
        %5448 = vmatpush2.msra.mxu0 %v5347
        %5449 = vmatprep.subr.mxu0 0.0
        %5450 = vmatpush2.msra.mxu0 %v5346
        %5451 = vmatprep.subr.mxu0 0.0
        %5452 = vmatpush2.msra.mxu0 %v5345
        %5453 = vmatprep.subr.mxu0 0.0
        %5454 = vmatpush2.msra.mxu0 %v5344
        %5455 = vmatprep.subr.mxu0 0.0
        %5456 = vmatpush2.msra.mxu0 %v5343
        %5457 = vmatprep.subr.mxu0 0.0
        %5458 = vmatpush2.msra.mxu0 %v5342
        %5459 = vmatprep.subr.mxu0 0.0
        %5460 = vmatpush2.msra.mxu0 %v5341
        %5461 = vmatprep.subr.mxu0 0.0
        %5462 = vmatpush2.msra.mxu0 %v5340
        %5463 = vmatprep.subr.mxu0 0.0
        %5464 = vmatpush2.msra.mxu0 %v5339
        %5465 = vmatprep.subr.mxu0 0.0
        %5466 = vmatpush2.msra.mxu0 %v5338
        %5467 = vmatprep.subr.mxu0 0.0
        %5468 = vmatpush2.msra.mxu0 %v5337
        %5469 = vmatprep.subr.mxu0 0.0
        %5470 = vmatpush2.msra.mxu0 %v5336
        %5471 = vmatprep.subr.mxu0 0.0
        %5472 = vmatpush2.msra.mxu0 %v5335
        %5473 = vmatprep.subr.mxu0 0.0
        %5474 = vmatpush2.msra.mxu0 %v5334
        %5475 = vmatprep.subr.mxu0 0.0
        %5476 = vmatpush2.msra.mxu0 %v5333
        %5477 = vmatprep.mubr.f32.mxu0 %v1862
        %5478 = vmatmul.mubr.f32.gmra.mxu0 %v1861
        %v5479 = vpop.f32.mrf.mxu0
        %v5480 = vadd.f32 0.0, %v5479
        %v5481 = vpop.f32.mrf.mxu0
        %5482 = vmatprep.mubr.f32.mxu0 %v1864
        %5483 = vmatmul.mubr.f32.gmra.mxu0 %v1863
        %v5484 = vpop.f32.mrf.mxu0
        %v5485 = vadd.f32 0.0, %v5484
        %v5486 = vpop.f32.mrf.mxu0
        %5487 = vmatprep.mubr.f32.mxu0 %v1866
        %5488 = vmatmul.mubr.f32.gmra.mxu0 %v1865
        %v5489 = vpop.f32.mrf.mxu0
        %v5490 = vadd.f32 0.0, %v5489
        %v5491 = vpop.f32.mrf.mxu0
        %5492 = vmatprep.mubr.f32.mxu0 %v1868
        %5493 = vmatmul.mubr.f32.gmra.mxu0 %v1867
        %v5494 = vpop.f32.mrf.mxu0
        %v5495 = vadd.f32 0.0, %v5494
        %v5496 = vpop.f32.mrf.mxu0
        %5497 = vmatprep.mubr.f32.mxu0 %v1870
        %5498 = vmatmul.mubr.f32.gmra.mxu0 %v1869
        %v5499 = vpop.f32.mrf.mxu0
        %v5500 = vadd.f32 0.0, %v5499
        %v5501 = vpop.f32.mrf.mxu0
        %5502 = vmatprep.mubr.f32.mxu0 %v1872
        %5503 = vmatmul.mubr.f32.gmra.mxu0 %v1871
        %v5504 = vpop.f32.mrf.mxu0
        %v5505 = vadd.f32 0.0, %v5504
        %v5506 = vpop.f32.mrf.mxu0
        %5507 = vmatprep.mubr.f32.mxu0 %v1874
        %5508 = vmatmul.mubr.f32.gmra.mxu0 %v1873
        %v5509 = vpop.f32.mrf.mxu0
        %v5510 = vadd.f32 0.0, %v5509
        %v5511 = vpop.f32.mrf.mxu0
        %5512 = vmatprep.mubr.f32.mxu0 %v1876
        %5513 = vmatmul.mubr.f32.gmra.mxu0 %v1875
        %v5514 = vpop.f32.mrf.mxu0
        %v5515 = vadd.f32 0.0, %v5514
        %v5516 = vpop.f32.mrf.mxu0
        %5517 = vmatprep.mubr.f32.mxu0 %v1878
        %5518 = vmatmul.mubr.f32.gmra.mxu0 %v1877
        %v5519 = vpop.f32.mrf.mxu0
        %v5520 = vadd.f32 0.0, %v5519
        %v5521 = vpop.f32.mrf.mxu0
        %5522 = vmatprep.mubr.f32.mxu0 %v1880
        %5523 = vmatmul.mubr.f32.gmra.mxu0 %v1879
        %v5524 = vpop.f32.mrf.mxu0
        %v5525 = vadd.f32 0.0, %v5524
        %v5526 = vpop.f32.mrf.mxu0
        %5527 = vmatprep.mubr.f32.mxu0 %v1882
        %5528 = vmatmul.mubr.f32.gmra.mxu0 %v1881
        %v5529 = vpop.f32.mrf.mxu0
        %v5530 = vadd.f32 0.0, %v5529
        %v5531 = vpop.f32.mrf.mxu0
        %5532 = vmatprep.mubr.f32.mxu0 %v1884
        %5533 = vmatmul.mubr.f32.gmra.mxu0 %v1883
        %v5534 = vpop.f32.mrf.mxu0
        %v5535 = vadd.f32 0.0, %v5534
        %v5536 = vpop.f32.mrf.mxu0
        %5537 = vmatprep.mubr.f32.mxu0 %v1886
        %5538 = vmatmul.mubr.f32.gmra.mxu0 %v1885
        %v5539 = vpop.f32.mrf.mxu0
        %v5540 = vadd.f32 0.0, %v5539
        %v5541 = vpop.f32.mrf.mxu0
        %5542 = vmatprep.mubr.f32.mxu0 %v1888
        %5543 = vmatmul.mubr.f32.gmra.mxu0 %v1887
        %v5544 = vpop.f32.mrf.mxu0
        %v5545 = vadd.f32 0.0, %v5544
        %v5546 = vpop.f32.mrf.mxu0
        %5547 = vmatprep.mubr.f32.mxu0 %v1890
        %5548 = vmatmul.mubr.f32.gmra.mxu0 %v1889
        %v5549 = vpop.f32.mrf.mxu0
        %v5550 = vadd.f32 0.0, %v5549
        %v5551 = vpop.f32.mrf.mxu0
        %5552 = vmatprep.mubr.f32.mxu0 %v1892
        %5553 = vmatmul.mubr.f32.gmra.mxu0 %v1891
        %v5554 = vpop.f32.mrf.mxu0
        %v5555 = vadd.f32 0.0, %v5554
        %v5556 = vpop.f32.mrf.mxu0
        %5557 = vmatprep.mubr.f32.mxu0 %v1894
        %5558 = vmatmul.mubr.f32.gmra.mxu0 %v1893
        %v5559 = vpop.f32.mrf.mxu0
        %v5560 = vadd.f32 0.0, %v5559
        %v5561 = vpop.f32.mrf.mxu0
        %5562 = vmatprep.mubr.f32.mxu0 %v1896
        %5563 = vmatmul.mubr.f32.gmra.mxu0 %v1895
        %v5564 = vpop.f32.mrf.mxu0
        %v5565 = vadd.f32 0.0, %v5564
        %v5566 = vpop.f32.mrf.mxu0
        %5567 = vmatprep.mubr.f32.mxu0 %v1898
        %5568 = vmatmul.mubr.f32.gmra.mxu0 %v1897
        %v5569 = vpop.f32.mrf.mxu0
        %v5570 = vadd.f32 0.0, %v5569
        %v5571 = vpop.f32.mrf.mxu0
        %5572 = vmatprep.mubr.f32.mxu0 %v1900
        %5573 = vmatmul.mubr.f32.gmra.mxu0 %v1899
        %v5574 = vpop.f32.mrf.mxu0
        %v5575 = vadd.f32 0.0, %v5574
        %v5576 = vpop.f32.mrf.mxu0
        %5577 = vmatprep.mubr.f32.mxu0 %v1902
        %5578 = vmatmul.mubr.f32.gmra.mxu0 %v1901
        %v5579 = vpop.f32.mrf.mxu0
        %v5580 = vadd.f32 0.0, %v5579
        %v5581 = vpop.f32.mrf.mxu0
        %5582 = vmatprep.mubr.f32.mxu0 %v1904
        %5583 = vmatmul.mubr.f32.gmra.mxu0 %v1903
        %v5584 = vpop.f32.mrf.mxu0
        %v5585 = vadd.f32 0.0, %v5584
        %v5586 = vpop.f32.mrf.mxu0
        %5587 = vmatprep.mubr.f32.mxu0 %v1906
        %5588 = vmatmul.mubr.f32.gmra.mxu0 %v1905
        %v5589 = vpop.f32.mrf.mxu0
        %v5590 = vadd.f32 0.0, %v5589
        %v5591 = vpop.f32.mrf.mxu0
        %5592 = vmatprep.mubr.f32.mxu0 %v1908
        %5593 = vmatmul.mubr.f32.gmra.mxu0 %v1907
        %v5594 = vpop.f32.mrf.mxu0
        %v5595 = vadd.f32 0.0, %v5594
        %v5596 = vpop.f32.mrf.mxu0
        %5597 = vmatprep.mubr.f32.mxu0 %v1910
        %5598 = vmatmul.mubr.f32.gmra.mxu0 %v1909
        %v5599 = vpop.f32.mrf.mxu0
        %v5600 = vadd.f32 0.0, %v5599
        %v5601 = vpop.f32.mrf.mxu0
        %5602 = vmatprep.mubr.f32.mxu0 %v1912
        %5603 = vmatmul.mubr.f32.gmra.mxu0 %v1911
        %v5604 = vpop.f32.mrf.mxu0
        %v5605 = vadd.f32 0.0, %v5604
        %v5606 = vpop.f32.mrf.mxu0
        %5607 = vmatprep.mubr.f32.mxu0 %v1914
        %5608 = vmatmul.mubr.f32.gmra.mxu0 %v1913
        %v5609 = vpop.f32.mrf.mxu0
        %v5610 = vadd.f32 0.0, %v5609
        %v5611 = vpop.f32.mrf.mxu0
        %5612 = vmatprep.mubr.f32.mxu0 %v1916
        %5613 = vmatmul.mubr.f32.gmra.mxu0 %v1915
        %v5614 = vpop.f32.mrf.mxu0
        %v5615 = vadd.f32 0.0, %v5614
        %v5616 = vpop.f32.mrf.mxu0
        %5617 = vmatprep.mubr.f32.mxu0 %v1918
        %5618 = vmatmul.mubr.f32.gmra.mxu0 %v1917
        %v5619 = vpop.f32.mrf.mxu0
        %v5620 = vadd.f32 0.0, %v5619
        %v5621 = vpop.f32.mrf.mxu0
        %5622 = vmatprep.mubr.f32.mxu0 %v1920
        %5623 = vmatmul.mubr.f32.gmra.mxu0 %v1919
        %v5624 = vpop.f32.mrf.mxu0
        %v5625 = vadd.f32 0.0, %v5624
        %v5626 = vpop.f32.mrf.mxu0
        %5627 = vmatprep.mubr.f32.mxu0 %v1922
        %5628 = vmatmul.mubr.f32.gmra.mxu0 %v1921
        %v5629 = vpop.f32.mrf.mxu0
        %v5630 = vadd.f32 0.0, %v5629
        %v5631 = vpop.f32.mrf.mxu0
        %5632 = vmatprep.mubr.f32.mxu0 %v1924
        %5633 = vmatmul.mubr.f32.gmra.mxu0 %v1923
        %v5634 = vpop.f32.mrf.mxu0
        %v5635 = vadd.f32 0.0, %v5634
        %v5636 = vpop.f32.mrf.mxu0
        %5637 = vmatprep.mubr.f32.mxu0 %v1926
        %5638 = vmatmul.mubr.f32.gmra.mxu0 %v1925
        %v5639 = vpop.f32.mrf.mxu0
        %v5640 = vadd.f32 0.0, %v5639
        %v5641 = vpop.f32.mrf.mxu0
        %5642 = vmatprep.mubr.f32.mxu0 %v1928
        %5643 = vmatmul.mubr.f32.gmra.mxu0 %v1927
        %v5644 = vpop.f32.mrf.mxu0
        %v5645 = vadd.f32 0.0, %v5644
        %v5646 = vpop.f32.mrf.mxu0
        %5647 = vmatprep.mubr.f32.mxu0 %v1930
        %5648 = vmatmul.mubr.f32.gmra.mxu0 %v1929
        %v5649 = vpop.f32.mrf.mxu0
        %v5650 = vadd.f32 0.0, %v5649
        %v5651 = vpop.f32.mrf.mxu0
        %5652 = vmatprep.mubr.f32.mxu0 %v1932
        %5653 = vmatmul.mubr.f32.gmra.mxu0 %v1931
        %v5654 = vpop.f32.mrf.mxu0
        %v5655 = vadd.f32 0.0, %v5654
        %v5656 = vpop.f32.mrf.mxu0
        %5657 = vmatprep.mubr.f32.mxu0 %v1934
        %5658 = vmatmul.mubr.f32.gmra.mxu0 %v1933
        %v5659 = vpop.f32.mrf.mxu0
        %v5660 = vadd.f32 0.0, %v5659
        %v5661 = vpop.f32.mrf.mxu0
        %5662 = vmatprep.mubr.f32.mxu0 %v1936
        %5663 = vmatmul.mubr.f32.gmra.mxu0 %v1935
        %v5664 = vpop.f32.mrf.mxu0
        %v5665 = vadd.f32 0.0, %v5664
        %v5666 = vpop.f32.mrf.mxu0
        %5667 = vmatprep.mubr.f32.mxu0 %v1938
        %5668 = vmatmul.mubr.f32.gmra.mxu0 %v1937
        %v5669 = vpop.f32.mrf.mxu0
        %v5670 = vadd.f32 0.0, %v5669
        %v5671 = vpop.f32.mrf.mxu0
        %5672 = vmatprep.mubr.f32.mxu0 %v1940
        %5673 = vmatmul.mubr.f32.gmra.mxu0 %v1939
        %v5674 = vpop.f32.mrf.mxu0
        %v5675 = vadd.f32 0.0, %v5674
        %v5676 = vpop.f32.mrf.mxu0
        %5677 = vmatprep.mubr.f32.mxu0 %v1942
        %5678 = vmatmul.mubr.f32.gmra.mxu0 %v1941
        %v5679 = vpop.f32.mrf.mxu0
        %v5680 = vadd.f32 0.0, %v5679
        %v5681 = vpop.f32.mrf.mxu0
        %5682 = vmatprep.mubr.f32.mxu0 %v1944
        %5683 = vmatmul.mubr.f32.gmra.mxu0 %v1943
        %v5684 = vpop.f32.mrf.mxu0
        %v5685 = vadd.f32 0.0, %v5684
        %v5686 = vpop.f32.mrf.mxu0
        %5687 = vmatprep.mubr.f32.mxu0 %v1946
        %5688 = vmatmul.mubr.f32.gmra.mxu0 %v1945
        %v5689 = vpop.f32.mrf.mxu0
        %v5690 = vadd.f32 0.0, %v5689
        %v5691 = vpop.f32.mrf.mxu0
        %5692 = vmatprep.mubr.f32.mxu0 %v1948
        %5693 = vmatmul.mubr.f32.gmra.mxu0 %v1947
        %v5694 = vpop.f32.mrf.mxu0
        %v5695 = vadd.f32 0.0, %v5694
        %v5696 = vpop.f32.mrf.mxu0
        %5697 = vmatprep.mubr.f32.mxu0 %v1950
        %5698 = vmatmul.mubr.f32.gmra.mxu0 %v1949
        %v5699 = vpop.f32.mrf.mxu0
        %v5700 = vadd.f32 0.0, %v5699
        %v5701 = vpop.f32.mrf.mxu0
        %5702 = vmatprep.mubr.f32.mxu0 %v1952
        %5703 = vmatmul.mubr.f32.gmra.mxu0 %v1951
        %v5704 = vpop.f32.mrf.mxu0
        %v5705 = vadd.f32 0.0, %v5704
        %v5706 = vpop.f32.mrf.mxu0
        %5707 = vmatprep.mubr.f32.mxu0 %v1954
        %5708 = vmatmul.mubr.f32.gmra.mxu0 %v1953
        %v5709 = vpop.f32.mrf.mxu0
        %v5710 = vadd.f32 0.0, %v5709
        %v5711 = vpop.f32.mrf.mxu0
        %5712 = vmatprep.mubr.f32.mxu0 %v1956
        %5713 = vmatmul.mubr.f32.gmra.mxu0 %v1955
        %v5714 = vpop.f32.mrf.mxu0
        %v5715 = vadd.f32 0.0, %v5714
        %v5716 = vpop.f32.mrf.mxu0
        %5717 = vmatprep.mubr.f32.mxu0 %v1958
        %5718 = vmatmul.mubr.f32.gmra.mxu0 %v1957
        %v5719 = vpop.f32.mrf.mxu0
        %v5720 = vadd.f32 0.0, %v5719
        %v5721 = vpop.f32.mrf.mxu0
        %5722 = vmatprep.mubr.f32.mxu0 %v1960
        %5723 = vmatmul.mubr.f32.gmra.mxu0 %v1959
        %v5724 = vpop.f32.mrf.mxu0
        %v5725 = vadd.f32 0.0, %v5724
        %v5726 = vpop.f32.mrf.mxu0
        %5727 = vmatprep.mubr.f32.mxu0 %v1962
        %5728 = vmatmul.mubr.f32.gmra.mxu0 %v1961
        %v5729 = vpop.f32.mrf.mxu0
        %v5730 = vadd.f32 0.0, %v5729
        %v5731 = vpop.f32.mrf.mxu0
        %5732 = vmatprep.mubr.f32.mxu0 %v1964
        %5733 = vmatmul.mubr.f32.gmra.mxu0 %v1963
        %v5734 = vpop.f32.mrf.mxu0
        %v5735 = vadd.f32 0.0, %v5734
        %v5736 = vpop.f32.mrf.mxu0
        %5737 = vmatprep.mubr.f32.mxu0 %v1966
        %5738 = vmatmul.mubr.f32.gmra.mxu0 %v1965
        %v5739 = vpop.f32.mrf.mxu0
        %v5740 = vadd.f32 0.0, %v5739
        %v5741 = vpop.f32.mrf.mxu0
        %5742 = vmatprep.mubr.f32.mxu0 %v1968
        %5743 = vmatmul.mubr.f32.gmra.mxu0 %v1967
        %v5744 = vpop.f32.mrf.mxu0
        %v5745 = vadd.f32 0.0, %v5744
        %v5746 = vpop.f32.mrf.mxu0
        %5747 = vmatprep.mubr.f32.mxu0 %v1970
        %5748 = vmatmul.mubr.f32.gmra.mxu0 %v1969
        %v5749 = vpop.f32.mrf.mxu0
        %v5750 = vadd.f32 0.0, %v5749
        %v5751 = vpop.f32.mrf.mxu0
        %5752 = vmatprep.mubr.f32.mxu0 %v1972
        %5753 = vmatmul.mubr.f32.gmra.mxu0 %v1971
        %v5754 = vpop.f32.mrf.mxu0
        %v5755 = vadd.f32 0.0, %v5754
        %v5756 = vpop.f32.mrf.mxu0
        %5757 = vmatprep.mubr.f32.mxu0 %v1974
        %5758 = vmatmul.mubr.f32.gmra.mxu0 %v1973
        %v5759 = vpop.f32.mrf.mxu0
        %v5760 = vadd.f32 0.0, %v5759
        %v5761 = vpop.f32.mrf.mxu0
        %5762 = vmatprep.mubr.f32.mxu0 %v1976
        %5763 = vmatmul.mubr.f32.gmra.mxu0 %v1975
        %v5764 = vpop.f32.mrf.mxu0
        %v5765 = vadd.f32 0.0, %v5764
        %v5766 = vpop.f32.mrf.mxu0
        %5767 = vmatprep.mubr.f32.mxu0 %v1978
        %5768 = vmatmul.mubr.f32.gmra.mxu0 %v1977
        %v5769 = vpop.f32.mrf.mxu0
        %v5770 = vadd.f32 0.0, %v5769
        %v5771 = vpop.f32.mrf.mxu0
        %5772 = vmatprep.mubr.f32.mxu0 %v1980
        %5773 = vmatmul.mubr.f32.gmra.mxu0 %v1979
        %v5774 = vpop.f32.mrf.mxu0
        %v5775 = vadd.f32 0.0, %v5774
        %v5776 = vpop.f32.mrf.mxu0
        %5777 = vmatprep.mubr.f32.mxu0 %v1982
        %5778 = vmatmul.mubr.f32.gmra.mxu0 %v1981
        %v5779 = vpop.f32.mrf.mxu0
        %v5780 = vadd.f32 0.0, %v5779
        %v5781 = vpop.f32.mrf.mxu0
        %5782 = vmatprep.mubr.f32.mxu0 %v1984
        %5783 = vmatmul.mubr.f32.gmra.mxu0 %v1983
        %v5784 = vpop.f32.mrf.mxu0
        %v5785 = vadd.f32 0.0, %v5784
        %v5786 = vpop.f32.mrf.mxu0
        %5787 = vmatprep.mubr.f32.mxu0 %v1986
        %5788 = vmatmul.mubr.f32.gmra.mxu0 %v1985
        %v5789 = vpop.f32.mrf.mxu0
        %v5790 = vadd.f32 0.0, %v5789
        %v5791 = vpop.f32.mrf.mxu0
        %5792 = vmatprep.mubr.f32.mxu0 %v1988
        %5793 = vmatmul.mubr.f32.gmra.mxu0 %v1987
        %v5794 = vpop.f32.mrf.mxu0
        %v5795 = vadd.f32 0.0, %v5794
        %v5796 = vpop.f32.mrf.mxu0
        %5797 = vdwg.mxu0
        %5798 = vmatprep.subr.mxu0 0.0
        %5799 = vmatpush1.msra.mxu0 %v5364
        %5800 = vmatprep.subr.mxu0 0.0
        %5801 = vmatpush1.msra.mxu0 %v5363
        %5802 = vmatprep.subr.mxu0 0.0
        %5803 = vmatpush1.msra.mxu0 %v5362
        %5804 = vmatprep.subr.mxu0 0.0
        %5805 = vmatpush1.msra.mxu0 %v5361
        %5806 = vmatprep.subr.mxu0 0.0
        %5807 = vmatpush1.msra.mxu0 %v5360
        %5808 = vmatprep.subr.mxu0 0.0
        %5809 = vmatpush1.msra.mxu0 %v5359
        %5810 = vmatprep.subr.mxu0 0.0
        %5811 = vmatpush1.msra.mxu0 %v5358
        %5812 = vmatprep.subr.mxu0 0.0
        %5813 = vmatpush1.msra.mxu0 %v5357
        %5814 = vmatprep.subr.mxu0 0.0
        %5815 = vmatpush1.msra.mxu0 %v5356
        %5816 = vmatprep.subr.mxu0 0.0
        %5817 = vmatpush1.msra.mxu0 %v5355
        %5818 = vmatprep.subr.mxu0 0.0
        %5819 = vmatpush1.msra.mxu0 %v5354
        %5820 = vmatprep.subr.mxu0 0.0
        %5821 = vmatpush1.msra.mxu0 %v5353
        %5822 = vmatprep.subr.mxu0 0.0
        %5823 = vmatpush1.msra.mxu0 %v5352
        %5824 = vmatprep.subr.mxu0 0.0
        %5825 = vmatpush1.msra.mxu0 %v5351
        %5826 = vmatprep.subr.mxu0 0.0
        %5827 = vmatpush1.msra.mxu0 %v5350
        %5828 = vmatprep.subr.mxu0 0.0
        %5829 = vmatpush1.msra.mxu0 %v5349
        %5830 = vmatprep.subr.mxu0 0.0
        %5831 = vmatpush2.msra.mxu0 %v5380
        %5832 = vmatprep.subr.mxu0 0.0
        %5833 = vmatpush2.msra.mxu0 %v5379
        %5834 = vmatprep.subr.mxu0 0.0
        %5835 = vmatpush2.msra.mxu0 %v5378
        %5836 = vmatprep.subr.mxu0 0.0
        %5837 = vmatpush2.msra.mxu0 %v5377
        %5838 = vmatprep.subr.mxu0 0.0
        %5839 = vmatpush2.msra.mxu0 %v5376
        %5840 = vmatprep.subr.mxu0 0.0
        %5841 = vmatpush2.msra.mxu0 %v5375
        %5842 = vmatprep.subr.mxu0 0.0
        %5843 = vmatpush2.msra.mxu0 %v5374
        %5844 = vmatprep.subr.mxu0 0.0
        %5845 = vmatpush2.msra.mxu0 %v5373
        %5846 = vmatprep.subr.mxu0 0.0
        %5847 = vmatpush2.msra.mxu0 %v5372
        %5848 = vmatprep.subr.mxu0 0.0
        %5849 = vmatpush2.msra.mxu0 %v5371
        %5850 = vmatprep.subr.mxu0 0.0
        %5851 = vmatpush2.msra.mxu0 %v5370
        %5852 = vmatprep.subr.mxu0 0.0
        %5853 = vmatpush2.msra.mxu0 %v5369
        %5854 = vmatprep.subr.mxu0 0.0
        %5855 = vmatpush2.msra.mxu0 %v5368
        %5856 = vmatprep.subr.mxu0 0.0
        %5857 = vmatpush2.msra.mxu0 %v5367
        %5858 = vmatprep.subr.mxu0 0.0
        %5859 = vmatpush2.msra.mxu0 %v5366
        %5860 = vmatprep.subr.mxu0 0.0
        %5861 = vmatpush2.msra.mxu0 %v5365
        %5862 = vmatprep.mubr.f32.mxu0 %v3526
        %5863 = vmatmul.mubr.f32.gmra.mxu0 %v3525
        %v5864 = vpop.f32.mrf.mxu0
        %v5865 = vadd.f32 %v5480, %v5864
        %v5866 = vpop.f32.mrf.mxu0
        %5867 = vmatprep.mubr.f32.mxu0 %v3528
        %5868 = vmatmul.mubr.f32.gmra.mxu0 %v3527
        %v5869 = vpop.f32.mrf.mxu0
        %v5870 = vadd.f32 %v5485, %v5869
        %v5871 = vpop.f32.mrf.mxu0
        %5872 = vmatprep.mubr.f32.mxu0 %v3530
        %5873 = vmatmul.mubr.f32.gmra.mxu0 %v3529
        %v5874 = vpop.f32.mrf.mxu0
        %v5875 = vadd.f32 %v5490, %v5874
        %v5876 = vpop.f32.mrf.mxu0
        %5877 = vmatprep.mubr.f32.mxu0 %v3532
        %5878 = vmatmul.mubr.f32.gmra.mxu0 %v3531
        %v5879 = vpop.f32.mrf.mxu0
        %v5880 = vadd.f32 %v5495, %v5879
        %v5881 = vpop.f32.mrf.mxu0
        %5882 = vmatprep.mubr.f32.mxu0 %v3534
        %5883 = vmatmul.mubr.f32.gmra.mxu0 %v3533
        %v5884 = vpop.f32.mrf.mxu0
        %v5885 = vadd.f32 %v5500, %v5884
        %v5886 = vpop.f32.mrf.mxu0
        %5887 = vmatprep.mubr.f32.mxu0 %v3536
        %5888 = vmatmul.mubr.f32.gmra.mxu0 %v3535
        %v5889 = vpop.f32.mrf.mxu0
        %v5890 = vadd.f32 %v5505, %v5889
        %v5891 = vpop.f32.mrf.mxu0
        %5892 = vmatprep.mubr.f32.mxu0 %v3538
        %5893 = vmatmul.mubr.f32.gmra.mxu0 %v3537
        %v5894 = vpop.f32.mrf.mxu0
        %v5895 = vadd.f32 %v5510, %v5894
        %v5896 = vpop.f32.mrf.mxu0
        %5897 = vmatprep.mubr.f32.mxu0 %v3540
        %5898 = vmatmul.mubr.f32.gmra.mxu0 %v3539
        %v5899 = vpop.f32.mrf.mxu0
        %v5900 = vadd.f32 %v5515, %v5899
        %v5901 = vpop.f32.mrf.mxu0
        %5902 = vmatprep.mubr.f32.mxu0 %v3542
        %5903 = vmatmul.mubr.f32.gmra.mxu0 %v3541
        %v5904 = vpop.f32.mrf.mxu0
        %v5905 = vadd.f32 %v5520, %v5904
        %v5906 = vpop.f32.mrf.mxu0
        %5907 = vmatprep.mubr.f32.mxu0 %v3544
        %5908 = vmatmul.mubr.f32.gmra.mxu0 %v3543
        %v5909 = vpop.f32.mrf.mxu0
        %v5910 = vadd.f32 %v5525, %v5909
        %v5911 = vpop.f32.mrf.mxu0
        %5912 = vmatprep.mubr.f32.mxu0 %v3546
        %5913 = vmatmul.mubr.f32.gmra.mxu0 %v3545
        %v5914 = vpop.f32.mrf.mxu0
        %v5915 = vadd.f32 %v5530, %v5914
        %v5916 = vpop.f32.mrf.mxu0
        %5917 = vmatprep.mubr.f32.mxu0 %v3548
        %5918 = vmatmul.mubr.f32.gmra.mxu0 %v3547
        %v5919 = vpop.f32.mrf.mxu0
        %v5920 = vadd.f32 %v5535, %v5919
        %v5921 = vpop.f32.mrf.mxu0
        %5922 = vmatprep.mubr.f32.mxu0 %v3550
        %5923 = vmatmul.mubr.f32.gmra.mxu0 %v3549
        %v5924 = vpop.f32.mrf.mxu0
        %v5925 = vadd.f32 %v5540, %v5924
        %v5926 = vpop.f32.mrf.mxu0
        %5927 = vmatprep.mubr.f32.mxu0 %v3552
        %5928 = vmatmul.mubr.f32.gmra.mxu0 %v3551
        %v5929 = vpop.f32.mrf.mxu0
        %v5930 = vadd.f32 %v5545, %v5929
        %v5931 = vpop.f32.mrf.mxu0
        %5932 = vmatprep.mubr.f32.mxu0 %v3554
        %5933 = vmatmul.mubr.f32.gmra.mxu0 %v3553
        %v5934 = vpop.f32.mrf.mxu0
        %v5935 = vadd.f32 %v5550, %v5934
        %v5936 = vpop.f32.mrf.mxu0
        %5937 = vmatprep.mubr.f32.mxu0 %v3556
        %5938 = vmatmul.mubr.f32.gmra.mxu0 %v3555
        %v5939 = vpop.f32.mrf.mxu0
        %v5940 = vadd.f32 %v5555, %v5939
        %v5941 = vpop.f32.mrf.mxu0
        %5942 = vmatprep.mubr.f32.mxu0 %v3558
        %5943 = vmatmul.mubr.f32.gmra.mxu0 %v3557
        %v5944 = vpop.f32.mrf.mxu0
        %v5945 = vadd.f32 %v5560, %v5944
        %v5946 = vpop.f32.mrf.mxu0
        %5947 = vmatprep.mubr.f32.mxu0 %v3560
        %5948 = vmatmul.mubr.f32.gmra.mxu0 %v3559
        %v5949 = vpop.f32.mrf.mxu0
        %v5950 = vadd.f32 %v5565, %v5949
        %v5951 = vpop.f32.mrf.mxu0
        %5952 = vmatprep.mubr.f32.mxu0 %v3562
        %5953 = vmatmul.mubr.f32.gmra.mxu0 %v3561
        %v5954 = vpop.f32.mrf.mxu0
        %v5955 = vadd.f32 %v5570, %v5954
        %v5956 = vpop.f32.mrf.mxu0
        %5957 = vmatprep.mubr.f32.mxu0 %v3564
        %5958 = vmatmul.mubr.f32.gmra.mxu0 %v3563
        %v5959 = vpop.f32.mrf.mxu0
        %v5960 = vadd.f32 %v5575, %v5959
        %v5961 = vpop.f32.mrf.mxu0
        %5962 = vmatprep.mubr.f32.mxu0 %v3566
        %5963 = vmatmul.mubr.f32.gmra.mxu0 %v3565
        %v5964 = vpop.f32.mrf.mxu0
        %v5965 = vadd.f32 %v5580, %v5964
        %v5966 = vpop.f32.mrf.mxu0
        %5967 = vmatprep.mubr.f32.mxu0 %v3568
        %5968 = vmatmul.mubr.f32.gmra.mxu0 %v3567
        %v5969 = vpop.f32.mrf.mxu0
        %v5970 = vadd.f32 %v5585, %v5969
        %v5971 = vpop.f32.mrf.mxu0
        %5972 = vmatprep.mubr.f32.mxu0 %v3570
        %5973 = vmatmul.mubr.f32.gmra.mxu0 %v3569
        %v5974 = vpop.f32.mrf.mxu0
        %v5975 = vadd.f32 %v5590, %v5974
        %v5976 = vpop.f32.mrf.mxu0
        %5977 = vmatprep.mubr.f32.mxu0 %v3572
        %5978 = vmatmul.mubr.f32.gmra.mxu0 %v3571
        %v5979 = vpop.f32.mrf.mxu0
        %v5980 = vadd.f32 %v5595, %v5979
        %v5981 = vpop.f32.mrf.mxu0
        %5982 = vmatprep.mubr.f32.mxu0 %v3574
        %5983 = vmatmul.mubr.f32.gmra.mxu0 %v3573
        %v5984 = vpop.f32.mrf.mxu0
        %v5985 = vadd.f32 %v5600, %v5984
        %v5986 = vpop.f32.mrf.mxu0
        %5987 = vmatprep.mubr.f32.mxu0 %v3576
        %5988 = vmatmul.mubr.f32.gmra.mxu0 %v3575
        %v5989 = vpop.f32.mrf.mxu0
        %v5990 = vadd.f32 %v5605, %v5989
        %v5991 = vpop.f32.mrf.mxu0
        %5992 = vmatprep.mubr.f32.mxu0 %v3578
        %5993 = vmatmul.mubr.f32.gmra.mxu0 %v3577
        %v5994 = vpop.f32.mrf.mxu0
        %v5995 = vadd.f32 %v5610, %v5994
        %v5996 = vpop.f32.mrf.mxu0
        %5997 = vmatprep.mubr.f32.mxu0 %v3580
        %5998 = vmatmul.mubr.f32.gmra.mxu0 %v3579
        %v5999 = vpop.f32.mrf.mxu0
        %v6000 = vadd.f32 %v5615, %v5999
        %v6001 = vpop.f32.mrf.mxu0
        %6002 = vmatprep.mubr.f32.mxu0 %v3582
        %6003 = vmatmul.mubr.f32.gmra.mxu0 %v3581
        %v6004 = vpop.f32.mrf.mxu0
        %v6005 = vadd.f32 %v5620, %v6004
        %v6006 = vpop.f32.mrf.mxu0
        %6007 = vmatprep.mubr.f32.mxu0 %v3584
        %6008 = vmatmul.mubr.f32.gmra.mxu0 %v3583
        %v6009 = vpop.f32.mrf.mxu0
        %v6010 = vadd.f32 %v5625, %v6009
        %v6011 = vpop.f32.mrf.mxu0
        %6012 = vmatprep.mubr.f32.mxu0 %v3586
        %6013 = vmatmul.mubr.f32.gmra.mxu0 %v3585
        %v6014 = vpop.f32.mrf.mxu0
        %v6015 = vadd.f32 %v5630, %v6014
        %v6016 = vpop.f32.mrf.mxu0
        %6017 = vmatprep.mubr.f32.mxu0 %v3588
        %6018 = vmatmul.mubr.f32.gmra.mxu0 %v3587
        %v6019 = vpop.f32.mrf.mxu0
        %v6020 = vadd.f32 %v5635, %v6019
        %v6021 = vpop.f32.mrf.mxu0
        %6022 = vmatprep.mubr.f32.mxu0 %v3590
        %6023 = vmatmul.mubr.f32.gmra.mxu0 %v3589
        %v6024 = vpop.f32.mrf.mxu0
        %v6025 = vadd.f32 %v5640, %v6024
        %v6026 = vpop.f32.mrf.mxu0
        %6027 = vmatprep.mubr.f32.mxu0 %v3592
        %6028 = vmatmul.mubr.f32.gmra.mxu0 %v3591
        %v6029 = vpop.f32.mrf.mxu0
        %v6030 = vadd.f32 %v5645, %v6029
        %v6031 = vpop.f32.mrf.mxu0
        %6032 = vmatprep.mubr.f32.mxu0 %v3594
        %6033 = vmatmul.mubr.f32.gmra.mxu0 %v3593
        %v6034 = vpop.f32.mrf.mxu0
        %v6035 = vadd.f32 %v5650, %v6034
        %v6036 = vpop.f32.mrf.mxu0
        %6037 = vmatprep.mubr.f32.mxu0 %v3596
        %6038 = vmatmul.mubr.f32.gmra.mxu0 %v3595
        %v6039 = vpop.f32.mrf.mxu0
        %v6040 = vadd.f32 %v5655, %v6039
        %v6041 = vpop.f32.mrf.mxu0
        %6042 = vmatprep.mubr.f32.mxu0 %v3598
        %6043 = vmatmul.mubr.f32.gmra.mxu0 %v3597
        %v6044 = vpop.f32.mrf.mxu0
        %v6045 = vadd.f32 %v5660, %v6044
        %v6046 = vpop.f32.mrf.mxu0
        %6047 = vmatprep.mubr.f32.mxu0 %v3600
        %6048 = vmatmul.mubr.f32.gmra.mxu0 %v3599
        %v6049 = vpop.f32.mrf.mxu0
        %v6050 = vadd.f32 %v5665, %v6049
        %v6051 = vpop.f32.mrf.mxu0
        %6052 = vmatprep.mubr.f32.mxu0 %v3602
        %6053 = vmatmul.mubr.f32.gmra.mxu0 %v3601
        %v6054 = vpop.f32.mrf.mxu0
        %v6055 = vadd.f32 %v5670, %v6054
        %v6056 = vpop.f32.mrf.mxu0
        %6057 = vmatprep.mubr.f32.mxu0 %v3604
        %6058 = vmatmul.mubr.f32.gmra.mxu0 %v3603
        %v6059 = vpop.f32.mrf.mxu0
        %v6060 = vadd.f32 %v5675, %v6059
        %v6061 = vpop.f32.mrf.mxu0
        %6062 = vmatprep.mubr.f32.mxu0 %v3606
        %6063 = vmatmul.mubr.f32.gmra.mxu0 %v3605
        %v6064 = vpop.f32.mrf.mxu0
        %v6065 = vadd.f32 %v5680, %v6064
        %v6066 = vpop.f32.mrf.mxu0
        %6067 = vmatprep.mubr.f32.mxu0 %v3608
        %6068 = vmatmul.mubr.f32.gmra.mxu0 %v3607
        %v6069 = vpop.f32.mrf.mxu0
        %v6070 = vadd.f32 %v5685, %v6069
        %v6071 = vpop.f32.mrf.mxu0
        %6072 = vmatprep.mubr.f32.mxu0 %v3610
        %6073 = vmatmul.mubr.f32.gmra.mxu0 %v3609
        %v6074 = vpop.f32.mrf.mxu0
        %v6075 = vadd.f32 %v5690, %v6074
        %v6076 = vpop.f32.mrf.mxu0
        %6077 = vmatprep.mubr.f32.mxu0 %v3612
        %6078 = vmatmul.mubr.f32.gmra.mxu0 %v3611
        %v6079 = vpop.f32.mrf.mxu0
        %v6080 = vadd.f32 %v5695, %v6079
        %v6081 = vpop.f32.mrf.mxu0
        %6082 = vmatprep.mubr.f32.mxu0 %v3614
        %6083 = vmatmul.mubr.f32.gmra.mxu0 %v3613
        %v6084 = vpop.f32.mrf.mxu0
        %v6085 = vadd.f32 %v5700, %v6084
        %v6086 = vpop.f32.mrf.mxu0
        %6087 = vmatprep.mubr.f32.mxu0 %v3616
        %6088 = vmatmul.mubr.f32.gmra.mxu0 %v3615
        %v6089 = vpop.f32.mrf.mxu0
        %v6090 = vadd.f32 %v5705, %v6089
        %v6091 = vpop.f32.mrf.mxu0
        %6092 = vmatprep.mubr.f32.mxu0 %v3618
        %6093 = vmatmul.mubr.f32.gmra.mxu0 %v3617
        %v6094 = vpop.f32.mrf.mxu0
        %v6095 = vadd.f32 %v5710, %v6094
        %v6096 = vpop.f32.mrf.mxu0
        %6097 = vmatprep.mubr.f32.mxu0 %v3620
        %6098 = vmatmul.mubr.f32.gmra.mxu0 %v3619
        %v6099 = vpop.f32.mrf.mxu0
        %v6100 = vadd.f32 %v5715, %v6099
        %v6101 = vpop.f32.mrf.mxu0
        %6102 = vmatprep.mubr.f32.mxu0 %v3622
        %6103 = vmatmul.mubr.f32.gmra.mxu0 %v3621
        %v6104 = vpop.f32.mrf.mxu0
        %v6105 = vadd.f32 %v5720, %v6104
        %v6106 = vpop.f32.mrf.mxu0
        %6107 = vmatprep.mubr.f32.mxu0 %v3624
        %6108 = vmatmul.mubr.f32.gmra.mxu0 %v3623
        %v6109 = vpop.f32.mrf.mxu0
        %v6110 = vadd.f32 %v5725, %v6109
        %v6111 = vpop.f32.mrf.mxu0
        %6112 = vmatprep.mubr.f32.mxu0 %v3626
        %6113 = vmatmul.mubr.f32.gmra.mxu0 %v3625
        %v6114 = vpop.f32.mrf.mxu0
        %v6115 = vadd.f32 %v5730, %v6114
        %v6116 = vpop.f32.mrf.mxu0
        %6117 = vmatprep.mubr.f32.mxu0 %v3628
        %6118 = vmatmul.mubr.f32.gmra.mxu0 %v3627
        %v6119 = vpop.f32.mrf.mxu0
        %v6120 = vadd.f32 %v5735, %v6119
        %v6121 = vpop.f32.mrf.mxu0
        %6122 = vmatprep.mubr.f32.mxu0 %v3630
        %6123 = vmatmul.mubr.f32.gmra.mxu0 %v3629
        %v6124 = vpop.f32.mrf.mxu0
        %v6125 = vadd.f32 %v5740, %v6124
        %v6126 = vpop.f32.mrf.mxu0
        %6127 = vmatprep.mubr.f32.mxu0 %v3632
        %6128 = vmatmul.mubr.f32.gmra.mxu0 %v3631
        %v6129 = vpop.f32.mrf.mxu0
        %v6130 = vadd.f32 %v5745, %v6129
        %v6131 = vpop.f32.mrf.mxu0
        %6132 = vmatprep.mubr.f32.mxu0 %v3634
        %6133 = vmatmul.mubr.f32.gmra.mxu0 %v3633
        %v6134 = vpop.f32.mrf.mxu0
        %v6135 = vadd.f32 %v5750, %v6134
        %v6136 = vpop.f32.mrf.mxu0
        %6137 = vmatprep.mubr.f32.mxu0 %v3636
        %6138 = vmatmul.mubr.f32.gmra.mxu0 %v3635
        %v6139 = vpop.f32.mrf.mxu0
        %v6140 = vadd.f32 %v5755, %v6139
        %v6141 = vpop.f32.mrf.mxu0
        %6142 = vmatprep.mubr.f32.mxu0 %v3638
        %6143 = vmatmul.mubr.f32.gmra.mxu0 %v3637
        %v6144 = vpop.f32.mrf.mxu0
        %v6145 = vadd.f32 %v5760, %v6144
        %v6146 = vpop.f32.mrf.mxu0
        %6147 = vmatprep.mubr.f32.mxu0 %v3640
        %6148 = vmatmul.mubr.f32.gmra.mxu0 %v3639
        %v6149 = vpop.f32.mrf.mxu0
        %v6150 = vadd.f32 %v5765, %v6149
        %v6151 = vpop.f32.mrf.mxu0
        %6152 = vmatprep.mubr.f32.mxu0 %v3642
        %6153 = vmatmul.mubr.f32.gmra.mxu0 %v3641
        %v6154 = vpop.f32.mrf.mxu0
        %v6155 = vadd.f32 %v5770, %v6154
        %v6156 = vpop.f32.mrf.mxu0
        %6157 = vmatprep.mubr.f32.mxu0 %v3644
        %6158 = vmatmul.mubr.f32.gmra.mxu0 %v3643
        %v6159 = vpop.f32.mrf.mxu0
        %v6160 = vadd.f32 %v5775, %v6159
        %v6161 = vpop.f32.mrf.mxu0
        %6162 = vmatprep.mubr.f32.mxu0 %v3646
        %6163 = vmatmul.mubr.f32.gmra.mxu0 %v3645
        %v6164 = vpop.f32.mrf.mxu0
        %v6165 = vadd.f32 %v5780, %v6164
        %v6166 = vpop.f32.mrf.mxu0
        %6167 = vmatprep.mubr.f32.mxu0 %v3648
        %6168 = vmatmul.mubr.f32.gmra.mxu0 %v3647
        %v6169 = vpop.f32.mrf.mxu0
        %v6170 = vadd.f32 %v5785, %v6169
        %v6171 = vpop.f32.mrf.mxu0
        %6172 = vmatprep.mubr.f32.mxu0 %v3650
        %6173 = vmatmul.mubr.f32.gmra.mxu0 %v3649
        %v6174 = vpop.f32.mrf.mxu0
        %v6175 = vadd.f32 %v5790, %v6174
        %v6176 = vpop.f32.mrf.mxu0
        %6177 = vmatprep.mubr.f32.mxu0 %v3652
        %6178 = vmatmul.mubr.f32.gmra.mxu0 %v3651
        %v6179 = vpop.f32.mrf.mxu0
        %v6180 = vadd.f32 %v5795, %v6179
        %v6181 = vpop.f32.mrf.mxu0
        %6182 = vdwg.mxu0
        %6183 = vmatprep.subr.mxu0 0.0
        %6184 = vmatpush1.msra.mxu0 %v5396
        %6185 = vmatprep.subr.mxu0 0.0
        %6186 = vmatpush1.msra.mxu0 %v5395
        %6187 = vmatprep.subr.mxu0 0.0
        %6188 = vmatpush1.msra.mxu0 %v5394
        %6189 = vmatprep.subr.mxu0 0.0
        %6190 = vmatpush1.msra.mxu0 %v5393
        %6191 = vmatprep.subr.mxu0 0.0
        %6192 = vmatpush1.msra.mxu0 %v5392
        %6193 = vmatprep.subr.mxu0 0.0
        %6194 = vmatpush1.msra.mxu0 %v5391
        %6195 = vmatprep.subr.mxu0 0.0
        %6196 = vmatpush1.msra.mxu0 %v5390
        %6197 = vmatprep.subr.mxu0 0.0
        %6198 = vmatpush1.msra.mxu0 %v5389
        %6199 = vmatprep.subr.mxu0 0.0
        %6200 = vmatpush1.msra.mxu0 %v5388
        %6201 = vmatprep.subr.mxu0 0.0
        %6202 = vmatpush1.msra.mxu0 %v5387
        %6203 = vmatprep.subr.mxu0 0.0
        %6204 = vmatpush1.msra.mxu0 %v5386
        %6205 = vmatprep.subr.mxu0 0.0
        %6206 = vmatpush1.msra.mxu0 %v5385
        %6207 = vmatprep.subr.mxu0 0.0
        %6208 = vmatpush1.msra.mxu0 %v5384
        %6209 = vmatprep.subr.mxu0 0.0
        %6210 = vmatpush1.msra.mxu0 %v5383
        %6211 = vmatprep.subr.mxu0 0.0
        %6212 = vmatpush1.msra.mxu0 %v5382
        %6213 = vmatprep.subr.mxu0 0.0
        %6214 = vmatpush1.msra.mxu0 %v5381
        %6215 = vmatprep.subr.mxu0 0.0
        %6216 = vmatpush2.msra.mxu0 %v5412
        %6217 = vmatprep.subr.mxu0 0.0
        %6218 = vmatpush2.msra.mxu0 %v5411
        %6219 = vmatprep.subr.mxu0 0.0
        %6220 = vmatpush2.msra.mxu0 %v5410
        %6221 = vmatprep.subr.mxu0 0.0
        %6222 = vmatpush2.msra.mxu0 %v5409
        %6223 = vmatprep.subr.mxu0 0.0
        %6224 = vmatpush2.msra.mxu0 %v5408
        %6225 = vmatprep.subr.mxu0 0.0
        %6226 = vmatpush2.msra.mxu0 %v5407
        %6227 = vmatprep.subr.mxu0 0.0
        %6228 = vmatpush2.msra.mxu0 %v5406
        %6229 = vmatprep.subr.mxu0 0.0
        %6230 = vmatpush2.msra.mxu0 %v5405
        %6231 = vmatprep.subr.mxu0 0.0
        %6232 = vmatpush2.msra.mxu0 %v5404
        %6233 = vmatprep.subr.mxu0 0.0
        %6234 = vmatpush2.msra.mxu0 %v5403
        %6235 = vmatprep.subr.mxu0 0.0
        %6236 = vmatpush2.msra.mxu0 %v5402
        %6237 = vmatprep.subr.mxu0 0.0
        %6238 = vmatpush2.msra.mxu0 %v5401
        %6239 = vmatprep.subr.mxu0 0.0
        %6240 = vmatpush2.msra.mxu0 %v5400
        %6241 = vmatprep.subr.mxu0 0.0
        %6242 = vmatpush2.msra.mxu0 %v5399
        %6243 = vmatprep.subr.mxu0 0.0
        %6244 = vmatpush2.msra.mxu0 %v5398
        %6245 = vmatprep.subr.mxu0 0.0
        %6246 = vmatpush2.msra.mxu0 %v5397
        %6247 = vmatprep.mubr.f32.mxu0 %v5190
        %6248 = vmatmul.mubr.f32.gmra.mxu0 %v5189
        %v6249 = vpop.f32.mrf.mxu0
        %v6250 = vadd.f32 %v5865, %v6249
        %v6251 = vpop.f32.mrf.mxu0
        %6252 = vmatprep.mubr.f32.mxu0 %v5192
        %6253 = vmatmul.mubr.f32.gmra.mxu0 %v5191
        %v6254 = vpop.f32.mrf.mxu0
        %v6255 = vadd.f32 %v5870, %v6254
        %v6256 = vpop.f32.mrf.mxu0
        %6257 = vmatprep.mubr.f32.mxu0 %v5194
        %6258 = vmatmul.mubr.f32.gmra.mxu0 %v5193
        %v6259 = vpop.f32.mrf.mxu0
        %v6260 = vadd.f32 %v5875, %v6259
        %v6261 = vpop.f32.mrf.mxu0
        %6262 = vmatprep.mubr.f32.mxu0 %v5196
        %6263 = vmatmul.mubr.f32.gmra.mxu0 %v5195
        %v6264 = vpop.f32.mrf.mxu0
        %v6265 = vadd.f32 %v5880, %v6264
        %v6266 = vpop.f32.mrf.mxu0
        %6267 = vmatprep.mubr.f32.mxu0 %v5198
        %6268 = vmatmul.mubr.f32.gmra.mxu0 %v5197
        %v6269 = vpop.f32.mrf.mxu0
        %v6270 = vadd.f32 %v5885, %v6269
        %v6271 = vpop.f32.mrf.mxu0
        %6272 = vmatprep.mubr.f32.mxu0 %v5200
        %6273 = vmatmul.mubr.f32.gmra.mxu0 %v5199
        %v6274 = vpop.f32.mrf.mxu0
        %v6275 = vadd.f32 %v5890, %v6274
        %v6276 = vpop.f32.mrf.mxu0
        %6277 = vmatprep.mubr.f32.mxu0 %v5202
        %6278 = vmatmul.mubr.f32.gmra.mxu0 %v5201
        %v6279 = vpop.f32.mrf.mxu0
        %v6280 = vadd.f32 %v5895, %v6279
        %v6281 = vpop.f32.mrf.mxu0
        %6282 = vmatprep.mubr.f32.mxu0 %v5204
        %6283 = vmatmul.mubr.f32.gmra.mxu0 %v5203
        %v6284 = vpop.f32.mrf.mxu0
        %v6285 = vadd.f32 %v5900, %v6284
        %v6286 = vpop.f32.mrf.mxu0
        %6287 = vmatprep.mubr.f32.mxu0 %v5206
        %6288 = vmatmul.mubr.f32.gmra.mxu0 %v5205
        %v6289 = vpop.f32.mrf.mxu0
        %v6290 = vadd.f32 %v5905, %v6289
        %v6291 = vpop.f32.mrf.mxu0
        %6292 = vmatprep.mubr.f32.mxu0 %v5208
        %6293 = vmatmul.mubr.f32.gmra.mxu0 %v5207
        %v6294 = vpop.f32.mrf.mxu0
        %v6295 = vadd.f32 %v5910, %v6294
        %v6296 = vpop.f32.mrf.mxu0
        %6297 = vmatprep.mubr.f32.mxu0 %v5210
        %6298 = vmatmul.mubr.f32.gmra.mxu0 %v5209
        %v6299 = vpop.f32.mrf.mxu0
        %v6300 = vadd.f32 %v5915, %v6299
        %v6301 = vpop.f32.mrf.mxu0
        %6302 = vmatprep.mubr.f32.mxu0 %v5212
        %6303 = vmatmul.mubr.f32.gmra.mxu0 %v5211
        %v6304 = vpop.f32.mrf.mxu0
        %v6305 = vadd.f32 %v5920, %v6304
        %v6306 = vpop.f32.mrf.mxu0
        %6307 = vmatprep.mubr.f32.mxu0 %v5214
        %6308 = vmatmul.mubr.f32.gmra.mxu0 %v5213
        %v6309 = vpop.f32.mrf.mxu0
        %v6310 = vadd.f32 %v5925, %v6309
        %v6311 = vpop.f32.mrf.mxu0
        %6312 = vmatprep.mubr.f32.mxu0 %v5216
        %6313 = vmatmul.mubr.f32.gmra.mxu0 %v5215
        %v6314 = vpop.f32.mrf.mxu0
        %v6315 = vadd.f32 %v5930, %v6314
        %v6316 = vpop.f32.mrf.mxu0
        %6317 = vmatprep.mubr.f32.mxu0 %v5218
        %6318 = vmatmul.mubr.f32.gmra.mxu0 %v5217
        %v6319 = vpop.f32.mrf.mxu0
        %v6320 = vadd.f32 %v5935, %v6319
        %v6321 = vpop.f32.mrf.mxu0
        %6322 = vmatprep.mubr.f32.mxu0 %v5220
        %6323 = vmatmul.mubr.f32.gmra.mxu0 %v5219
        %v6324 = vpop.f32.mrf.mxu0
        %v6325 = vadd.f32 %v5940, %v6324
        %v6326 = vpop.f32.mrf.mxu0
        %6327 = vmatprep.mubr.f32.mxu0 %v5222
        %6328 = vmatmul.mubr.f32.gmra.mxu0 %v5221
        %v6329 = vpop.f32.mrf.mxu0
        %v6330 = vadd.f32 %v5945, %v6329
        %v6331 = vpop.f32.mrf.mxu0
        %6332 = vmatprep.mubr.f32.mxu0 %v5224
        %6333 = vmatmul.mubr.f32.gmra.mxu0 %v5223
        %v6334 = vpop.f32.mrf.mxu0
        %v6335 = vadd.f32 %v5950, %v6334
        %v6336 = vpop.f32.mrf.mxu0
        %6337 = vmatprep.mubr.f32.mxu0 %v5226
        %6338 = vmatmul.mubr.f32.gmra.mxu0 %v5225
        %v6339 = vpop.f32.mrf.mxu0
        %v6340 = vadd.f32 %v5955, %v6339
        %v6341 = vpop.f32.mrf.mxu0
        %6342 = vmatprep.mubr.f32.mxu0 %v5228
        %6343 = vmatmul.mubr.f32.gmra.mxu0 %v5227
        %v6344 = vpop.f32.mrf.mxu0
        %v6345 = vadd.f32 %v5960, %v6344
        %v6346 = vpop.f32.mrf.mxu0
        %6347 = vmatprep.mubr.f32.mxu0 %v5230
        %6348 = vmatmul.mubr.f32.gmra.mxu0 %v5229
        %v6349 = vpop.f32.mrf.mxu0
        %v6350 = vadd.f32 %v5965, %v6349
        %v6351 = vpop.f32.mrf.mxu0
        %6352 = vmatprep.mubr.f32.mxu0 %v5232
        %6353 = vmatmul.mubr.f32.gmra.mxu0 %v5231
        %v6354 = vpop.f32.mrf.mxu0
        %v6355 = vadd.f32 %v5970, %v6354
        %v6356 = vpop.f32.mrf.mxu0
        %6357 = vmatprep.mubr.f32.mxu0 %v5234
        %6358 = vmatmul.mubr.f32.gmra.mxu0 %v5233
        %v6359 = vpop.f32.mrf.mxu0
        %v6360 = vadd.f32 %v5975, %v6359
        %v6361 = vpop.f32.mrf.mxu0
        %6362 = vmatprep.mubr.f32.mxu0 %v5236
        %6363 = vmatmul.mubr.f32.gmra.mxu0 %v5235
        %v6364 = vpop.f32.mrf.mxu0
        %v6365 = vadd.f32 %v5980, %v6364
        %v6366 = vpop.f32.mrf.mxu0
        %6367 = vmatprep.mubr.f32.mxu0 %v5238
        %6368 = vmatmul.mubr.f32.gmra.mxu0 %v5237
        %v6369 = vpop.f32.mrf.mxu0
        %v6370 = vadd.f32 %v5985, %v6369
        %v6371 = vpop.f32.mrf.mxu0
        %6372 = vmatprep.mubr.f32.mxu0 %v5240
        %6373 = vmatmul.mubr.f32.gmra.mxu0 %v5239
        %v6374 = vpop.f32.mrf.mxu0
        %v6375 = vadd.f32 %v5990, %v6374
        %v6376 = vpop.f32.mrf.mxu0
        %6377 = vmatprep.mubr.f32.mxu0 %v5242
        %6378 = vmatmul.mubr.f32.gmra.mxu0 %v5241
        %v6379 = vpop.f32.mrf.mxu0
        %v6380 = vadd.f32 %v5995, %v6379
        %v6381 = vpop.f32.mrf.mxu0
        %6382 = vmatprep.mubr.f32.mxu0 %v5244
        %6383 = vmatmul.mubr.f32.gmra.mxu0 %v5243
        %v6384 = vpop.f32.mrf.mxu0
        %v6385 = vadd.f32 %v6000, %v6384
        %v6386 = vpop.f32.mrf.mxu0
        %6387 = vmatprep.mubr.f32.mxu0 %v5246
        %6388 = vmatmul.mubr.f32.gmra.mxu0 %v5245
        %v6389 = vpop.f32.mrf.mxu0
        %v6390 = vadd.f32 %v6005, %v6389
        %v6391 = vpop.f32.mrf.mxu0
        %6392 = vmatprep.mubr.f32.mxu0 %v5248
        %6393 = vmatmul.mubr.f32.gmra.mxu0 %v5247
        %v6394 = vpop.f32.mrf.mxu0
        %v6395 = vadd.f32 %v6010, %v6394
        %v6396 = vpop.f32.mrf.mxu0
        %6397 = vmatprep.mubr.f32.mxu0 %v5250
        %6398 = vmatmul.mubr.f32.gmra.mxu0 %v5249
        %v6399 = vpop.f32.mrf.mxu0
        %v6400 = vadd.f32 %v6015, %v6399
        %v6401 = vpop.f32.mrf.mxu0
        %6402 = vmatprep.mubr.f32.mxu0 %v5252
        %6403 = vmatmul.mubr.f32.gmra.mxu0 %v5251
        %v6404 = vpop.f32.mrf.mxu0
        %v6405 = vadd.f32 %v6020, %v6404
        %v6406 = vpop.f32.mrf.mxu0
        %6407 = vmatprep.mubr.f32.mxu0 %v5254
        %6408 = vmatmul.mubr.f32.gmra.mxu0 %v5253
        %v6409 = vpop.f32.mrf.mxu0
        %v6410 = vadd.f32 %v6025, %v6409
        %v6411 = vpop.f32.mrf.mxu0
        %6412 = vmatprep.mubr.f32.mxu0 %v5256
        %6413 = vmatmul.mubr.f32.gmra.mxu0 %v5255
        %v6414 = vpop.f32.mrf.mxu0
        %v6415 = vadd.f32 %v6030, %v6414
        %v6416 = vpop.f32.mrf.mxu0
        %6417 = vmatprep.mubr.f32.mxu0 %v5258
        %6418 = vmatmul.mubr.f32.gmra.mxu0 %v5257
        %v6419 = vpop.f32.mrf.mxu0
        %v6420 = vadd.f32 %v6035, %v6419
        %v6421 = vpop.f32.mrf.mxu0
        %6422 = vmatprep.mubr.f32.mxu0 %v5260
        %6423 = vmatmul.mubr.f32.gmra.mxu0 %v5259
        %v6424 = vpop.f32.mrf.mxu0
        %v6425 = vadd.f32 %v6040, %v6424
        %v6426 = vpop.f32.mrf.mxu0
        %6427 = vmatprep.mubr.f32.mxu0 %v5262
        %6428 = vmatmul.mubr.f32.gmra.mxu0 %v5261
        %v6429 = vpop.f32.mrf.mxu0
        %v6430 = vadd.f32 %v6045, %v6429
        %v6431 = vpop.f32.mrf.mxu0
        %6432 = vmatprep.mubr.f32.mxu0 %v5264
        %6433 = vmatmul.mubr.f32.gmra.mxu0 %v5263
        %v6434 = vpop.f32.mrf.mxu0
        %v6435 = vadd.f32 %v6050, %v6434
        %v6436 = vpop.f32.mrf.mxu0
        %6437 = vmatprep.mubr.f32.mxu0 %v5266
        %6438 = vmatmul.mubr.f32.gmra.mxu0 %v5265
        %v6439 = vpop.f32.mrf.mxu0
        %v6440 = vadd.f32 %v6055, %v6439
        %v6441 = vpop.f32.mrf.mxu0
        %6442 = vmatprep.mubr.f32.mxu0 %v5268
        %6443 = vmatmul.mubr.f32.gmra.mxu0 %v5267
        %v6444 = vpop.f32.mrf.mxu0
        %v6445 = vadd.f32 %v6060, %v6444
        %v6446 = vpop.f32.mrf.mxu0
        %6447 = vmatprep.mubr.f32.mxu0 %v5270
        %6448 = vmatmul.mubr.f32.gmra.mxu0 %v5269
        %v6449 = vpop.f32.mrf.mxu0
        %v6450 = vadd.f32 %v6065, %v6449
        %v6451 = vpop.f32.mrf.mxu0
        %6452 = vmatprep.mubr.f32.mxu0 %v5272
        %6453 = vmatmul.mubr.f32.gmra.mxu0 %v5271
        %v6454 = vpop.f32.mrf.mxu0
        %v6455 = vadd.f32 %v6070, %v6454
        %v6456 = vpop.f32.mrf.mxu0
        %6457 = vmatprep.mubr.f32.mxu0 %v5274
        %6458 = vmatmul.mubr.f32.gmra.mxu0 %v5273
        %v6459 = vpop.f32.mrf.mxu0
        %v6460 = vadd.f32 %v6075, %v6459
        %v6461 = vpop.f32.mrf.mxu0
        %6462 = vmatprep.mubr.f32.mxu0 %v5276
        %6463 = vmatmul.mubr.f32.gmra.mxu0 %v5275
        %v6464 = vpop.f32.mrf.mxu0
        %v6465 = vadd.f32 %v6080, %v6464
        %v6466 = vpop.f32.mrf.mxu0
        %6467 = vmatprep.mubr.f32.mxu0 %v5278
        %6468 = vmatmul.mubr.f32.gmra.mxu0 %v5277
        %v6469 = vpop.f32.mrf.mxu0
        %v6470 = vadd.f32 %v6085, %v6469
        %v6471 = vpop.f32.mrf.mxu0
        %6472 = vmatprep.mubr.f32.mxu0 %v5280
        %6473 = vmatmul.mubr.f32.gmra.mxu0 %v5279
        %v6474 = vpop.f32.mrf.mxu0
        %v6475 = vadd.f32 %v6090, %v6474
        %v6476 = vpop.f32.mrf.mxu0
        %6477 = vmatprep.mubr.f32.mxu0 %v5282
        %6478 = vmatmul.mubr.f32.gmra.mxu0 %v5281
        %v6479 = vpop.f32.mrf.mxu0
        %v6480 = vadd.f32 %v6095, %v6479
        %v6481 = vpop.f32.mrf.mxu0
        %6482 = vmatprep.mubr.f32.mxu0 %v5284
        %6483 = vmatmul.mubr.f32.gmra.mxu0 %v5283
        %v6484 = vpop.f32.mrf.mxu0
        %v6485 = vadd.f32 %v6100, %v6484
        %v6486 = vpop.f32.mrf.mxu0
        %6487 = vmatprep.mubr.f32.mxu0 %v5286
        %6488 = vmatmul.mubr.f32.gmra.mxu0 %v5285
        %v6489 = vpop.f32.mrf.mxu0
        %v6490 = vadd.f32 %v6105, %v6489
        %v6491 = vpop.f32.mrf.mxu0
        %6492 = vmatprep.mubr.f32.mxu0 %v5288
        %6493 = vmatmul.mubr.f32.gmra.mxu0 %v5287
        %v6494 = vpop.f32.mrf.mxu0
        %v6495 = vadd.f32 %v6110, %v6494
        %v6496 = vpop.f32.mrf.mxu0
        %6497 = vmatprep.mubr.f32.mxu0 %v5290
        %6498 = vmatmul.mubr.f32.gmra.mxu0 %v5289
        %v6499 = vpop.f32.mrf.mxu0
        %v6500 = vadd.f32 %v6115, %v6499
        %v6501 = vpop.f32.mrf.mxu0
        %6502 = vmatprep.mubr.f32.mxu0 %v5292
        %6503 = vmatmul.mubr.f32.gmra.mxu0 %v5291
        %v6504 = vpop.f32.mrf.mxu0
        %v6505 = vadd.f32 %v6120, %v6504
        %v6506 = vpop.f32.mrf.mxu0
        %6507 = vmatprep.mubr.f32.mxu0 %v5294
        %6508 = vmatmul.mubr.f32.gmra.mxu0 %v5293
        %v6509 = vpop.f32.mrf.mxu0
        %v6510 = vadd.f32 %v6125, %v6509
        %v6511 = vpop.f32.mrf.mxu0
        %6512 = vmatprep.mubr.f32.mxu0 %v5296
        %6513 = vmatmul.mubr.f32.gmra.mxu0 %v5295
        %v6514 = vpop.f32.mrf.mxu0
        %v6515 = vadd.f32 %v6130, %v6514
        %v6516 = vpop.f32.mrf.mxu0
        %6517 = vmatprep.mubr.f32.mxu0 %v5298
        %6518 = vmatmul.mubr.f32.gmra.mxu0 %v5297
        %v6519 = vpop.f32.mrf.mxu0
        %v6520 = vadd.f32 %v6135, %v6519
        %v6521 = vpop.f32.mrf.mxu0
        %6522 = vmatprep.mubr.f32.mxu0 %v5300
        %6523 = vmatmul.mubr.f32.gmra.mxu0 %v5299
        %v6524 = vpop.f32.mrf.mxu0
        %v6525 = vadd.f32 %v6140, %v6524
        %v6526 = vpop.f32.mrf.mxu0
        %6527 = vmatprep.mubr.f32.mxu0 %v5302
        %6528 = vmatmul.mubr.f32.gmra.mxu0 %v5301
        %v6529 = vpop.f32.mrf.mxu0
        %v6530 = vadd.f32 %v6145, %v6529
        %v6531 = vpop.f32.mrf.mxu0
        %6532 = vmatprep.mubr.f32.mxu0 %v5304
        %6533 = vmatmul.mubr.f32.gmra.mxu0 %v5303
        %v6534 = vpop.f32.mrf.mxu0
        %v6535 = vadd.f32 %v6150, %v6534
        %v6536 = vpop.f32.mrf.mxu0
        %6537 = vmatprep.mubr.f32.mxu0 %v5306
        %6538 = vmatmul.mubr.f32.gmra.mxu0 %v5305
        %v6539 = vpop.f32.mrf.mxu0
        %v6540 = vadd.f32 %v6155, %v6539
        %v6541 = vpop.f32.mrf.mxu0
        %6542 = vmatprep.mubr.f32.mxu0 %v5308
        %6543 = vmatmul.mubr.f32.gmra.mxu0 %v5307
        %v6544 = vpop.f32.mrf.mxu0
        %v6545 = vadd.f32 %v6160, %v6544
        %v6546 = vpop.f32.mrf.mxu0
        %6547 = vmatprep.mubr.f32.mxu0 %v5310
        %6548 = vmatmul.mubr.f32.gmra.mxu0 %v5309
        %v6549 = vpop.f32.mrf.mxu0
        %v6550 = vadd.f32 %v6165, %v6549
        %v6551 = vpop.f32.mrf.mxu0
        %6552 = vmatprep.mubr.f32.mxu0 %v5312
        %6553 = vmatmul.mubr.f32.gmra.mxu0 %v5311
        %v6554 = vpop.f32.mrf.mxu0
        %v6555 = vadd.f32 %v6170, %v6554
        %v6556 = vpop.f32.mrf.mxu0
        %6557 = vmatprep.mubr.f32.mxu0 %v5314
        %6558 = vmatmul.mubr.f32.gmra.mxu0 %v5313
        %v6559 = vpop.f32.mrf.mxu0
        %v6560 = vadd.f32 %v6175, %v6559
        %v6561 = vpop.f32.mrf.mxu0
        %6562 = vmatprep.mubr.f32.mxu0 %v5316
        %6563 = vmatmul.mubr.f32.gmra.mxu0 %v5315
        %v6564 = vpop.f32.mrf.mxu0
        %v6565 = vadd.f32 %v6180, %v6564
        %v6566 = vpop.f32.mrf.mxu0
        %6567 = vdwg.mxu0
        %6568 = vst [vmem:[%s164] sm:$0xff] %v6250
        %6569 = vst [vmem:[%s164 + $0x8] sm:$0xff] %v6255
        %6570 = vst [vmem:[%s164 + $0x10] sm:$0xff] %v6260
        %6571 = vst [vmem:[%s164 + $0x18] sm:$0xff] %v6265
        %6572 = vst [vmem:[%s164 + $0x20] sm:$0xff] %v6270
        %6573 = vst [vmem:[%s164 + $0x28] sm:$0xff] %v6275
        %6574 = vst [vmem:[%s164 + $0x30] sm:$0xff] %v6280
        %6575 = vst [vmem:[%s164 + $0x38] sm:$0xff] %v6285
        %6576 = vst [vmem:[%s164 + $0x40] sm:$0xff] %v6290
        %6577 = vst [vmem:[%s164 + $0x48] sm:$0xff] %v6295
        %6578 = vst [vmem:[%s164 + $0x50] sm:$0xff] %v6300
        %6579 = vst [vmem:[%s164 + $0x58] sm:$0xff] %v6305
        %6580 = vst [vmem:[%s164 + $0x60] sm:$0xff] %v6310
        %6581 = vst [vmem:[%s164 + $0x68] sm:$0xff] %v6315
        %6582 = vst [vmem:[%s164 + $0x70] sm:$0xff] %v6320
        %6583 = vst [vmem:[%s164 + $0x78] sm:$0xff] %v6325
        %6584 = vst [vmem:[%s164 + $0x80] sm:$0xff] %v6330
        %6585 = vst [vmem:[%s164 + $0x88] sm:$0xff] %v6335
        %6586 = vst [vmem:[%s164 + $0x90] sm:$0xff] %v6340
        %6587 = vst [vmem:[%s164 + $0x98] sm:$0xff] %v6345
        %6588 = vst [vmem:[%s164 + $0xa0] sm:$0xff] %v6350
        %6589 = vst [vmem:[%s164 + $0xa8] sm:$0xff] %v6355
        %6590 = vst [vmem:[%s164 + $0xb0] sm:$0xff] %v6360
        %6591 = vst [vmem:[%s164 + $0xb8] sm:$0xff] %v6365
        %6592 = vst [vmem:[%s164 + $0xc0] sm:$0xff] %v6370
        %6593 = vst [vmem:[%s164 + $0xc8] sm:$0xff] %v6375
        %6594 = vst [vmem:[%s164 + $0xd0] sm:$0xff] %v6380
        %6595 = vst [vmem:[%s164 + $0xd8] sm:$0xff] %v6385
        %6596 = vst [vmem:[%s164 + $0xe0] sm:$0xff] %v6390
        %6597 = vst [vmem:[%s164 + $0xe8] sm:$0xff] %v6395
        %6598 = vst [vmem:[%s164 + $0xf0] sm:$0xff] %v6400
        %6599 = vst [vmem:[%s164 + $0xf8] sm:$0xff] %v6405
        %6600 = vst [vmem:[%s164 + $0x100] sm:$0xff] %v6410
        %6601 = vst [vmem:[%s164 + $0x108] sm:$0xff] %v6415
        %6602 = vst [vmem:[%s164 + $0x110] sm:$0xff] %v6420
        %6603 = vst [vmem:[%s164 + $0x118] sm:$0xff] %v6425
        %6604 = vst [vmem:[%s164 + $0x120] sm:$0xff] %v6430
        %6605 = vst [vmem:[%s164 + $0x128] sm:$0xff] %v6435
        %6606 = vst [vmem:[%s164 + $0x130] sm:$0xff] %v6440
        %6607 = vst [vmem:[%s164 + $0x138] sm:$0xff] %v6445
        %6608 = vst [vmem:[%s164 + $0x140] sm:$0xff] %v6450
        %6609 = vst [vmem:[%s164 + $0x148] sm:$0xff] %v6455
        %6610 = vst [vmem:[%s164 + $0x150] sm:$0xff] %v6460
        %6611 = vst [vmem:[%s164 + $0x158] sm:$0xff] %v6465
        %6612 = vst [vmem:[%s164 + $0x160] sm:$0xff] %v6470
        %6613 = vst [vmem:[%s164 + $0x168] sm:$0xff] %v6475
        %6614 = vst [vmem:[%s164 + $0x170] sm:$0xff] %v6480
        %6615 = vst [vmem:[%s164 + $0x178] sm:$0xff] %v6485
        %6616 = vst [vmem:[%s164 + $0x180] sm:$0xff] %v6490
        %6617 = vst [vmem:[%s164 + $0x188] sm:$0xff] %v6495
        %6618 = vst [vmem:[%s164 + $0x190] sm:$0xff] %v6500
        %6619 = vst [vmem:[%s164 + $0x198] sm:$0xff] %v6505
        %6620 = vst [vmem:[%s164 + $0x1a0] sm:$0xff] %v6510
        %6621 = vst [vmem:[%s164 + $0x1a8] sm:$0xff] %v6515
        %6622 = vst [vmem:[%s164 + $0x1b0] sm:$0xff] %v6520
        %6623 = vst [vmem:[%s164 + $0x1b8] sm:$0xff] %v6525
        %6624 = vst [vmem:[%s164 + $0x1c0] sm:$0xff] %v6530
        %6625 = vst [vmem:[%s164 + $0x1c8] sm:$0xff] %v6535
        %6626 = vst [vmem:[%s164 + $0x1d0] sm:$0xff] %v6540
        %6627 = vst [vmem:[%s164 + $0x1d8] sm:$0xff] %v6545
        %6628 = vst [vmem:[%s164 + $0x1e0] sm:$0xff] %v6550
        %6629 = vst [vmem:[%s164 + $0x1e8] sm:$0xff] %v6555
        %6630 = vst [vmem:[%s164 + $0x1f0] sm:$0xff] %v6560
        %6631 = vst [vmem:[%s164 + $0x1f8] sm:$0xff] %v6565
        %s6632 = sand.u32 %s93, 1
        %s6633 = scalar_lea.sflag [#allocation3], %s6632
        %s6634 = sand.u32 %s93, 1
        %s6635 = smul.addr %s6634, 512
        %s6636 = scalar_lea.vmem [#allocation2], %s6635
        // Predicated region
        $region33: #{tpu_custom_call.1} parent=31 // pred_check
          %p6637 = pneg %p103
        $region34: #{tpu_custom_call.1} parent=31 // pred_check_branch
          %6639 = sbr.rel (%p6637) target = $region36
        $region35: #{tpu_custom_call.1} parent=31 // pred_region
          %s6640 = smul.u32 64, %s17
          %s6642 = ssub.s32 8192, 8192
          %6643 = vsyncadd %s6633, %s6642
          %s6644 = smul.addr %s6640, 128
          %s6645 = scalar_lea.hbm %s3, %s6644
          %s6646 = sshll.u32 %s6636, 4
          %s6647 = int_to_ptr.vmem [resolvable:$true] %s6646
          %6652 = dma.vmem_to_hbm [thread:$0]  %s6647, 8192, %s6645, %s6633, 128, 128, 8
        $region36: #{tpu_custom_call.1} parent=31 // pred_fallthru
          _
      $region32: #{tpu_custom_call.1} parent=5 // pred_fallthru
        _
      %p6653 = scmp.le.s32.totalorder 2, %s12
      // Predicated region
      $region37: #{tpu_custom_call.1} parent=5 // pred_check
        %p6654 = pneg %p6653
      $region38: #{tpu_custom_call.1} parent=5 // pred_check_branch
        %6656 = sbr.rel (%p6654) target = $region40
      $region39: #{tpu_custom_call.1} parent=5 // pred_region
        %s6657 = ssub.s32 %s12, 2
        // Predicated region
        $region41: #{tpu_custom_call.1} parent=39 // pred_check
          %p6658 = pneg %p109
        $region42: #{tpu_custom_call.1} parent=39 // pred_check_branch
          %6660 = sbr.rel (%p6658) target = $region44
        $region43: #{tpu_custom_call.1} parent=39 // pred_region
          %s6661 = sand.u32 %s94, 1
          %s6662 = scalar_lea.sflag [#allocation3], %s6661
          %s6663 = sand.u32 %s94, 1
          %s6664 = smul.addr %s6663, 512
          %s6665 = scalar_lea.vmem [#allocation2], %s6664
          %6666 = dma.done %s6662, 8192
        $region44: #{tpu_custom_call.1} parent=39 // pred_fallthru
          _
      $region40: #{tpu_custom_call.1} parent=5 // pred_fallthru
        _
    $region6: #{tpu_custom_call.1} parent=1 // loop_footer
      %s16 = sadd.s32 1, %s12
    $region7: #{tpu_custom_call.1} parent=1 // loop_footer_branch
      %11 = sbr.rel target = $region3
    $region8: #{tpu_custom_call.1} parent=1 // loop_exit
      _
    %6667 = vsyncpa [#allocation3], 1
    %s6668 = scalar_lea.sflag [#allocation3], 1
    %6669 = vsyncpa %s6668, 1

</llo_original>
